<compile_context>
chip_gen: v5e
topology: v5e:2x2
jax: 0.10.0
libtpu: 0.0.40
codegen_flags: <defaults>
</compile_context>

<pallas_src>
import functools

import jax
import jax.numpy as jnp
from jax.experimental import pallas as pl
from jax.experimental.pallas import tpu as pltpu


def mstcn_kernel(num_stages, num_layers, num_classes, t_valid, t_seg,
                 x_ref, mask_ref, tidx_ref,
                 s1_in_w_ref, s1_in_b_ref,
                 st_in_w_ref, st_in_b_ref,
                 dil_w_ref, dil_b_ref,
                 pw_w_ref, pw_b_ref,
                 out_w_ref, out_b_ref,
                 o_ref):
    x = x_ref[...]            # (dim, Lanes)   Lanes = batch_tile * t_seg
    mask = mask_ref[...]      # (1, Lanes)     == mask[:, 0:1, :] folded to lanes
    t_row = tidx_ref[...]     # (1, Lanes)     per-segment time index (int32)
    lanes = x.shape[-1]
    F = s1_in_w_ref.shape[0]
    Cp = out_w_ref.shape[1]   # class dim padded to a multiple of 8

    # ---- hoisted invariants (never rebuilt inside stage/layer loops) ----
    t_mod = jnp.broadcast_to(t_row, (F, lanes))              # (F, Lanes) int32
    mask_f = jnp.broadcast_to(mask, (F, lanes))
    mask_c = jnp.broadcast_to(mask, (Cp, lanes))
    time_valid = (t_mod < t_valid) if t_valid < t_seg else None
    # Per-dilation boundary masks: one pair per layer index, shared by all stages.
    dil_masks = []
    for l in range(num_layers):
        d = 2 ** l
        dil_masks.append((t_mod >= d, t_mod < (t_seg - d)))
    if num_classes < Cp:
        cls_valid = jax.lax.broadcasted_iota(jnp.int32, (Cp, lanes), 0) < num_classes
    else:
        cls_valid = None

    def mm(w, v):
        # Cast activation to weight dtype (bf16 or f32); always accumulate f32.
        return jnp.dot(w, v.astype(w.dtype), preferred_element_type=jnp.float32)

    def run_stage(s, inp, in_w, in_b):
        # SingleStageModel.forward
        out = mm(in_w, inp) + in_b                           # conv_1x1: (F, Lanes)
        if time_valid is not None:
            out = jnp.where(time_valid, out, 0.0)            # emulate zero conv padding
        # TODO(synk): at production depth (L~10) switch to lax.fori_loop with an
        # SMEM dilation table; full Python unroll is fine at L=3.
        for l in range(num_layers):
            d = 2 ** l
            lm, rm = dil_masks[l]
            left = jnp.where(lm, pltpu.roll(out, d, axis=1), 0.0)          # out[:, t-d]
            right = jnp.where(rm, pltpu.roll(out, lanes - d, axis=1), 0.0)  # out[:, t+d]
            # TODO(synk): on v7x (MRB) benchmark 3 accumulating (F,F) matmuls
            # instead of this concat + single (F,3F) matmul.
            stacked = jnp.concatenate([left, out, right], axis=0)           # (3F, Lanes)
            conv = mm(dil_w_ref[s, l], stacked) + dil_b_ref[s, l]           # fused k=3 dilated conv
            h = jnp.maximum(conv, 0.0)                       # relu
            h = mm(pw_w_ref[s, l], h) + pw_b_ref[s, l]       # conv_1x1
            # TODO(synk): nn.Dropout treated as identity (eval mode only).
            out = (out + h) * mask_f                         # residual * mask
        return (mm(out_w_ref[s], out) + out_b_ref[s]) * mask_c    # conv_out: (Cp, Lanes)

    out = run_stage(0, x, s1_in_w_ref[...], s1_in_b_ref[...])
    o_ref[0] = out
    for s in range(1, num_stages):
        # softmax over the (real) class rows, then mask
        logits = out if cls_valid is None else jnp.where(cls_valid, out, -1e30)
        m = jnp.max(logits, axis=0, keepdims=True)
        e = jnp.exp(logits - m)
        denom = jnp.sum(e, axis=0, keepdims=True)
        sm = e * pl.reciprocal(denom, approx=True)           # divide -> EUP slot
        out = run_stage(s, sm * mask_c, st_in_w_ref[s - 1], st_in_b_ref[s - 1])
        o_ref[s] = out


def multi_stage_forward(x, mask, params, num_stages, num_layers,
                        compute_dtype=jnp.bfloat16, batch_tile=None):
    """MS-TCN forward.  Only mask[:, 0:1, :] is consumed (MS-TCN convention).

    compute_dtype: matmul-input dtype.  bf16 is the default on all TPU
    generations (the MXU is bf16-native everywhere, incl. v5e); elementwise
    math and accumulation stay f32.  Use jnp.float32 for exact checks.

    batch_tile: how many batch elements are folded into the lane axis of each
    grid step.  Default = B (single grid step, maximal lane width — best on
    v5e/v6e).  On v7x pass batch_tile = B // 2 so both TensorCores get a step.
    """
    B, dim, T = x.shape
    F = params["s1_in_w"].shape[0]
    C = params["out_w"].shape[1]
    Cp = ((C + 7) // 8) * 8                          # sublane-dense output stores

    # ---- lane-dense time axis: pad T to a multiple of 128 ----
    T_pad = max(128, ((T + 127) // 128) * 128)
    mask1 = mask[:, 0:1, :]
    if T_pad != T:
        x = jnp.pad(x, ((0, 0), (0, 0), (0, T_pad - T)))
        mask1 = jnp.pad(mask1, ((0, 0), (0, 0), (0, T_pad - T)))

    if batch_tile is None:
        batch_tile = B
    assert B % batch_tile == 0, "batch_tile must divide B"
    n_tiles = B // batch_tile
    Ltile = batch_tile * T_pad

    # ---- fold batch into the lane axis ----
    x_f = jnp.transpose(x, (1, 0, 2)).reshape(dim, B * T_pad)
    m_f = jnp.transpose(mask1, (1, 0, 2)).reshape(1, B * T_pad)
    t_idx = jnp.tile(jnp.arange(T_pad, dtype=jnp.int32), B)[None, :]   # (1, B*T_pad)

    wdt = compute_dtype
    # Pack the 3 dilated-conv taps along the input-channel axis: (S, L, F, 3F).
    # Tap order [left; mid; right] must match the in-kernel sublane concat order.
    dil_w = params["dil_w"]                                  # (3, S, L, F, F)
    dil_w_packed = jnp.concatenate([dil_w[0], dil_w[1], dil_w[2]], axis=-1).astype(wdt)

    # Pad class dim to Cp with zero rows/columns (softmax masks the padded rows).
    out_w = params["out_w"]
    out_b = params["out_b"]
    st_in_w = params["st_in_w"]
    if Cp != C:
        out_w = jnp.pad(out_w, ((0, 0), (0, Cp - C), (0, 0)))
        out_b = jnp.pad(out_b, ((0, 0), (0, Cp - C), (0, 0)))
        st_in_w = jnp.pad(st_in_w, ((0, 0), (0, 0), (0, Cp - C)))

    weights = [
        params["s1_in_w"].astype(wdt), params["s1_in_b"],
        st_in_w.astype(wdt),           params["st_in_b"],
        dil_w_packed,                  params["dil_b"],
        params["pw_w"].astype(wdt),    params["pw_b"],
        out_w.astype(wdt),             out_b,
    ]

    kernel = functools.partial(mstcn_kernel, num_stages, num_layers, C, T, T_pad)

    def full_spec(arr):
        nd = arr.ndim
        return pl.BlockSpec(arr.shape, lambda b, _nd=nd: (0,) * _nd)

    grid_spec = pltpu.PrefetchScalarGridSpec(
        num_scalar_prefetch=0,
        grid=(n_tiles,),
        in_specs=[pl.BlockSpec((dim, Ltile), lambda b: (0, b)),
                  pl.BlockSpec((1, Ltile), lambda b: (0, b)),
                  pl.BlockSpec((1, Ltile), lambda b: (0, b))]
                 + [full_spec(w) for w in weights],
        out_specs=pl.BlockSpec((num_stages, Cp, Ltile), lambda b: (0, 0, b)),
    )

    out = pl.pallas_call(
        kernel,
        out_shape=jax.ShapeDtypeStruct((num_stages, Cp, B * T_pad), jnp.float32),
        grid_spec=grid_spec,
        compiler_params=pltpu.CompilerParams(
            dimension_semantics=("parallel",),   # >=2 grid steps keeps both v7x TCs busy
            vmem_limit_bytes=8 * 1024 * 1024),   # actual footprint <1 MiB; v7x has 64 MiB
    )(x_f, m_f, t_idx, *weights)

    out = out.reshape(num_stages, Cp, B, T_pad)
    out = jnp.transpose(out, (0, 2, 1, 3))
    return out[:, :, :C, :T]


# ---------------- pure-JAX reference (for correctness check) ----------------
def ref_forward(x, mask, params, num_stages, num_layers):
    mask1 = mask[:, 0:1, :]

    def conv1x1(v, w, b):                       # v: (B, Cin, T)
        return jnp.einsum("oc,bct->bot", w, v) + b[None]

    def dilconv(v, w3, b, d):                   # w3: (3, Cout, Cin)
        B, Cin, T = v.shape
        vp = jnp.pad(v, ((0, 0), (0, 0), (d, d)))
        left, mid, right = vp[:, :, 0:T], vp[:, :, d:d + T], vp[:, :, 2 * d:2 * d + T]
        return (jnp.einsum("oc,bct->bot", w3[0], left)
                + jnp.einsum("oc,bct->bot", w3[1], mid)
                + jnp.einsum("oc,bct->bot", w3[2], right) + b[None])

    def stage(v, in_w, in_b, s):
        out = conv1x1(v, in_w, in_b)
        for l in range(num_layers):
            d = 2 ** l
            h = jax.nn.relu(dilconv(out, params["dil_w"][:, s, l], params["dil_b"][s, l], d))
            h = conv1x1(h, params["pw_w"][s, l], params["pw_b"][s, l])
            out = (out + h) * mask1
        return conv1x1(out, params["out_w"][s], params["out_b"][s]) * mask1

    out = stage(x, params["s1_in_w"], params["s1_in_b"], 0)
    outs = [out]
    for s in range(1, num_stages):
        inp = jax.nn.softmax(out, axis=1) * mask1
        out = stage(inp, params["st_in_w"][s - 1], params["st_in_b"][s - 1], s)
        outs.append(out)
    return jnp.stack(outs, axis=0)


def make_params(key, num_stages, num_layers, num_f_maps, dim, num_classes):
    S, L, F, C = num_stages, num_layers, num_f_maps, num_classes
    ks = jax.random.split(key, 10)
    n = lambda k, shape: (0.1 * jax.random.normal(k, shape)).astype(jnp.float32)
    return {
        "s1_in_w": n(ks[0], (F, dim)),           "s1_in_b": n(ks[1], (F, 1)),
        "st_in_w": n(ks[2], (max(S - 1, 1), F, C)),
        "st_in_b": n(ks[3], (max(S - 1, 1), F, 1)),
        "dil_w":   n(ks[4], (3, S, L, F, F)),    "dil_b":   n(ks[5], (S, L, F, 1)),
        "pw_w":    n(ks[6], (S, L, F, F)),       "pw_b":    n(ks[7], (S, L, F, 1)),
        "out_w":   n(ks[8], (S, C, F)),          "out_b":   n(ks[9], (S, C, 1)),
    }


def make_inputs(key, B, dim, num_classes, T, lengths):
    x = jax.random.normal(key, (B, dim, T), dtype=jnp.float32)
    t_idx = jnp.arange(T)[None, :]
    mask = (t_idx < lengths[:, None]).astype(jnp.float32)[:, None, :]
    mask = jnp.broadcast_to(mask, (B, num_classes, T))
    return x, mask


if __name__ == "__main__":
    num_stages, num_layers = 3, 3
    num_f_maps, dim, num_classes = 8, 4, 6
    B = 2

    key = jax.random.PRNGKey(0)
    k_x, k_p, k_x2 = jax.random.split(key, 3)
    params = make_params(k_p, num_stages, num_layers, num_f_maps, dim, num_classes)

    # ---- strict f32 check: full batch fold (grid=(1,), 1024-lane matmuls) ----
    T = 512
    x, mask = make_inputs(k_x, B, dim, num_classes, T,
                          jnp.array([T, 384], dtype=jnp.int32))
    ref = ref_forward(x, mask, params, num_stages, num_layers)
    out = jax.block_until_ready(
        multi_stage_forward(x, mask, params, num_stages, num_layers,
                            compute_dtype=jnp.float32))
    assert out.shape == (num_stages, B, num_classes, T), out.shape
    assert jnp.allclose(out, ref, rtol=2e-3, atol=2e-3), \
        float(jnp.max(jnp.abs(out - ref)))

    # ---- default config: bf16 MXU inputs on all generations (weak check) ----
    out_bf = jax.block_until_ready(
        multi_stage_forward(x, mask, params, num_stages, num_layers))
    assert bool(jnp.all(jnp.isfinite(out_bf)))
    assert float(jnp.max(jnp.abs(out_bf - ref))) < 1e-1

    # ---- v7x-style split: 2 grid steps (batch_tile=1), strict f32 check ----
    out_split = jax.block_until_ready(
        multi_stage_forward(x, mask, params, num_stages, num_layers,
                            compute_dtype=jnp.float32, batch_tile=1))
    assert jnp.allclose(out_split, ref, rtol=2e-3, atol=2e-3), \
        float(jnp.max(jnp.abs(out_split - ref)))

    # ---- padding path: T not a multiple of 128 (padded to 256 internally) ----
    T2 = 200
    x2, mask2 = make_inputs(k_x2, B, dim, num_classes, T2,
                            jnp.array([T2, 144], dtype=jnp.int32))
    out2 = jax.block_until_ready(
        multi_stage_forward(x2, mask2, params, num_stages, num_layers,
                            compute_dtype=jnp.float32))
    ref2 = ref_forward(x2, mask2, params, num_stages, num_layers)
    assert out2.shape == (num_stages, B, num_classes, T2), out2.shape
    assert jnp.allclose(out2, ref2, rtol=2e-3, atol=2e-3), \
        float(jnp.max(jnp.abs(out2 - ref2)))

    print("KERNEL_OK")
</pallas_src>

<mosaic_0001>
module attributes {stable_mosaic.version = 11 : i64} {
  func.func @mstcn_kernel(%arg0: i32, %arg1: memref<4x1024xf32, #tpu.memory_space<vmem>>, %arg2: memref<1x1024xf32, #tpu.memory_space<vmem>>, %arg3: memref<1x1024xi32, #tpu.memory_space<vmem>>, %arg4: memref<8x4xf32, #tpu.memory_space<vmem>>, %arg5: memref<8x1xf32, #tpu.memory_space<vmem>>, %arg6: memref<2x8x8xf32, #tpu.memory_space<vmem>>, %arg7: memref<2x8x1xf32, #tpu.memory_space<vmem>>, %arg8: memref<3x3x8x24xf32, #tpu.memory_space<vmem>>, %arg9: memref<3x3x8x1xf32, #tpu.memory_space<vmem>>, %arg10: memref<3x3x8x8xf32, #tpu.memory_space<vmem>>, %arg11: memref<3x3x8x1xf32, #tpu.memory_space<vmem>>, %arg12: memref<3x8x8xf32, #tpu.memory_space<vmem>>, %arg13: memref<3x8x1xf32, #tpu.memory_space<vmem>>, %arg14: memref<3x8x1024xf32, #tpu.memory_space<vmem>>) attributes {dimension_semantics = [#tpu.dimension_semantics<parallel>], iteration_bounds = array<i64: 1>, scalar_prefetch = 0 : i64, scratch_operands = 0 : i64, tpu.core_type = #tpu.core_type<tc>, window_params = [{transform_indices = @transform_0, window_bounds = array<i64: 4, 1024>}, {transform_indices = @transform_1, window_bounds = array<i64: 1, 1024>}, {transform_indices = @transform_2, window_bounds = array<i64: 1, 1024>}, {pipeline_mode = #tpu.pipeline_mode<synchronous>, transform_indices = @transform_3, window_bounds = array<i64: 8, 4>}, {pipeline_mode = #tpu.pipeline_mode<synchronous>, transform_indices = @transform_4, window_bounds = array<i64: 8, 1>}, {pipeline_mode = #tpu.pipeline_mode<synchronous>, transform_indices = @transform_5, window_bounds = array<i64: 2, 8, 8>}, {pipeline_mode = #tpu.pipeline_mode<synchronous>, transform_indices = @transform_6, window_bounds = array<i64: 2, 8, 1>}, {pipeline_mode = #tpu.pipeline_mode<synchronous>, transform_indices = @transform_7, window_bounds = array<i64: 3, 3, 8, 24>}, {pipeline_mode = #tpu.pipeline_mode<synchronous>, transform_indices = @transform_8, window_bounds = array<i64: 3, 3, 8, 1>}, {pipeline_mode = #tpu.pipeline_mode<synchronous>, transform_indices = @transform_9, window_bounds = array<i64: 3, 3, 8, 8>}, {pipeline_mode = #tpu.pipeline_mode<synchronous>, transform_indices = @transform_10, window_bounds = array<i64: 3, 3, 8, 1>}, {pipeline_mode = #tpu.pipeline_mode<synchronous>, transform_indices = @transform_11, window_bounds = array<i64: 3, 8, 8>}, {pipeline_mode = #tpu.pipeline_mode<synchronous>, transform_indices = @transform_12, window_bounds = array<i64: 3, 8, 1>}, {transform_indices = @transform_13, window_bounds = array<i64: 3, 8, 1024>}]} {
    %c0 = arith.constant 0 : index
    %c0_0 = arith.constant 0 : index
    %0 = vector.load %arg1[%c0, %c0_0] : memref<4x1024xf32, #tpu.memory_space<vmem>>, vector<4x1024xf32>
    %c0_1 = arith.constant 0 : index
    %c0_2 = arith.constant 0 : index
    %1 = vector.load %arg2[%c0_1, %c0_2] : memref<1x1024xf32, #tpu.memory_space<vmem>>, vector<1x1024xf32>
    %c0_3 = arith.constant 0 : index
    %c0_4 = arith.constant 0 : index
    %2 = vector.load %arg3[%c0_3, %c0_4] : memref<1x1024xi32, #tpu.memory_space<vmem>>, vector<1x1024xi32>
    %3 = vector.shape_cast %2 : vector<1x1024xi32> to vector<1x1024xi32>
    %4 = vector.broadcast %3 : vector<1x1024xi32> to vector<8x1024xi32>
    %5 = vector.shape_cast %1 : vector<1x1024xf32> to vector<1x1024xf32>
    %6 = vector.broadcast %5 : vector<1x1024xf32> to vector<8x1024xf32>
    %7 = vector.shape_cast %1 : vector<1x1024xf32> to vector<1x1024xf32>
    %8 = vector.broadcast %7 : vector<1x1024xf32> to vector<8x1024xf32>
    %c1_i32 = arith.constant 1 : i32
    %9 = vector.broadcast %c1_i32 : i32 to vector<8x1024xi32>
    %10 = arith.cmpi sge, %4, %9 : vector<8x1024xi32>
    %c511_i32 = arith.constant 511 : i32
    %11 = vector.broadcast %c511_i32 : i32 to vector<8x1024xi32>
    %12 = arith.cmpi slt, %4, %11 : vector<8x1024xi32>
    %c2_i32 = arith.constant 2 : i32
    %13 = vector.broadcast %c2_i32 : i32 to vector<8x1024xi32>
    %14 = arith.cmpi sge, %4, %13 : vector<8x1024xi32>
    %c510_i32 = arith.constant 510 : i32
    %15 = vector.broadcast %c510_i32 : i32 to vector<8x1024xi32>
    %16 = arith.cmpi slt, %4, %15 : vector<8x1024xi32>
    %c4_i32 = arith.constant 4 : i32
    %17 = vector.broadcast %c4_i32 : i32 to vector<8x1024xi32>
    %18 = arith.cmpi sge, %4, %17 : vector<8x1024xi32>
    %c508_i32 = arith.constant 508 : i32
    %19 = vector.broadcast %c508_i32 : i32 to vector<8x1024xi32>
    %20 = arith.cmpi slt, %4, %19 : vector<8x1024xi32>
    %21 = tpu.iota {dimensions = array<i32: 0>} : vector<8x1024xi32>
    %c6_i32 = arith.constant 6 : i32
    %22 = vector.broadcast %c6_i32 : i32 to vector<8x1024xi32>
    %23 = arith.cmpi slt, %21, %22 : vector<8x1024xi32>
    %c0_5 = arith.constant 0 : index
    %c0_6 = arith.constant 0 : index
    %24 = vector.load %arg4[%c0_5, %c0_6] : memref<8x4xf32, #tpu.memory_space<vmem>>, vector<8x4xf32>
    %c0_7 = arith.constant 0 : index
    %c0_8 = arith.constant 0 : index
    %25 = vector.load %arg5[%c0_7, %c0_8] : memref<8x1xf32, #tpu.memory_space<vmem>>, vector<8x1xf32>
    %cst = arith.constant dense<0.000000e+00> : vector<8x1024xf32>
    %26 = tpu.matmul %24, %0, %cst {dimension_numbers = #tpu.dot_dimension_numbers<[1], [0], [0], [1], [0, 0, 1, 1], [], []>} : vector<8x4xf32>, vector<4x1024xf32>, vector<8x1024xf32> -> vector<8x1024xf32>
    %27 = vector.broadcast %25 : vector<8x1xf32> to vector<8x1024xf32>
    %28 = arith.addf %26, %27 : vector<8x1024xf32>
    %c1_i32_9 = arith.constant 1 : i32
    %29 = tpu.dynamic_rotate %28 by %c1_i32_9 dim 1 : vector<8x1024xf32>, i32 -> vector<8x1024xf32>
    %cst_10 = arith.constant 0.000000e+00 : f32
    %30 = vector.broadcast %cst_10 : f32 to vector<8x1024xf32>
    %31 = arith.select %10, %29, %30 : vector<8x1024xi1>, vector<8x1024xf32>
    %c1023_i32 = arith.constant 1023 : i32
    %32 = tpu.dynamic_rotate %28 by %c1023_i32 dim 1 : vector<8x1024xf32>, i32 -> vector<8x1024xf32>
    %cst_11 = arith.constant 0.000000e+00 : f32
    %33 = vector.broadcast %cst_11 : f32 to vector<8x1024xf32>
    %34 = arith.select %12, %32, %33 : vector<8x1024xi1>, vector<8x1024xf32>
    %35 = tpu.concatenate %31, %28, %34 in 0 : vector<8x1024xf32>, vector<8x1024xf32>, vector<8x1024xf32> -> vector<24x1024xf32>
    %c0_12 = arith.constant 0 : index
    %c0_13 = arith.constant 0 : index
    %c0_14 = arith.constant 0 : index
    %c0_15 = arith.constant 0 : index
    %36 = vector.load %arg8[%c0_12, %c0_13, %c0_14, %c0_15] : memref<3x3x8x24xf32, #tpu.memory_space<vmem>>, vector<1x1x8x24xf32>
    %37 = vector.shape_cast %36 : vector<1x1x8x24xf32> to vector<8x24xf32>
    %cst_16 = arith.constant dense<0.000000e+00> : vector<8x1024xf32>
    %38 = tpu.matmul %37, %35, %cst_16 {dimension_numbers = #tpu.dot_dimension_numbers<[1], [0], [0], [1], [0, 0, 1, 1], [], []>} : vector<8x24xf32>, vector<24x1024xf32>, vector<8x1024xf32> -> vector<8x1024xf32>
    %c0_17 = arith.constant 0 : index
    %c0_18 = arith.constant 0 : index
    %c0_19 = arith.constant 0 : index
    %c0_20 = arith.constant 0 : index
    %39 = vector.load %arg9[%c0_17, %c0_18, %c0_19, %c0_20] : memref<3x3x8x1xf32, #tpu.memory_space<vmem>>, vector<1x1x8x1xf32>
    %40 = vector.shape_cast %39 : vector<1x1x8x1xf32> to vector<8x1xf32>
    %41 = vector.broadcast %40 : vector<8x1xf32> to vector<8x1024xf32>
    %42 = arith.addf %38, %41 : vector<8x1024xf32>
    %cst_21 = arith.constant 0.000000e+00 : f32
    %43 = vector.broadcast %cst_21 : f32 to vector<8x1024xf32>
    %44 = arith.maximumf %42, %43 : vector<8x1024xf32>
    %c0_22 = arith.constant 0 : index
    %c0_23 = arith.constant 0 : index
    %c0_24 = arith.constant 0 : index
    %c0_25 = arith.constant 0 : index
    %45 = vector.load %arg10[%c0_22, %c0_23, %c0_24, %c0_25] : memref<3x3x8x8xf32, #tpu.memory_space<vmem>>, vector<1x1x8x8xf32>
    %46 = vector.shape_cast %45 : vector<1x1x8x8xf32> to vector<8x8xf32>
    %cst_26 = arith.constant dense<0.000000e+00> : vector<8x1024xf32>
    %47 = tpu.matmul %46, %44, %cst_26 {dimension_numbers = #tpu.dot_dimension_numbers<[1], [0], [0], [1], [0, 0, 1, 1], [], []>} : vector<8x8xf32>, vector<8x1024xf32>, vector<8x1024xf32> -> vector<8x1024xf32>
    %c0_27 = arith.constant 0 : index
    %c0_28 = arith.constant 0 : index
    %c0_29 = arith.constant 0 : index
    %c0_30 = arith.constant 0 : index
    %48 = vector.load %arg11[%c0_27, %c0_28, %c0_29, %c0_30] : memref<3x3x8x1xf32, #tpu.memory_space<vmem>>, vector<1x1x8x1xf32>
    %49 = vector.shape_cast %48 : vector<1x1x8x1xf32> to vector<8x1xf32>
    %50 = vector.broadcast %49 : vector<8x1xf32> to vector<8x1024xf32>
    %51 = arith.addf %47, %50 : vector<8x1024xf32>
    %52 = arith.addf %28, %51 : vector<8x1024xf32>
    %53 = arith.mulf %52, %6 : vector<8x1024xf32>
    %c2_i32_31 = arith.constant 2 : i32
    %54 = tpu.dynamic_rotate %53 by %c2_i32_31 dim 1 : vector<8x1024xf32>, i32 -> vector<8x1024xf32>
    %cst_32 = arith.constant 0.000000e+00 : f32
    %55 = vector.broadcast %cst_32 : f32 to vector<8x1024xf32>
    %56 = arith.select %14, %54, %55 : vector<8x1024xi1>, vector<8x1024xf32>
    %c1022_i32 = arith.constant 1022 : i32
    %57 = tpu.dynamic_rotate %53 by %c1022_i32 dim 1 : vector<8x1024xf32>, i32 -> vector<8x1024xf32>
    %cst_33 = arith.constant 0.000000e+00 : f32
    %58 = vector.broadcast %cst_33 : f32 to vector<8x1024xf32>
    %59 = arith.select %16, %57, %58 : vector<8x1024xi1>, vector<8x1024xf32>
    %60 = tpu.concatenate %56, %53, %59 in 0 : vector<8x1024xf32>, vector<8x1024xf32>, vector<8x1024xf32> -> vector<24x1024xf32>
    %c0_34 = arith.constant 0 : index
    %c1 = arith.constant 1 : index
    %c0_35 = arith.constant 0 : index
    %c0_36 = arith.constant 0 : index
    %61 = vector.load %arg8[%c0_34, %c1, %c0_35, %c0_36] : memref<3x3x8x24xf32, #tpu.memory_space<vmem>>, vector<1x1x8x24xf32>
    %62 = vector.shape_cast %61 : vector<1x1x8x24xf32> to vector<8x24xf32>
    %cst_37 = arith.constant dense<0.000000e+00> : vector<8x1024xf32>
    %63 = tpu.matmul %62, %60, %cst_37 {dimension_numbers = #tpu.dot_dimension_numbers<[1], [0], [0], [1], [0, 0, 1, 1], [], []>} : vector<8x24xf32>, vector<24x1024xf32>, vector<8x1024xf32> -> vector<8x1024xf32>
    %c0_38 = arith.constant 0 : index
    %c1_39 = arith.constant 1 : index
    %c0_40 = arith.constant 0 : index
    %c0_41 = arith.constant 0 : index
    %64 = vector.load %arg9[%c0_38, %c1_39, %c0_40, %c0_41] : memref<3x3x8x1xf32, #tpu.memory_space<vmem>>, vector<1x1x8x1xf32>
    %65 = vector.shape_cast %64 : vector<1x1x8x1xf32> to vector<8x1xf32>
    %66 = vector.broadcast %65 : vector<8x1xf32> to vector<8x1024xf32>
    %67 = arith.addf %63, %66 : vector<8x1024xf32>
    %cst_42 = arith.constant 0.000000e+00 : f32
    %68 = vector.broadcast %cst_42 : f32 to vector<8x1024xf32>
    %69 = arith.maximumf %67, %68 : vector<8x1024xf32>
    %c0_43 = arith.constant 0 : index
    %c1_44 = arith.constant 1 : index
    %c0_45 = arith.constant 0 : index
    %c0_46 = arith.constant 0 : index
    %70 = vector.load %arg10[%c0_43, %c1_44, %c0_45, %c0_46] : memref<3x3x8x8xf32, #tpu.memory_space<vmem>>, vector<1x1x8x8xf32>
    %71 = vector.shape_cast %70 : vector<1x1x8x8xf32> to vector<8x8xf32>
    %cst_47 = arith.constant dense<0.000000e+00> : vector<8x1024xf32>
    %72 = tpu.matmul %71, %69, %cst_47 {dimension_numbers = #tpu.dot_dimension_numbers<[1], [0], [0], [1], [0, 0, 1, 1], [], []>} : vector<8x8xf32>, vector<8x1024xf32>, vector<8x1024xf32> -> vector<8x1024xf32>
    %c0_48 = arith.constant 0 : index
    %c1_49 = arith.constant 1 : index
    %c0_50 = arith.constant 0 : index
    %c0_51 = arith.constant 0 : index
    %73 = vector.load %arg11[%c0_48, %c1_49, %c0_50, %c0_51] : memref<3x3x8x1xf32, #tpu.memory_space<vmem>>, vector<1x1x8x1xf32>
    %74 = vector.shape_cast %73 : vector<1x1x8x1xf32> to vector<8x1xf32>
    %75 = vector.broadcast %74 : vector<8x1xf32> to vector<8x1024xf32>
    %76 = arith.addf %72, %75 : vector<8x1024xf32>
    %77 = arith.addf %53, %76 : vector<8x1024xf32>
    %78 = arith.mulf %77, %6 : vector<8x1024xf32>
    %c4_i32_52 = arith.constant 4 : i32
    %79 = tpu.dynamic_rotate %78 by %c4_i32_52 dim 1 : vector<8x1024xf32>, i32 -> vector<8x1024xf32>
    %cst_53 = arith.constant 0.000000e+00 : f32
    %80 = vector.broadcast %cst_53 : f32 to vector<8x1024xf32>
    %81 = arith.select %18, %79, %80 : vector<8x1024xi1>, vector<8x1024xf32>
    %c1020_i32 = arith.constant 1020 : i32
    %82 = tpu.dynamic_rotate %78 by %c1020_i32 dim 1 : vector<8x1024xf32>, i32 -> vector<8x1024xf32>
    %cst_54 = arith.constant 0.000000e+00 : f32
    %83 = vector.broadcast %cst_54 : f32 to vector<8x1024xf32>
    %84 = arith.select %20, %82, %83 : vector<8x1024xi1>, vector<8x1024xf32>
    %85 = tpu.concatenate %81, %78, %84 in 0 : vector<8x1024xf32>, vector<8x1024xf32>, vector<8x1024xf32> -> vector<24x1024xf32>
    %c0_55 = arith.constant 0 : index
    %c2 = arith.constant 2 : index
    %c0_56 = arith.constant 0 : index
    %c0_57 = arith.constant 0 : index
    %86 = vector.load %arg8[%c0_55, %c2, %c0_56, %c0_57] : memref<3x3x8x24xf32, #tpu.memory_space<vmem>>, vector<1x1x8x24xf32>
    %87 = vector.shape_cast %86 : vector<1x1x8x24xf32> to vector<8x24xf32>
    %cst_58 = arith.constant dense<0.000000e+00> : vector<8x1024xf32>
    %88 = tpu.matmul %87, %85, %cst_58 {dimension_numbers = #tpu.dot_dimension_numbers<[1], [0], [0], [1], [0, 0, 1, 1], [], []>} : vector<8x24xf32>, vector<24x1024xf32>, vector<8x1024xf32> -> vector<8x1024xf32>
    %c0_59 = arith.constant 0 : index
    %c2_60 = arith.constant 2 : index
    %c0_61 = arith.constant 0 : index
    %c0_62 = arith.constant 0 : index
    %89 = vector.load %arg9[%c0_59, %c2_60, %c0_61, %c0_62] : memref<3x3x8x1xf32, #tpu.memory_space<vmem>>, vector<1x1x8x1xf32>
    %90 = vector.shape_cast %89 : vector<1x1x8x1xf32> to vector<8x1xf32>
    %91 = vector.broadcast %90 : vector<8x1xf32> to vector<8x1024xf32>
    %92 = arith.addf %88, %91 : vector<8x1024xf32>
    %cst_63 = arith.constant 0.000000e+00 : f32
    %93 = vector.broadcast %cst_63 : f32 to vector<8x1024xf32>
    %94 = arith.maximumf %92, %93 : vector<8x1024xf32>
    %c0_64 = arith.constant 0 : index
    %c2_65 = arith.constant 2 : index
    %c0_66 = arith.constant 0 : index
    %c0_67 = arith.constant 0 : index
    %95 = vector.load %arg10[%c0_64, %c2_65, %c0_66, %c0_67] : memref<3x3x8x8xf32, #tpu.memory_space<vmem>>, vector<1x1x8x8xf32>
    %96 = vector.shape_cast %95 : vector<1x1x8x8xf32> to vector<8x8xf32>
    %cst_68 = arith.constant dense<0.000000e+00> : vector<8x1024xf32>
    %97 = tpu.matmul %96, %94, %cst_68 {dimension_numbers = #tpu.dot_dimension_numbers<[1], [0], [0], [1], [0, 0, 1, 1], [], []>} : vector<8x8xf32>, vector<8x1024xf32>, vector<8x1024xf32> -> vector<8x1024xf32>
    %c0_69 = arith.constant 0 : index
    %c2_70 = arith.constant 2 : index
    %c0_71 = arith.constant 0 : index
    %c0_72 = arith.constant 0 : index
    %98 = vector.load %arg11[%c0_69, %c2_70, %c0_71, %c0_72] : memref<3x3x8x1xf32, #tpu.memory_space<vmem>>, vector<1x1x8x1xf32>
    %99 = vector.shape_cast %98 : vector<1x1x8x1xf32> to vector<8x1xf32>
    %100 = vector.broadcast %99 : vector<8x1xf32> to vector<8x1024xf32>
    %101 = arith.addf %97, %100 : vector<8x1024xf32>
    %102 = arith.addf %78, %101 : vector<8x1024xf32>
    %103 = arith.mulf %102, %6 : vector<8x1024xf32>
    %c0_73 = arith.constant 0 : index
    %c0_74 = arith.constant 0 : index
    %c0_75 = arith.constant 0 : index
    %104 = vector.load %arg12[%c0_73, %c0_74, %c0_75] : memref<3x8x8xf32, #tpu.memory_space<vmem>>, vector<1x8x8xf32>
    %105 = vector.shape_cast %104 : vector<1x8x8xf32> to vector<8x8xf32>
    %cst_76 = arith.constant dense<0.000000e+00> : vector<8x1024xf32>
    %106 = tpu.matmul %105, %103, %cst_76 {dimension_numbers = #tpu.dot_dimension_numbers<[1], [0], [0], [1], [0, 0, 1, 1], [], []>} : vector<8x8xf32>, vector<8x1024xf32>, vector<8x1024xf32> -> vector<8x1024xf32>
    %c0_77 = arith.constant 0 : index
    %c0_78 = arith.constant 0 : index
    %c0_79 = arith.constant 0 : index
    %107 = vector.load %arg13[%c0_77, %c0_78, %c0_79] : memref<3x8x1xf32, #tpu.memory_space<vmem>>, vector<1x8x1xf32>
    %108 = vector.shape_cast %107 : vector<1x8x1xf32> to vector<8x1xf32>
    %109 = vector.broadcast %108 : vector<8x1xf32> to vector<8x1024xf32>
    %110 = arith.addf %106, %109 : vector<8x1024xf32>
    %111 = arith.mulf %110, %8 : vector<8x1024xf32>
    %c0_80 = arith.constant 0 : index
    %c0_81 = arith.constant 0 : index
    %c0_82 = arith.constant 0 : index
    %112 = vector.load %arg14[%c0_80, %c0_81, %c0_82] : memref<3x8x1024xf32, #tpu.memory_space<vmem>>, vector<1x8x1024xf32>
    %113 = vector.shape_cast %112 : vector<1x8x1024xf32> to vector<8x1024xf32>
    %114 = vector.shape_cast %111 : vector<8x1024xf32> to vector<1x8x1024xf32>
    tpu.vector_store %arg14[%c0_80, %c0_81, %c0_82], %114 {strides = array<i32>} : memref<3x8x1024xf32, #tpu.memory_space<vmem>>, vector<1x8x1024xf32>,
    %cst_83 = arith.constant -1.000000e+30 : f32
    %115 = vector.broadcast %cst_83 : f32 to vector<8x1024xf32>
    %116 = arith.select %23, %111, %115 : vector<8x1024xi1>, vector<8x1024xf32>
    %cst_84 = arith.constant dense<0xFF800000> : vector<1024xf32>
    %117 = vector.multi_reduction <maximumf>, %116, %cst_84 [0] : vector<8x1024xf32> to vector<1024xf32>
    %118 = vector.shape_cast %117 : vector<1024xf32> to vector<1x1024xf32>
    %119 = vector.broadcast %118 : vector<1x1024xf32> to vector<8x1024xf32>
    %120 = arith.subf %116, %119 : vector<8x1024xf32>
    %121 = math.exp %120 : vector<8x1024xf32>
    %cst_85 = arith.constant dense<0.000000e+00> : vector<1024xf32>
    %122 = vector.multi_reduction <add>, %121, %cst_85 [0] : vector<8x1024xf32> to vector<1024xf32>
    %123 = vector.shape_cast %122 : vector<1024xf32> to vector<1x1024xf32>
    %124 = tpu.reciprocal %123 {approx = true} : vector<1x1024xf32> -> vector<1x1024xf32>
    %125 = vector.broadcast %124 : vector<1x1024xf32> to vector<8x1024xf32>
    %126 = arith.mulf %121, %125 : vector<8x1024xf32>
    %127 = arith.mulf %126, %8 : vector<8x1024xf32>
    %c0_86 = arith.constant 0 : index
    %c0_87 = arith.constant 0 : index
    %c0_88 = arith.constant 0 : index
    %128 = vector.load %arg6[%c0_86, %c0_87, %c0_88] : memref<2x8x8xf32, #tpu.memory_space<vmem>>, vector<1x8x8xf32>
    %129 = vector.shape_cast %128 : vector<1x8x8xf32> to vector<8x8xf32>
    %c0_89 = arith.constant 0 : index
    %c0_90 = arith.constant 0 : index
    %c0_91 = arith.constant 0 : index
    %130 = vector.load %arg7[%c0_89, %c0_90, %c0_91] : memref<2x8x1xf32, #tpu.memory_space<vmem>>, vector<1x8x1xf32>
    %131 = vector.shape_cast %130 : vector<1x8x1xf32> to vector<8x1xf32>
    %cst_92 = arith.constant dense<0.000000e+00> : vector<8x1024xf32>
    %132 = tpu.matmul %129, %127, %cst_92 {dimension_numbers = #tpu.dot_dimension_numbers<[1], [0], [0], [1], [0, 0, 1, 1], [], []>} : vector<8x8xf32>, vector<8x1024xf32>, vector<8x1024xf32> -> vector<8x1024xf32>
    %133 = vector.broadcast %131 : vector<8x1xf32> to vector<8x1024xf32>
    %134 = arith.addf %132, %133 : vector<8x1024xf32>
    %c1_i32_93 = arith.constant 1 : i32
    %135 = tpu.dynamic_rotate %134 by %c1_i32_93 dim 1 : vector<8x1024xf32>, i32 -> vector<8x1024xf32>
    %cst_94 = arith.constant 0.000000e+00 : f32
    %136 = vector.broadcast %cst_94 : f32 to vector<8x1024xf32>
    %137 = arith.select %10, %135, %136 : vector<8x1024xi1>, vector<8x1024xf32>
    %c1023_i32_95 = arith.constant 1023 : i32
    %138 = tpu.dynamic_rotate %134 by %c1023_i32_95 dim 1 : vector<8x1024xf32>, i32 -> vector<8x1024xf32>
    %cst_96 = arith.constant 0.000000e+00 : f32
    %139 = vector.broadcast %cst_96 : f32 to vector<8x1024xf32>
    %140 = arith.select %12, %138, %139 : vector<8x1024xi1>, vector<8x1024xf32>
    %141 = tpu.concatenate %137, %134, %140 in 0 : vector<8x1024xf32>, vector<8x1024xf32>, vector<8x1024xf32> -> vector<24x1024xf32>
    %c1_97 = arith.constant 1 : index
    %c0_98 = arith.constant 0 : index
    %c0_99 = arith.constant 0 : index
    %c0_100 = arith.constant 0 : index
    %142 = vector.load %arg8[%c1_97, %c0_98, %c0_99, %c0_100] : memref<3x3x8x24xf32, #tpu.memory_space<vmem>>, vector<1x1x8x24xf32>
    %143 = vector.shape_cast %142 : vector<1x1x8x24xf32> to vector<8x24xf32>
    %cst_101 = arith.constant dense<0.000000e+00> : vector<8x1024xf32>
    %144 = tpu.matmul %143, %141, %cst_101 {dimension_numbers = #tpu.dot_dimension_numbers<[1], [0], [0], [1], [0, 0, 1, 1], [], []>} : vector<8x24xf32>, vector<24x1024xf32>, vector<8x1024xf32> -> vector<8x1024xf32>
    %c1_102 = arith.constant 1 : index
    %c0_103 = arith.constant 0 : index
    %c0_104 = arith.constant 0 : index
    %c0_105 = arith.constant 0 : index
    %145 = vector.load %arg9[%c1_102, %c0_103, %c0_104, %c0_105] : memref<3x3x8x1xf32, #tpu.memory_space<vmem>>, vector<1x1x8x1xf32>
    %146 = vector.shape_cast %145 : vector<1x1x8x1xf32> to vector<8x1xf32>
    %147 = vector.broadcast %146 : vector<8x1xf32> to vector<8x1024xf32>
    %148 = arith.addf %144, %147 : vector<8x1024xf32>
    %cst_106 = arith.constant 0.000000e+00 : f32
    %149 = vector.broadcast %cst_106 : f32 to vector<8x1024xf32>
    %150 = arith.maximumf %148, %149 : vector<8x1024xf32>
    %c1_107 = arith.constant 1 : index
    %c0_108 = arith.constant 0 : index
    %c0_109 = arith.constant 0 : index
    %c0_110 = arith.constant 0 : index
    %151 = vector.load %arg10[%c1_107, %c0_108, %c0_109, %c0_110] : memref<3x3x8x8xf32, #tpu.memory_space<vmem>>, vector<1x1x8x8xf32>
    %152 = vector.shape_cast %151 : vector<1x1x8x8xf32> to vector<8x8xf32>
    %cst_111 = arith.constant dense<0.000000e+00> : vector<8x1024xf32>
    %153 = tpu.matmul %152, %150, %cst_111 {dimension_numbers = #tpu.dot_dimension_numbers<[1], [0], [0], [1], [0, 0, 1, 1], [], []>} : vector<8x8xf32>, vector<8x1024xf32>, vector<8x1024xf32> -> vector<8x1024xf32>
    %c1_112 = arith.constant 1 : index
    %c0_113 = arith.constant 0 : index
    %c0_114 = arith.constant 0 : index
    %c0_115 = arith.constant 0 : index
    %154 = vector.load %arg11[%c1_112, %c0_113, %c0_114, %c0_115] : memref<3x3x8x1xf32, #tpu.memory_space<vmem>>, vector<1x1x8x1xf32>
    %155 = vector.shape_cast %154 : vector<1x1x8x1xf32> to vector<8x1xf32>
    %156 = vector.broadcast %155 : vector<8x1xf32> to vector<8x1024xf32>
    %157 = arith.addf %153, %156 : vector<8x1024xf32>
    %158 = arith.addf %134, %157 : vector<8x1024xf32>
    %159 = arith.mulf %158, %6 : vector<8x1024xf32>
    %c2_i32_116 = arith.constant 2 : i32
    %160 = tpu.dynamic_rotate %159 by %c2_i32_116 dim 1 : vector<8x1024xf32>, i32 -> vector<8x1024xf32>
    %cst_117 = arith.constant 0.000000e+00 : f32
    %161 = vector.broadcast %cst_117 : f32 to vector<8x1024xf32>
    %162 = arith.select %14, %160, %161 : vector<8x1024xi1>, vector<8x1024xf32>
    %c1022_i32_118 = arith.constant 1022 : i32
    %163 = tpu.dynamic_rotate %159 by %c1022_i32_118 dim 1 : vector<8x1024xf32>, i32 -> vector<8x1024xf32>
    %cst_119 = arith.constant 0.000000e+00 : f32
    %164 = vector.broadcast %cst_119 : f32 to vector<8x1024xf32>
    %165 = arith.select %16, %163, %164 : vector<8x1024xi1>, vector<8x1024xf32>
    %166 = tpu.concatenate %162, %159, %165 in 0 : vector<8x1024xf32>, vector<8x1024xf32>, vector<8x1024xf32> -> vector<24x1024xf32>
    %c1_120 = arith.constant 1 : index
    %c1_121 = arith.constant 1 : index
    %c0_122 = arith.constant 0 : index
    %c0_123 = arith.constant 0 : index
    %167 = vector.load %arg8[%c1_120, %c1_121, %c0_122, %c0_123] : memref<3x3x8x24xf32, #tpu.memory_space<vmem>>, vector<1x1x8x24xf32>
    %168 = vector.shape_cast %167 : vector<1x1x8x24xf32> to vector<8x24xf32>
    %cst_124 = arith.constant dense<0.000000e+00> : vector<8x1024xf32>
    %169 = tpu.matmul %168, %166, %cst_124 {dimension_numbers = #tpu.dot_dimension_numbers<[1], [0], [0], [1], [0, 0, 1, 1], [], []>} : vector<8x24xf32>, vector<24x1024xf32>, vector<8x1024xf32> -> vector<8x1024xf32>
    %c1_125 = arith.constant 1 : index
    %c1_126 = arith.constant 1 : index
    %c0_127 = arith.constant 0 : index
    %c0_128 = arith.constant 0 : index
    %170 = vector.load %arg9[%c1_125, %c1_126, %c0_127, %c0_128] : memref<3x3x8x1xf32, #tpu.memory_space<vmem>>, vector<1x1x8x1xf32>
    %171 = vector.shape_cast %170 : vector<1x1x8x1xf32> to vector<8x1xf32>
    %172 = vector.broadcast %171 : vector<8x1xf32> to vector<8x1024xf32>
    %173 = arith.addf %169, %172 : vector<8x1024xf32>
    %cst_129 = arith.constant 0.000000e+00 : f32
    %174 = vector.broadcast %cst_129 : f32 to vector<8x1024xf32>
    %175 = arith.maximumf %173, %174 : vector<8x1024xf32>
    %c1_130 = arith.constant 1 : index
    %c1_131 = arith.constant 1 : index
    %c0_132 = arith.constant 0 : index
    %c0_133 = arith.constant 0 : index
    %176 = vector.load %arg10[%c1_130, %c1_131, %c0_132, %c0_133] : memref<3x3x8x8xf32, #tpu.memory_space<vmem>>, vector<1x1x8x8xf32>
    %177 = vector.shape_cast %176 : vector<1x1x8x8xf32> to vector<8x8xf32>
    %cst_134 = arith.constant dense<0.000000e+00> : vector<8x1024xf32>
    %178 = tpu.matmul %177, %175, %cst_134 {dimension_numbers = #tpu.dot_dimension_numbers<[1], [0], [0], [1], [0, 0, 1, 1], [], []>} : vector<8x8xf32>, vector<8x1024xf32>, vector<8x1024xf32> -> vector<8x1024xf32>
    %c1_135 = arith.constant 1 : index
    %c1_136 = arith.constant 1 : index
    %c0_137 = arith.constant 0 : index
    %c0_138 = arith.constant 0 : index
    %179 = vector.load %arg11[%c1_135, %c1_136, %c0_137, %c0_138] : memref<3x3x8x1xf32, #tpu.memory_space<vmem>>, vector<1x1x8x1xf32>
    %180 = vector.shape_cast %179 : vector<1x1x8x1xf32> to vector<8x1xf32>
    %181 = vector.broadcast %180 : vector<8x1xf32> to vector<8x1024xf32>
    %182 = arith.addf %178, %181 : vector<8x1024xf32>
    %183 = arith.addf %159, %182 : vector<8x1024xf32>
    %184 = arith.mulf %183, %6 : vector<8x1024xf32>
    %c4_i32_139 = arith.constant 4 : i32
    %185 = tpu.dynamic_rotate %184 by %c4_i32_139 dim 1 : vector<8x1024xf32>, i32 -> vector<8x1024xf32>
    %cst_140 = arith.constant 0.000000e+00 : f32
    %186 = vector.broadcast %cst_140 : f32 to vector<8x1024xf32>
    %187 = arith.select %18, %185, %186 : vector<8x1024xi1>, vector<8x1024xf32>
    %c1020_i32_141 = arith.constant 1020 : i32
    %188 = tpu.dynamic_rotate %184 by %c1020_i32_141 dim 1 : vector<8x1024xf32>, i32 -> vector<8x1024xf32>
    %cst_142 = arith.constant 0.000000e+00 : f32
    %189 = vector.broadcast %cst_142 : f32 to vector<8x1024xf32>
    %190 = arith.select %20, %188, %189 : vector<8x1024xi1>, vector<8x1024xf32>
    %191 = tpu.concatenate %187, %184, %190 in 0 : vector<8x1024xf32>, vector<8x1024xf32>, vector<8x1024xf32> -> vector<24x1024xf32>
    %c1_143 = arith.constant 1 : index
    %c2_144 = arith.constant 2 : index
    %c0_145 = arith.constant 0 : index
    %c0_146 = arith.constant 0 : index
    %192 = vector.load %arg8[%c1_143, %c2_144, %c0_145, %c0_146] : memref<3x3x8x24xf32, #tpu.memory_space<vmem>>, vector<1x1x8x24xf32>
    %193 = vector.shape_cast %192 : vector<1x1x8x24xf32> to vector<8x24xf32>
    %cst_147 = arith.constant dense<0.000000e+00> : vector<8x1024xf32>
    %194 = tpu.matmul %193, %191, %cst_147 {dimension_numbers = #tpu.dot_dimension_numbers<[1], [0], [0], [1], [0, 0, 1, 1], [], []>} : vector<8x24xf32>, vector<24x1024xf32>, vector<8x1024xf32> -> vector<8x1024xf32>
    %c1_148 = arith.constant 1 : index
    %c2_149 = arith.constant 2 : index
    %c0_150 = arith.constant 0 : index
    %c0_151 = arith.constant 0 : index
    %195 = vector.load %arg9[%c1_148, %c2_149, %c0_150, %c0_151] : memref<3x3x8x1xf32, #tpu.memory_space<vmem>>, vector<1x1x8x1xf32>
    %196 = vector.shape_cast %195 : vector<1x1x8x1xf32> to vector<8x1xf32>
    %197 = vector.broadcast %196 : vector<8x1xf32> to vector<8x1024xf32>
    %198 = arith.addf %194, %197 : vector<8x1024xf32>
    %cst_152 = arith.constant 0.000000e+00 : f32
    %199 = vector.broadcast %cst_152 : f32 to vector<8x1024xf32>
    %200 = arith.maximumf %198, %199 : vector<8x1024xf32>
    %c1_153 = arith.constant 1 : index
    %c2_154 = arith.constant 2 : index
    %c0_155 = arith.constant 0 : index
    %c0_156 = arith.constant 0 : index
    %201 = vector.load %arg10[%c1_153, %c2_154, %c0_155, %c0_156] : memref<3x3x8x8xf32, #tpu.memory_space<vmem>>, vector<1x1x8x8xf32>
    %202 = vector.shape_cast %201 : vector<1x1x8x8xf32> to vector<8x8xf32>
    %cst_157 = arith.constant dense<0.000000e+00> : vector<8x1024xf32>
    %203 = tpu.matmul %202, %200, %cst_157 {dimension_numbers = #tpu.dot_dimension_numbers<[1], [0], [0], [1], [0, 0, 1, 1], [], []>} : vector<8x8xf32>, vector<8x1024xf32>, vector<8x1024xf32> -> vector<8x1024xf32>
    %c1_158 = arith.constant 1 : index
    %c2_159 = arith.constant 2 : index
    %c0_160 = arith.constant 0 : index
    %c0_161 = arith.constant 0 : index
    %204 = vector.load %arg11[%c1_158, %c2_159, %c0_160, %c0_161] : memref<3x3x8x1xf32, #tpu.memory_space<vmem>>, vector<1x1x8x1xf32>
    %205 = vector.shape_cast %204 : vector<1x1x8x1xf32> to vector<8x1xf32>
    %206 = vector.broadcast %205 : vector<8x1xf32> to vector<8x1024xf32>
    %207 = arith.addf %203, %206 : vector<8x1024xf32>
    %208 = arith.addf %184, %207 : vector<8x1024xf32>
    %209 = arith.mulf %208, %6 : vector<8x1024xf32>
    %c1_162 = arith.constant 1 : index
    %c0_163 = arith.constant 0 : index
    %c0_164 = arith.constant 0 : index
    %210 = vector.load %arg12[%c1_162, %c0_163, %c0_164] : memref<3x8x8xf32, #tpu.memory_space<vmem>>, vector<1x8x8xf32>
    %211 = vector.shape_cast %210 : vector<1x8x8xf32> to vector<8x8xf32>
    %cst_165 = arith.constant dense<0.000000e+00> : vector<8x1024xf32>
    %212 = tpu.matmul %211, %209, %cst_165 {dimension_numbers = #tpu.dot_dimension_numbers<[1], [0], [0], [1], [0, 0, 1, 1], [], []>} : vector<8x8xf32>, vector<8x1024xf32>, vector<8x1024xf32> -> vector<8x1024xf32>
    %c1_166 = arith.constant 1 : index
    %c0_167 = arith.constant 0 : index
    %c0_168 = arith.constant 0 : index
    %213 = vector.load %arg13[%c1_166, %c0_167, %c0_168] : memref<3x8x1xf32, #tpu.memory_space<vmem>>, vector<1x8x1xf32>
    %214 = vector.shape_cast %213 : vector<1x8x1xf32> to vector<8x1xf32>
    %215 = vector.broadcast %214 : vector<8x1xf32> to vector<8x1024xf32>
    %216 = arith.addf %212, %215 : vector<8x1024xf32>
    %217 = arith.mulf %216, %8 : vector<8x1024xf32>
    %c1_169 = arith.constant 1 : index
    %c0_170 = arith.constant 0 : index
    %c0_171 = arith.constant 0 : index
    %218 = vector.load %arg14[%c1_169, %c0_170, %c0_171] : memref<3x8x1024xf32, #tpu.memory_space<vmem>>, vector<1x8x1024xf32>
    %219 = vector.shape_cast %218 : vector<1x8x1024xf32> to vector<8x1024xf32>
    %220 = vector.shape_cast %217 : vector<8x1024xf32> to vector<1x8x1024xf32>
    tpu.vector_store %arg14[%c1_169, %c0_170, %c0_171], %220 {strides = array<i32>} : memref<3x8x1024xf32, #tpu.memory_space<vmem>>, vector<1x8x1024xf32>,
    %cst_172 = arith.constant -1.000000e+30 : f32
    %221 = vector.broadcast %cst_172 : f32 to vector<8x1024xf32>
    %222 = arith.select %23, %217, %221 : vector<8x1024xi1>, vector<8x1024xf32>
    %cst_173 = arith.constant dense<0xFF800000> : vector<1024xf32>
    %223 = vector.multi_reduction <maximumf>, %222, %cst_173 [0] : vector<8x1024xf32> to vector<1024xf32>
    %224 = vector.shape_cast %223 : vector<1024xf32> to vector<1x1024xf32>
    %225 = vector.broadcast %224 : vector<1x1024xf32> to vector<8x1024xf32>
    %226 = arith.subf %222, %225 : vector<8x1024xf32>
    %227 = math.exp %226 : vector<8x1024xf32>
    %cst_174 = arith.constant dense<0.000000e+00> : vector<1024xf32>
    %228 = vector.multi_reduction <add>, %227, %cst_174 [0] : vector<8x1024xf32> to vector<1024xf32>
    %229 = vector.shape_cast %228 : vector<1024xf32> to vector<1x1024xf32>
    %230 = tpu.reciprocal %229 {approx = true} : vector<1x1024xf32> -> vector<1x1024xf32>
    %231 = vector.broadcast %230 : vector<1x1024xf32> to vector<8x1024xf32>
    %232 = arith.mulf %227, %231 : vector<8x1024xf32>
    %233 = arith.mulf %232, %8 : vector<8x1024xf32>
    %c1_175 = arith.constant 1 : index
    %c0_176 = arith.constant 0 : index
    %c0_177 = arith.constant 0 : index
    %234 = vector.load %arg6[%c1_175, %c0_176, %c0_177] : memref<2x8x8xf32, #tpu.memory_space<vmem>>, vector<1x8x8xf32>
    %235 = vector.shape_cast %234 : vector<1x8x8xf32> to vector<8x8xf32>
    %c1_178 = arith.constant 1 : index
    %c0_179 = arith.constant 0 : index
    %c0_180 = arith.constant 0 : index
    %236 = vector.load %arg7[%c1_178, %c0_179, %c0_180] : memref<2x8x1xf32, #tpu.memory_space<vmem>>, vector<1x8x1xf32>
    %237 = vector.shape_cast %236 : vector<1x8x1xf32> to vector<8x1xf32>
    %cst_181 = arith.constant dense<0.000000e+00> : vector<8x1024xf32>
    %238 = tpu.matmul %235, %233, %cst_181 {dimension_numbers = #tpu.dot_dimension_numbers<[1], [0], [0], [1], [0, 0, 1, 1], [], []>} : vector<8x8xf32>, vector<8x1024xf32>, vector<8x1024xf32> -> vector<8x1024xf32>
    %239 = vector.broadcast %237 : vector<8x1xf32> to vector<8x1024xf32>
    %240 = arith.addf %238, %239 : vector<8x1024xf32>
    %c1_i32_182 = arith.constant 1 : i32
    %241 = tpu.dynamic_rotate %240 by %c1_i32_182 dim 1 : vector<8x1024xf32>, i32 -> vector<8x1024xf32>
    %cst_183 = arith.constant 0.000000e+00 : f32
    %242 = vector.broadcast %cst_183 : f32 to vector<8x1024xf32>
    %243 = arith.select %10, %241, %242 : vector<8x1024xi1>, vector<8x1024xf32>
    %c1023_i32_184 = arith.constant 1023 : i32
    %244 = tpu.dynamic_rotate %240 by %c1023_i32_184 dim 1 : vector<8x1024xf32>, i32 -> vector<8x1024xf32>
    %cst_185 = arith.constant 0.000000e+00 : f32
    %245 = vector.broadcast %cst_185 : f32 to vector<8x1024xf32>
    %246 = arith.select %12, %244, %245 : vector<8x1024xi1>, vector<8x1024xf32>
    %247 = tpu.concatenate %243, %240, %246 in 0 : vector<8x1024xf32>, vector<8x1024xf32>, vector<8x1024xf32> -> vector<24x1024xf32>
    %c2_186 = arith.constant 2 : index
    %c0_187 = arith.constant 0 : index
    %c0_188 = arith.constant 0 : index
    %c0_189 = arith.constant 0 : index
    %248 = vector.load %arg8[%c2_186, %c0_187, %c0_188, %c0_189] : memref<3x3x8x24xf32, #tpu.memory_space<vmem>>, vector<1x1x8x24xf32>
    %249 = vector.shape_cast %248 : vector<1x1x8x24xf32> to vector<8x24xf32>
    %cst_190 = arith.constant dense<0.000000e+00> : vector<8x1024xf32>
    %250 = tpu.matmul %249, %247, %cst_190 {dimension_numbers = #tpu.dot_dimension_numbers<[1], [0], [0], [1], [0, 0, 1, 1], [], []>} : vector<8x24xf32>, vector<24x1024xf32>, vector<8x1024xf32> -> vector<8x1024xf32>
    %c2_191 = arith.constant 2 : index
    %c0_192 = arith.constant 0 : index
    %c0_193 = arith.constant 0 : index
    %c0_194 = arith.constant 0 : index
    %251 = vector.load %arg9[%c2_191, %c0_192, %c0_193, %c0_194] : memref<3x3x8x1xf32, #tpu.memory_space<vmem>>, vector<1x1x8x1xf32>
    %252 = vector.shape_cast %251 : vector<1x1x8x1xf32> to vector<8x1xf32>
    %253 = vector.broadcast %252 : vector<8x1xf32> to vector<8x1024xf32>
    %254 = arith.addf %250, %253 : vector<8x1024xf32>
    %cst_195 = arith.constant 0.000000e+00 : f32
    %255 = vector.broadcast %cst_195 : f32 to vector<8x1024xf32>
    %256 = arith.maximumf %254, %255 : vector<8x1024xf32>
    %c2_196 = arith.constant 2 : index
    %c0_197 = arith.constant 0 : index
    %c0_198 = arith.constant 0 : index
    %c0_199 = arith.constant 0 : index
    %257 = vector.load %arg10[%c2_196, %c0_197, %c0_198, %c0_199] : memref<3x3x8x8xf32, #tpu.memory_space<vmem>>, vector<1x1x8x8xf32>
    %258 = vector.shape_cast %257 : vector<1x1x8x8xf32> to vector<8x8xf32>
    %cst_200 = arith.constant dense<0.000000e+00> : vector<8x1024xf32>
    %259 = tpu.matmul %258, %256, %cst_200 {dimension_numbers = #tpu.dot_dimension_numbers<[1], [0], [0], [1], [0, 0, 1, 1], [], []>} : vector<8x8xf32>, vector<8x1024xf32>, vector<8x1024xf32> -> vector<8x1024xf32>
    %c2_201 = arith.constant 2 : index
    %c0_202 = arith.constant 0 : index
    %c0_203 = arith.constant 0 : index
    %c0_204 = arith.constant 0 : index
    %260 = vector.load %arg11[%c2_201, %c0_202, %c0_203, %c0_204] : memref<3x3x8x1xf32, #tpu.memory_space<vmem>>, vector<1x1x8x1xf32>
    %261 = vector.shape_cast %260 : vector<1x1x8x1xf32> to vector<8x1xf32>
    %262 = vector.broadcast %261 : vector<8x1xf32> to vector<8x1024xf32>
    %263 = arith.addf %259, %262 : vector<8x1024xf32>
    %264 = arith.addf %240, %263 : vector<8x1024xf32>
    %265 = arith.mulf %264, %6 : vector<8x1024xf32>
    %c2_i32_205 = arith.constant 2 : i32
    %266 = tpu.dynamic_rotate %265 by %c2_i32_205 dim 1 : vector<8x1024xf32>, i32 -> vector<8x1024xf32>
    %cst_206 = arith.constant 0.000000e+00 : f32
    %267 = vector.broadcast %cst_206 : f32 to vector<8x1024xf32>
    %268 = arith.select %14, %266, %267 : vector<8x1024xi1>, vector<8x1024xf32>
    %c1022_i32_207 = arith.constant 1022 : i32
    %269 = tpu.dynamic_rotate %265 by %c1022_i32_207 dim 1 : vector<8x1024xf32>, i32 -> vector<8x1024xf32>
    %cst_208 = arith.constant 0.000000e+00 : f32
    %270 = vector.broadcast %cst_208 : f32 to vector<8x1024xf32>
    %271 = arith.select %16, %269, %270 : vector<8x1024xi1>, vector<8x1024xf32>
    %272 = tpu.concatenate %268, %265, %271 in 0 : vector<8x1024xf32>, vector<8x1024xf32>, vector<8x1024xf32> -> vector<24x1024xf32>
    %c2_209 = arith.constant 2 : index
    %c1_210 = arith.constant 1 : index
    %c0_211 = arith.constant 0 : index
    %c0_212 = arith.constant 0 : index
    %273 = vector.load %arg8[%c2_209, %c1_210, %c0_211, %c0_212] : memref<3x3x8x24xf32, #tpu.memory_space<vmem>>, vector<1x1x8x24xf32>
    %274 = vector.shape_cast %273 : vector<1x1x8x24xf32> to vector<8x24xf32>
    %cst_213 = arith.constant dense<0.000000e+00> : vector<8x1024xf32>
    %275 = tpu.matmul %274, %272, %cst_213 {dimension_numbers = #tpu.dot_dimension_numbers<[1], [0], [0], [1], [0, 0, 1, 1], [], []>} : vector<8x24xf32>, vector<24x1024xf32>, vector<8x1024xf32> -> vector<8x1024xf32>
    %c2_214 = arith.constant 2 : index
    %c1_215 = arith.constant 1 : index
    %c0_216 = arith.constant 0 : index
    %c0_217 = arith.constant 0 : index
    %276 = vector.load %arg9[%c2_214, %c1_215, %c0_216, %c0_217] : memref<3x3x8x1xf32, #tpu.memory_space<vmem>>, vector<1x1x8x1xf32>
    %277 = vector.shape_cast %276 : vector<1x1x8x1xf32> to vector<8x1xf32>
    %278 = vector.broadcast %277 : vector<8x1xf32> to vector<8x1024xf32>
    %279 = arith.addf %275, %278 : vector<8x1024xf32>
    %cst_218 = arith.constant 0.000000e+00 : f32
    %280 = vector.broadcast %cst_218 : f32 to vector<8x1024xf32>
    %281 = arith.maximumf %279, %280 : vector<8x1024xf32>
    %c2_219 = arith.constant 2 : index
    %c1_220 = arith.constant 1 : index
    %c0_221 = arith.constant 0 : index
    %c0_222 = arith.constant 0 : index
    %282 = vector.load %arg10[%c2_219, %c1_220, %c0_221, %c0_222] : memref<3x3x8x8xf32, #tpu.memory_space<vmem>>, vector<1x1x8x8xf32>
    %283 = vector.shape_cast %282 : vector<1x1x8x8xf32> to vector<8x8xf32>
    %cst_223 = arith.constant dense<0.000000e+00> : vector<8x1024xf32>
    %284 = tpu.matmul %283, %281, %cst_223 {dimension_numbers = #tpu.dot_dimension_numbers<[1], [0], [0], [1], [0, 0, 1, 1], [], []>} : vector<8x8xf32>, vector<8x1024xf32>, vector<8x1024xf32> -> vector<8x1024xf32>
    %c2_224 = arith.constant 2 : index
    %c1_225 = arith.constant 1 : index
    %c0_226 = arith.constant 0 : index
    %c0_227 = arith.constant 0 : index
    %285 = vector.load %arg11[%c2_224, %c1_225, %c0_226, %c0_227] : memref<3x3x8x1xf32, #tpu.memory_space<vmem>>, vector<1x1x8x1xf32>
    %286 = vector.shape_cast %285 : vector<1x1x8x1xf32> to vector<8x1xf32>
    %287 = vector.broadcast %286 : vector<8x1xf32> to vector<8x1024xf32>
    %288 = arith.addf %284, %287 : vector<8x1024xf32>
    %289 = arith.addf %265, %288 : vector<8x1024xf32>
    %290 = arith.mulf %289, %6 : vector<8x1024xf32>
    %c4_i32_228 = arith.constant 4 : i32
    %291 = tpu.dynamic_rotate %290 by %c4_i32_228 dim 1 : vector<8x1024xf32>, i32 -> vector<8x1024xf32>
    %cst_229 = arith.constant 0.000000e+00 : f32
    %292 = vector.broadcast %cst_229 : f32 to vector<8x1024xf32>
    %293 = arith.select %18, %291, %292 : vector<8x1024xi1>, vector<8x1024xf32>
    %c1020_i32_230 = arith.constant 1020 : i32
    %294 = tpu.dynamic_rotate %290 by %c1020_i32_230 dim 1 : vector<8x1024xf32>, i32 -> vector<8x1024xf32>
    %cst_231 = arith.constant 0.000000e+00 : f32
    %295 = vector.broadcast %cst_231 : f32 to vector<8x1024xf32>
    %296 = arith.select %20, %294, %295 : vector<8x1024xi1>, vector<8x1024xf32>
    %297 = tpu.concatenate %293, %290, %296 in 0 : vector<8x1024xf32>, vector<8x1024xf32>, vector<8x1024xf32> -> vector<24x1024xf32>
    %c2_232 = arith.constant 2 : index
    %c2_233 = arith.constant 2 : index
    %c0_234 = arith.constant 0 : index
    %c0_235 = arith.constant 0 : index
    %298 = vector.load %arg8[%c2_232, %c2_233, %c0_234, %c0_235] : memref<3x3x8x24xf32, #tpu.memory_space<vmem>>, vector<1x1x8x24xf32>
    %299 = vector.shape_cast %298 : vector<1x1x8x24xf32> to vector<8x24xf32>
    %cst_236 = arith.constant dense<0.000000e+00> : vector<8x1024xf32>
    %300 = tpu.matmul %299, %297, %cst_236 {dimension_numbers = #tpu.dot_dimension_numbers<[1], [0], [0], [1], [0, 0, 1, 1], [], []>} : vector<8x24xf32>, vector<24x1024xf32>, vector<8x1024xf32> -> vector<8x1024xf32>
    %c2_237 = arith.constant 2 : index
    %c2_238 = arith.constant 2 : index
    %c0_239 = arith.constant 0 : index
    %c0_240 = arith.constant 0 : index
    %301 = vector.load %arg9[%c2_237, %c2_238, %c0_239, %c0_240] : memref<3x3x8x1xf32, #tpu.memory_space<vmem>>, vector<1x1x8x1xf32>
    %302 = vector.shape_cast %301 : vector<1x1x8x1xf32> to vector<8x1xf32>
    %303 = vector.broadcast %302 : vector<8x1xf32> to vector<8x1024xf32>
    %304 = arith.addf %300, %303 : vector<8x1024xf32>
    %cst_241 = arith.constant 0.000000e+00 : f32
    %305 = vector.broadcast %cst_241 : f32 to vector<8x1024xf32>
    %306 = arith.maximumf %304, %305 : vector<8x1024xf32>
    %c2_242 = arith.constant 2 : index
    %c2_243 = arith.constant 2 : index
    %c0_244 = arith.constant 0 : index
    %c0_245 = arith.constant 0 : index
    %307 = vector.load %arg10[%c2_242, %c2_243, %c0_244, %c0_245] : memref<3x3x8x8xf32, #tpu.memory_space<vmem>>, vector<1x1x8x8xf32>
    %308 = vector.shape_cast %307 : vector<1x1x8x8xf32> to vector<8x8xf32>
    %cst_246 = arith.constant dense<0.000000e+00> : vector<8x1024xf32>
    %309 = tpu.matmul %308, %306, %cst_246 {dimension_numbers = #tpu.dot_dimension_numbers<[1], [0], [0], [1], [0, 0, 1, 1], [], []>} : vector<8x8xf32>, vector<8x1024xf32>, vector<8x1024xf32> -> vector<8x1024xf32>
    %c2_247 = arith.constant 2 : index
    %c2_248 = arith.constant 2 : index
    %c0_249 = arith.constant 0 : index
    %c0_250 = arith.constant 0 : index
    %310 = vector.load %arg11[%c2_247, %c2_248, %c0_249, %c0_250] : memref<3x3x8x1xf32, #tpu.memory_space<vmem>>, vector<1x1x8x1xf32>
    %311 = vector.shape_cast %310 : vector<1x1x8x1xf32> to vector<8x1xf32>
    %312 = vector.broadcast %311 : vector<8x1xf32> to vector<8x1024xf32>
    %313 = arith.addf %309, %312 : vector<8x1024xf32>
    %314 = arith.addf %290, %313 : vector<8x1024xf32>
    %315 = arith.mulf %314, %6 : vector<8x1024xf32>
    %c2_251 = arith.constant 2 : index
    %c0_252 = arith.constant 0 : index
    %c0_253 = arith.constant 0 : index
    %316 = vector.load %arg12[%c2_251, %c0_252, %c0_253] : memref<3x8x8xf32, #tpu.memory_space<vmem>>, vector<1x8x8xf32>
    %317 = vector.shape_cast %316 : vector<1x8x8xf32> to vector<8x8xf32>
    %cst_254 = arith.constant dense<0.000000e+00> : vector<8x1024xf32>
    %318 = tpu.matmul %317, %315, %cst_254 {dimension_numbers = #tpu.dot_dimension_numbers<[1], [0], [0], [1], [0, 0, 1, 1], [], []>} : vector<8x8xf32>, vector<8x1024xf32>, vector<8x1024xf32> -> vector<8x1024xf32>
    %c2_255 = arith.constant 2 : index
    %c0_256 = arith.constant 0 : index
    %c0_257 = arith.constant 0 : index
    %319 = vector.load %arg13[%c2_255, %c0_256, %c0_257] : memref<3x8x1xf32, #tpu.memory_space<vmem>>, vector<1x8x1xf32>
    %320 = vector.shape_cast %319 : vector<1x8x1xf32> to vector<8x1xf32>
    %321 = vector.broadcast %320 : vector<8x1xf32> to vector<8x1024xf32>
    %322 = arith.addf %318, %321 : vector<8x1024xf32>
    %323 = arith.mulf %322, %8 : vector<8x1024xf32>
    %c2_258 = arith.constant 2 : index
    %c0_259 = arith.constant 0 : index
    %c0_260 = arith.constant 0 : index
    %324 = vector.load %arg14[%c2_258, %c0_259, %c0_260] : memref<3x8x1024xf32, #tpu.memory_space<vmem>>, vector<1x8x1024xf32>
    %325 = vector.shape_cast %324 : vector<1x8x1024xf32> to vector<8x1024xf32>
    %326 = vector.shape_cast %323 : vector<8x1024xf32> to vector<1x8x1024xf32>
    tpu.vector_store %arg14[%c2_258, %c0_259, %c0_260], %326 {strides = array<i32>} : memref<3x8x1024xf32, #tpu.memory_space<vmem>>, vector<1x8x1024xf32>,
    return
  }
  func.func @transform_0(%arg0: i32) -> (i32, i32) {
    %c0_i32 = arith.constant 0 : i32
    %c0_i32_0 = arith.constant 0 : i32
    return %c0_i32, %arg0 : i32, i32
  }
  func.func @transform_1(%arg0: i32) -> (i32, i32) {
    %c0_i32 = arith.constant 0 : i32
    %c0_i32_0 = arith.constant 0 : i32
    return %c0_i32, %arg0 : i32, i32
  }
  func.func @transform_2(%arg0: i32) -> (i32, i32) {
    %c0_i32 = arith.constant 0 : i32
    %c0_i32_0 = arith.constant 0 : i32
    return %c0_i32, %arg0 : i32, i32
  }
  func.func @transform_3(%arg0: i32) -> (i32, i32) {
    %c0_i32 = arith.constant 0 : i32
    %c0_i32_0 = arith.constant 0 : i32
    %c0_i32_1 = arith.constant 0 : i32
    return %c0_i32, %c0_i32_0 : i32, i32
  }
  func.func @transform_4(%arg0: i32) -> (i32, i32) {
    %c0_i32 = arith.constant 0 : i32
    %c0_i32_0 = arith.constant 0 : i32
    %c0_i32_1 = arith.constant 0 : i32
    return %c0_i32, %c0_i32_0 : i32, i32
  }
  func.func @transform_5(%arg0: i32) -> (i32, i32, i32) {
    %c0_i32 = arith.constant 0 : i32
    %c0_i32_0 = arith.constant 0 : i32
    %c0_i32_1 = arith.constant 0 : i32
    %c0_i32_2 = arith.constant 0 : i32
    return %c0_i32, %c0_i32_0, %c0_i32_1 : i32, i32, i32
  }
  func.func @transform_6(%arg0: i32) -> (i32, i32, i32) {
    %c0_i32 = arith.constant 0 : i32
    %c0_i32_0 = arith.constant 0 : i32
    %c0_i32_1 = arith.constant 0 : i32
    %c0_i32_2 = arith.constant 0 : i32
    return %c0_i32, %c0_i32_0, %c0_i32_1 : i32, i32, i32
  }
  func.func @transform_7(%arg0: i32) -> (i32, i32, i32, i32) {
    %c0_i32 = arith.constant 0 : i32
    %c0_i32_0 = arith.constant 0 : i32
    %c0_i32_1 = arith.constant 0 : i32
    %c0_i32_2 = arith.constant 0 : i32
    %c0_i32_3 = arith.constant 0 : i32
    return %c0_i32, %c0_i32_0, %c0_i32_1, %c0_i32_2 : i32, i32, i32, i32
  }
  func.func @transform_8(%arg0: i32) -> (i32, i32, i32, i32) {
    %c0_i32 = arith.constant 0 : i32
    %c0_i32_0 = arith.constant 0 : i32
    %c0_i32_1 = arith.constant 0 : i32
    %c0_i32_2 = arith.constant 0 : i32
    %c0_i32_3 = arith.constant 0 : i32
    return %c0_i32, %c0_i32_0, %c0_i32_1, %c0_i32_2 : i32, i32, i32, i32
  }
  func.func @transform_9(%arg0: i32) -> (i32, i32, i32, i32) {
    %c0_i32 = arith.constant 0 : i32
    %c0_i32_0 = arith.constant 0 : i32
    %c0_i32_1 = arith.constant 0 : i32
    %c0_i32_2 = arith.constant 0 : i32
    %c0_i32_3 = arith.constant 0 : i32
    return %c0_i32, %c0_i32_0, %c0_i32_1, %c0_i32_2 : i32, i32, i32, i32
  }
  func.func @transform_10(%arg0: i32) -> (i32, i32, i32, i32) {
    %c0_i32 = arith.constant 0 : i32
    %c0_i32_0 = arith.constant 0 : i32
    %c0_i32_1 = arith.constant 0 : i32
    %c0_i32_2 = arith.constant 0 : i32
    %c0_i32_3 = arith.constant 0 : i32
    return %c0_i32, %c0_i32_0, %c0_i32_1, %c0_i32_2 : i32, i32, i32, i32
  }
  func.func @transform_11(%arg0: i32) -> (i32, i32, i32) {
    %c0_i32 = arith.constant 0 : i32
    %c0_i32_0 = arith.constant 0 : i32
    %c0_i32_1 = arith.constant 0 : i32
    %c0_i32_2 = arith.constant 0 : i32
    return %c0_i32, %c0_i32_0, %c0_i32_1 : i32, i32, i32
  }
  func.func @transform_12(%arg0: i32) -> (i32, i32, i32) {
    %c0_i32 = arith.constant 0 : i32
    %c0_i32_0 = arith.constant 0 : i32
    %c0_i32_1 = arith.constant 0 : i32
    %c0_i32_2 = arith.constant 0 : i32
    return %c0_i32, %c0_i32_0, %c0_i32_1 : i32, i32, i32
  }
  func.func @transform_13(%arg0: i32) -> (i32, i32, i32) {
    %c0_i32 = arith.constant 0 : i32
    %c0_i32_0 = arith.constant 0 : i32
    %c0_i32_1 = arith.constant 0 : i32
    return %c0_i32, %c0_i32_0, %arg0 : i32, i32, i32
  }
}

</mosaic_0001>

<llo_original>
// kernel: tpu_custom_call.1
$region0: #{tpu_custom_call.1}
  #allocation0 [shape = 'u32[]', space=smem, size = 0x4, offset = 0x4, fixed_abs, tag = 'smem constant byte address 0x4 - core index']
  #allocation1 [shape = 'u32[72,128]{1,0:T(1,128)}', space=vmem, size = 0x9000, scoped, tag = 'internal scratch']
  %s0 = inlined_call_operand.vmem [shape: f32[4,1024], index: 0, kind: input, shape index: {}]
  %s1 = inlined_call_operand.vmem [shape: f32[1,1024], index: 1, kind: input, shape index: {}]
  %s2 = inlined_call_operand.hbm [shape: s32[1,1024], index: 2, kind: input, shape index: {}]
  %s3 = inlined_call_operand.vmem [shape: f32[8,4], index: 3, kind: input, shape index: {}]
  %s4 = inlined_call_operand.vmem [shape: f32[8,1], index: 4, kind: input, shape index: {}]
  %s5 = inlined_call_operand.vmem [shape: f32[2,8,8], index: 5, kind: input, shape index: {}]
  %s6 = inlined_call_operand.vmem [shape: f32[2,8,1], index: 6, kind: input, shape index: {}]
  %s7 = inlined_call_operand.vmem [shape: f32[3,3,8,24], index: 7, kind: input, shape index: {}]
  %s8 = inlined_call_operand.vmem [shape: f32[3,3,8,1], index: 8, kind: input, shape index: {}]
  %s9 = inlined_call_operand.vmem [shape: f32[3,3,8,8], index: 9, kind: input, shape index: {}]
  %s10 = inlined_call_operand.vmem [shape: f32[3,3,8,1], index: 10, kind: input, shape index: {}]
  %s11 = inlined_call_operand.hbm [shape: f32[3,8,8], index: 11, kind: input, shape index: {}]
  %s12 = inlined_call_operand.vmem [shape: f32[3,8,1], index: 12, kind: input, shape index: {}]
  %s13 = inlined_call_operand.hbm [shape: f32[3,8,1024], index: 13, kind: output, shape index: {}]
  %s14 = sld [smem:[#allocation0]]
  $region70: #{tpu_custom_call.1} parent=0
    _
  %s16 = ssub.s32 1, %s14
  %s17 = scalar_select 0, %s16, %s14
  $region1: #{tpu_custom_call.1} parent=0
    #allocation2 [shape = 'u8[4096]{0}', space=vmem, size = 0x1000, scoped, tag = 'input window, operand 2, single buffered']
    #allocation3 [shape = 's32[1]{0}', space=sflag, size = 0x4, scoped, tag = 'scoped memory for tpu_custom_call.1']
    #allocation4 [shape = 's32[1]{0}', space=sflag, size = 0x4, scoped, tag = 'scoped memory for tpu_custom_call.1']
    #allocation5 [shape = 'u8[12288]{0}', space=vmem, size = 0x3000, scoped, tag = 'input window, operand 11, single buffered']
    #allocation6 [shape = 's32[1]{0}', space=sflag, size = 0x4, scoped, tag = 'scoped memory for tpu_custom_call.1']
    #allocation7 [shape = 'u8[98304]{0}', space=vmem, size = 0x18000, scoped, tag = 'output window, operand 0, single buffered']
    %18 = vsyncpa [#allocation3], 0
    %19 = vsyncpa [#allocation6], 0
    %20 = vsyncpa [#allocation4], 0
    // Predicated region
    $region2: #{tpu_custom_call.1} parent=1 // pred_check
      _
    $region3: #{tpu_custom_call.1} parent=1 // pred_check_branch
      %22 = sbr.rel (0) target = $region5
    $region4: #{tpu_custom_call.1} parent=1 // pred_region
      _
    $region5: #{tpu_custom_call.1} parent=1 // pred_fallthru
      _
    // Predicated region
    $region6: #{tpu_custom_call.1} parent=1 // pred_check
      _
    $region7: #{tpu_custom_call.1} parent=1 // pred_check_branch
      %24 = sbr.rel (0) target = $region9
    $region8: #{tpu_custom_call.1} parent=1 // pred_region
      _
    $region9: #{tpu_custom_call.1} parent=1 // pred_fallthru
      _
    // Predicated region
    $region10: #{tpu_custom_call.1} parent=1 // pred_check
      _
    $region11: #{tpu_custom_call.1} parent=1 // pred_check_branch
      %26 = sbr.rel (0) target = $region13
    $region12: #{tpu_custom_call.1} parent=1 // pred_region
      %28 = vsyncadd [#allocation3], 0
      %s30 = sshll.u32 %s2, 4
      %s31 = int_to_ptr.hbm [resolvable:$true] %s30
      %s32 = sshll.u32 [#allocation2], 4
      %s33 = int_to_ptr.vmem [resolvable:$true] %s32
      %35 = dma.hbm_to_vmem [thread:$0]  %s31, 128, %s33, [#allocation3]
    $region13: #{tpu_custom_call.1} parent=1 // pred_fallthru
      _
    // Predicated region
    $region14: #{tpu_custom_call.1} parent=1 // pred_check
      _
    $region15: #{tpu_custom_call.1} parent=1 // pred_check_branch
      %37 = sbr.rel (0) target = $region17
    $region16: #{tpu_custom_call.1} parent=1 // pred_region
      _
    $region17: #{tpu_custom_call.1} parent=1 // pred_fallthru
      _
    // Predicated region
    $region18: #{tpu_custom_call.1} parent=1 // pred_check
      _
    $region19: #{tpu_custom_call.1} parent=1 // pred_check_branch
      %39 = sbr.rel (0) target = $region21
    $region20: #{tpu_custom_call.1} parent=1 // pred_region
      _
    $region21: #{tpu_custom_call.1} parent=1 // pred_fallthru
      _
    // Predicated region
    $region22: #{tpu_custom_call.1} parent=1 // pred_check
      _
    $region23: #{tpu_custom_call.1} parent=1 // pred_check_branch
      %41 = sbr.rel (0) target = $region25
    $region24: #{tpu_custom_call.1} parent=1 // pred_region
      _
    $region25: #{tpu_custom_call.1} parent=1 // pred_fallthru
      _
    // Predicated region
    $region26: #{tpu_custom_call.1} parent=1 // pred_check
      _
    $region27: #{tpu_custom_call.1} parent=1 // pred_check_branch
      %43 = sbr.rel (0) target = $region29
    $region28: #{tpu_custom_call.1} parent=1 // pred_region
      _
    $region29: #{tpu_custom_call.1} parent=1 // pred_fallthru
      _
    // Predicated region
    $region30: #{tpu_custom_call.1} parent=1 // pred_check
      _
    $region31: #{tpu_custom_call.1} parent=1 // pred_check_branch
      %45 = sbr.rel (0) target = $region33
    $region32: #{tpu_custom_call.1} parent=1 // pred_region
      _
    $region33: #{tpu_custom_call.1} parent=1 // pred_fallthru
      _
    // Predicated region
    $region34: #{tpu_custom_call.1} parent=1 // pred_check
      _
    $region35: #{tpu_custom_call.1} parent=1 // pred_check_branch
      %47 = sbr.rel (0) target = $region37
    $region36: #{tpu_custom_call.1} parent=1 // pred_region
      _
    $region37: #{tpu_custom_call.1} parent=1 // pred_fallthru
      _
    // Predicated region
    $region38: #{tpu_custom_call.1} parent=1 // pred_check
      _
    $region39: #{tpu_custom_call.1} parent=1 // pred_check_branch
      %49 = sbr.rel (0) target = $region41
    $region40: #{tpu_custom_call.1} parent=1 // pred_region
      _
    $region41: #{tpu_custom_call.1} parent=1 // pred_fallthru
      _
    // Predicated region
    $region42: #{tpu_custom_call.1} parent=1 // pred_check
      _
    $region43: #{tpu_custom_call.1} parent=1 // pred_check_branch
      %51 = sbr.rel (0) target = $region45
    $region44: #{tpu_custom_call.1} parent=1 // pred_region
      _
    $region45: #{tpu_custom_call.1} parent=1 // pred_fallthru
      _
    // Predicated region
    $region46: #{tpu_custom_call.1} parent=1 // pred_check
      _
    $region47: #{tpu_custom_call.1} parent=1 // pred_check_branch
      %53 = sbr.rel (0) target = $region49
    $region48: #{tpu_custom_call.1} parent=1 // pred_region
      %55 = vsyncadd [#allocation6], 0
      %s56 = sshll.u32 %s11, 4
      %s57 = int_to_ptr.hbm [resolvable:$true] %s56
      %s58 = sshll.u32 [#allocation5], 4
      %s59 = int_to_ptr.vmem [resolvable:$true] %s58
      %64 = dma.hbm_to_vmem [thread:$0]  %s57, 384, %s59, [#allocation6], 128, 128, 8
    $region49: #{tpu_custom_call.1} parent=1 // pred_fallthru
      _
    // Predicated region
    $region50: #{tpu_custom_call.1} parent=1 // pred_check
      _
    $region51: #{tpu_custom_call.1} parent=1 // pred_check_branch
      %66 = sbr.rel (0) target = $region53
    $region52: #{tpu_custom_call.1} parent=1 // pred_region
      _
    $region53: #{tpu_custom_call.1} parent=1 // pred_fallthru
      _
    // Predicated region
    $region54: #{tpu_custom_call.1} parent=1 // pred_check
      _
    $region55: #{tpu_custom_call.1} parent=1 // pred_check_branch
      %68 = sbr.rel (0) target = $region57
    $region56: #{tpu_custom_call.1} parent=1 // pred_region
      %70 = dma.done [#allocation3], 128
    $region57: #{tpu_custom_call.1} parent=1 // pred_fallthru
      _
    // Predicated region
    $region58: #{tpu_custom_call.1} parent=1 // pred_check
      _
    $region59: #{tpu_custom_call.1} parent=1 // pred_check_branch
      %72 = sbr.rel (0) target = $region61
    $region60: #{tpu_custom_call.1} parent=1 // pred_region
      %74 = dma.done [#allocation6], 384
    $region61: #{tpu_custom_call.1} parent=1 // pred_fallthru
      _
    %v75 = vld [vmem:[%s0] sm:$0xff]
    %v76 = vld [vmem:[%s0 + $0x8] sm:$0xff]
    %v77 = vld [vmem:[%s0 + $0x10] sm:$0xff]
    %v78 = vld [vmem:[%s0 + $0x18] sm:$0xff]
    %v79 = vld [vmem:[%s1] sm:$0xff]
    %v80 = vld [vmem:[#allocation2] sm:$0xff]
    %v81 = vperm.slane %v80, 0
    %v82 = vperm.slane %v80, 1
    %v83 = vperm.slane %v80, 2
    %v84 = vperm.slane %v80, 3
    %v85 = vperm.slane %v80, 4
    %v86 = vperm.slane %v80, 5
    %v87 = vperm.slane %v80, 6
    %v88 = vperm.slane %v80, 7
    %v90 = vperm.slane %v79, 0
    %v91 = vperm.slane %v79, 1
    %v92 = vperm.slane %v79, 2
    %v93 = vperm.slane %v79, 3
    %v94 = vperm.slane %v79, 4
    %v95 = vperm.slane %v79, 5
    %v96 = vperm.slane %v79, 6
    %v97 = vperm.slane %v79, 7
    %vm106 = vcmp.ge.s32.totalorder %v81, 1
    %vm107 = vcmp.ge.s32.totalorder %v82, 1
    %vm108 = vcmp.ge.s32.totalorder %v83, 1
    %vm109 = vcmp.ge.s32.totalorder %v84, 1
    %vm110 = vcmp.ge.s32.totalorder %v85, 1
    %vm111 = vcmp.ge.s32.totalorder %v86, 1
    %vm112 = vcmp.ge.s32.totalorder %v87, 1
    %vm113 = vcmp.ge.s32.totalorder %v88, 1
    %vm114 = vcmp.lt.s32.totalorder %v81, 511
    %vm115 = vcmp.lt.s32.totalorder %v82, 511
    %vm116 = vcmp.lt.s32.totalorder %v83, 511
    %vm117 = vcmp.lt.s32.totalorder %v84, 511
    %vm118 = vcmp.lt.s32.totalorder %v85, 511
    %vm119 = vcmp.lt.s32.totalorder %v86, 511
    %vm120 = vcmp.lt.s32.totalorder %v87, 511
    %vm121 = vcmp.lt.s32.totalorder %v88, 511
    %vm122 = vcmp.ge.s32.totalorder %v81, 2
    %vm123 = vcmp.ge.s32.totalorder %v82, 2
    %vm124 = vcmp.ge.s32.totalorder %v83, 2
    %vm125 = vcmp.ge.s32.totalorder %v84, 2
    %vm126 = vcmp.ge.s32.totalorder %v85, 2
    %vm127 = vcmp.ge.s32.totalorder %v86, 2
    %vm128 = vcmp.ge.s32.totalorder %v87, 2
    %vm129 = vcmp.ge.s32.totalorder %v88, 2
    %vm130 = vcmp.lt.s32.totalorder %v81, 510
    %vm131 = vcmp.lt.s32.totalorder %v82, 510
    %vm132 = vcmp.lt.s32.totalorder %v83, 510
    %vm133 = vcmp.lt.s32.totalorder %v84, 510
    %vm134 = vcmp.lt.s32.totalorder %v85, 510
    %vm135 = vcmp.lt.s32.totalorder %v86, 510
    %vm136 = vcmp.lt.s32.totalorder %v87, 510
    %vm137 = vcmp.lt.s32.totalorder %v88, 510
    %vm138 = vcmp.ge.s32.totalorder %v81, 4
    %vm139 = vcmp.ge.s32.totalorder %v82, 4
    %vm140 = vcmp.ge.s32.totalorder %v83, 4
    %vm141 = vcmp.ge.s32.totalorder %v84, 4
    %vm142 = vcmp.ge.s32.totalorder %v85, 4
    %vm143 = vcmp.ge.s32.totalorder %v86, 4
    %vm144 = vcmp.ge.s32.totalorder %v87, 4
    %vm145 = vcmp.ge.s32.totalorder %v88, 4
    %vm146 = vcmp.lt.s32.totalorder %v81, 508
    %vm147 = vcmp.lt.s32.totalorder %v82, 508
    %vm148 = vcmp.lt.s32.totalorder %v83, 508
    %vm149 = vcmp.lt.s32.totalorder %v84, 508
    %vm150 = vcmp.lt.s32.totalorder %v85, 508
    %vm151 = vcmp.lt.s32.totalorder %v86, 508
    %vm152 = vcmp.lt.s32.totalorder %v87, 508
    %vm153 = vcmp.lt.s32.totalorder %v88, 508
    %v154 = vlaneseq
    %v155 = vshrl.u32 %v154, 7
    %vm156 = vcmp.lt.s32.totalorder %v155, 6
    %v157 = vld [vmem:[%s3] sm:$0xff]
    %v158 = vld [vmem:[%s4] sm:$0xff]
    %160 = vset.pattern.permute.xlu0 0
    %161 = vperm.xlu0 %160, %v158
    %v162 = vpop.permute.xlu0 %161
    %168 = vst [vmem:[#allocation1] ss:$2 sm:$0xff] %v75
    %s169 = scalar_lea.vmem [#allocation1], 16
    %170 = vst [vmem:[%s169] ss:$2 sm:$0xff] %v76
    %s171 = scalar_lea.vmem [#allocation1], 32
    %172 = vst [vmem:[%s171] ss:$2 sm:$0xff] %v77
    %s173 = scalar_lea.vmem [#allocation1], 48
    %174 = vst [vmem:[%s173] ss:$2 sm:$0xff] %v78
    %v175 = vld.sshfl [vmem:[#allocation1] sm:$0xff pattern:$0x75316420]
    %v176 = vld.sshfl [vmem:[#allocation1 + $0x8] sm:$0xff pattern:$0x75316420]
    %v177 = vld.sshfl [vmem:[#allocation1 + $0x10] sm:$0xff pattern:$0x75316420]
    %v178 = vld.sshfl [vmem:[#allocation1 + $0x18] sm:$0xff pattern:$0x75316420]
    %v179 = vld.sshfl [vmem:[#allocation1 + $0x20] sm:$0xff pattern:$0x75316420]
    %v180 = vld.sshfl [vmem:[#allocation1 + $0x28] sm:$0xff pattern:$0x75316420]
    %v181 = vld.sshfl [vmem:[#allocation1 + $0x30] sm:$0xff pattern:$0x75316420]
    %v182 = vld.sshfl [vmem:[#allocation1 + $0x38] sm:$0xff pattern:$0x75316420]
    %vm183 = vcmask 31744
    %v185 = vsel %vm183, %v157, 0
    %vm187 = vcmask 1043456
    %v188 = vsel %vm187, %v175, 0
    %v190 = vsel %vm187, %v176, 0
    %v192 = vsel %vm187, %v177, 0
    %v194 = vsel %vm187, %v178, 0
    %v196 = vsel %vm187, %v179, 0
    %v198 = vsel %vm187, %v180, 0
    %v200 = vsel %vm187, %v181, 0
    %v202 = vsel %vm187, %v182, 0
    %204 = vmatpush.msra.mxu0 0.0
    %205 = vmatpush.msra.mxu0 0.0
    %206 = vmatpush.msra.mxu0 0.0
    %207 = vmatpush.msra.mxu0 0.0
    %208 = vmatpush.msra.mxu0 0.0
    %209 = vmatpush.msra.mxu0 0.0
    %210 = vmatpush.msra.mxu0 0.0
    %211 = vmatpush.msra.mxu0 0.0
    %212 = vmatpush.msra.mxu0 0.0
    %213 = vmatpush.msra.mxu0 0.0
    %214 = vmatpush.msra.mxu0 0.0
    %215 = vmatpush.msra.mxu0 0.0
    %216 = vmatpush.msra.mxu0 0.0
    %217 = vmatpush.msra.mxu0 0.0
    %218 = vmatpush.msra.mxu0 0.0
    %219 = vmatpush.msra.mxu0 %v188
    %220 = vmatmul.f32.gmra.mxu0 %v185
    %v221 = vpop.f32.mrf.mxu0
    %v222 = vadd.f32 %v162, %v221
    %223 = vdwg.mxu0
    %224 = vmatpush.msra.mxu0 0.0
    %225 = vmatpush.msra.mxu0 0.0
    %226 = vmatpush.msra.mxu0 0.0
    %227 = vmatpush.msra.mxu0 0.0
    %228 = vmatpush.msra.mxu0 0.0
    %229 = vmatpush.msra.mxu0 0.0
    %230 = vmatpush.msra.mxu0 0.0
    %231 = vmatpush.msra.mxu0 0.0
    %232 = vmatpush.msra.mxu0 0.0
    %233 = vmatpush.msra.mxu0 0.0
    %234 = vmatpush.msra.mxu0 0.0
    %235 = vmatpush.msra.mxu0 0.0
    %236 = vmatpush.msra.mxu0 0.0
    %237 = vmatpush.msra.mxu0 0.0
    %238 = vmatpush.msra.mxu0 0.0
    %239 = vmatpush.msra.mxu0 %v190
    %240 = vmatmul.f32.gmra.mxu0 %v185
    %v241 = vpop.f32.mrf.mxu0
    %v242 = vadd.f32 %v162, %v241
    %243 = vdwg.mxu0
    %244 = vmatpush.msra.mxu0 0.0
    %245 = vmatpush.msra.mxu0 0.0
    %246 = vmatpush.msra.mxu0 0.0
    %247 = vmatpush.msra.mxu0 0.0
    %248 = vmatpush.msra.mxu0 0.0
    %249 = vmatpush.msra.mxu0 0.0
    %250 = vmatpush.msra.mxu0 0.0
    %251 = vmatpush.msra.mxu0 0.0
    %252 = vmatpush.msra.mxu0 0.0
    %253 = vmatpush.msra.mxu0 0.0
    %254 = vmatpush.msra.mxu0 0.0
    %255 = vmatpush.msra.mxu0 0.0
    %256 = vmatpush.msra.mxu0 0.0
    %257 = vmatpush.msra.mxu0 0.0
    %258 = vmatpush.msra.mxu0 0.0
    %259 = vmatpush.msra.mxu0 %v192
    %260 = vmatmul.f32.gmra.mxu0 %v185
    %v261 = vpop.f32.mrf.mxu0
    %v262 = vadd.f32 %v162, %v261
    %263 = vdwg.mxu0
    %264 = vmatpush.msra.mxu0 0.0
    %265 = vmatpush.msra.mxu0 0.0
    %266 = vmatpush.msra.mxu0 0.0
    %267 = vmatpush.msra.mxu0 0.0
    %268 = vmatpush.msra.mxu0 0.0
    %269 = vmatpush.msra.mxu0 0.0
    %270 = vmatpush.msra.mxu0 0.0
    %271 = vmatpush.msra.mxu0 0.0
    %272 = vmatpush.msra.mxu0 0.0
    %273 = vmatpush.msra.mxu0 0.0
    %274 = vmatpush.msra.mxu0 0.0
    %275 = vmatpush.msra.mxu0 0.0
    %276 = vmatpush.msra.mxu0 0.0
    %277 = vmatpush.msra.mxu0 0.0
    %278 = vmatpush.msra.mxu0 0.0
    %279 = vmatpush.msra.mxu0 %v194
    %280 = vmatmul.f32.gmra.mxu0 %v185
    %v281 = vpop.f32.mrf.mxu0
    %v282 = vadd.f32 %v162, %v281
    %283 = vdwg.mxu0
    %284 = vmatpush.msra.mxu0 0.0
    %285 = vmatpush.msra.mxu0 0.0
    %286 = vmatpush.msra.mxu0 0.0
    %287 = vmatpush.msra.mxu0 0.0
    %288 = vmatpush.msra.mxu0 0.0
    %289 = vmatpush.msra.mxu0 0.0
    %290 = vmatpush.msra.mxu0 0.0
    %291 = vmatpush.msra.mxu0 0.0
    %292 = vmatpush.msra.mxu0 0.0
    %293 = vmatpush.msra.mxu0 0.0
    %294 = vmatpush.msra.mxu0 0.0
    %295 = vmatpush.msra.mxu0 0.0
    %296 = vmatpush.msra.mxu0 0.0
    %297 = vmatpush.msra.mxu0 0.0
    %298 = vmatpush.msra.mxu0 0.0
    %299 = vmatpush.msra.mxu0 %v196
    %300 = vmatmul.f32.gmra.mxu0 %v185
    %v301 = vpop.f32.mrf.mxu0
    %v302 = vadd.f32 %v162, %v301
    %303 = vdwg.mxu0
    %304 = vmatpush.msra.mxu0 0.0
    %305 = vmatpush.msra.mxu0 0.0
    %306 = vmatpush.msra.mxu0 0.0
    %307 = vmatpush.msra.mxu0 0.0
    %308 = vmatpush.msra.mxu0 0.0
    %309 = vmatpush.msra.mxu0 0.0
    %310 = vmatpush.msra.mxu0 0.0
    %311 = vmatpush.msra.mxu0 0.0
    %312 = vmatpush.msra.mxu0 0.0
    %313 = vmatpush.msra.mxu0 0.0
    %314 = vmatpush.msra.mxu0 0.0
    %315 = vmatpush.msra.mxu0 0.0
    %316 = vmatpush.msra.mxu0 0.0
    %317 = vmatpush.msra.mxu0 0.0
    %318 = vmatpush.msra.mxu0 0.0
    %319 = vmatpush.msra.mxu0 %v198
    %320 = vmatmul.f32.gmra.mxu0 %v185
    %v321 = vpop.f32.mrf.mxu0
    %v322 = vadd.f32 %v162, %v321
    %323 = vdwg.mxu0
    %324 = vmatpush.msra.mxu0 0.0
    %325 = vmatpush.msra.mxu0 0.0
    %326 = vmatpush.msra.mxu0 0.0
    %327 = vmatpush.msra.mxu0 0.0
    %328 = vmatpush.msra.mxu0 0.0
    %329 = vmatpush.msra.mxu0 0.0
    %330 = vmatpush.msra.mxu0 0.0
    %331 = vmatpush.msra.mxu0 0.0
    %332 = vmatpush.msra.mxu0 0.0
    %333 = vmatpush.msra.mxu0 0.0
    %334 = vmatpush.msra.mxu0 0.0
    %335 = vmatpush.msra.mxu0 0.0
    %336 = vmatpush.msra.mxu0 0.0
    %337 = vmatpush.msra.mxu0 0.0
    %338 = vmatpush.msra.mxu0 0.0
    %339 = vmatpush.msra.mxu0 %v200
    %340 = vmatmul.f32.gmra.mxu0 %v185
    %v341 = vpop.f32.mrf.mxu0
    %v342 = vadd.f32 %v162, %v341
    %343 = vdwg.mxu0
    %344 = vmatpush.msra.mxu0 0.0
    %345 = vmatpush.msra.mxu0 0.0
    %346 = vmatpush.msra.mxu0 0.0
    %347 = vmatpush.msra.mxu0 0.0
    %348 = vmatpush.msra.mxu0 0.0
    %349 = vmatpush.msra.mxu0 0.0
    %350 = vmatpush.msra.mxu0 0.0
    %351 = vmatpush.msra.mxu0 0.0
    %352 = vmatpush.msra.mxu0 0.0
    %353 = vmatpush.msra.mxu0 0.0
    %354 = vmatpush.msra.mxu0 0.0
    %355 = vmatpush.msra.mxu0 0.0
    %356 = vmatpush.msra.mxu0 0.0
    %357 = vmatpush.msra.mxu0 0.0
    %358 = vmatpush.msra.mxu0 0.0
    %359 = vmatpush.msra.mxu0 %v202
    %360 = vmatmul.f32.gmra.mxu0 %v185
    %v361 = vpop.f32.mrf.mxu0
    %v362 = vadd.f32 %v162, %v361
    %363 = vdwg.mxu0
    %364 = vrot.lane.b32.xlu0 %v222, 1
    %v365 = vpop.permute.xlu0 %364
    %366 = vrot.lane.b32.xlu0 %v242, 1
    %v367 = vpop.permute.xlu0 %366
    %368 = vrot.lane.b32.xlu0 %v262, 1
    %v369 = vpop.permute.xlu0 %368
    %370 = vrot.lane.b32.xlu0 %v282, 1
    %v371 = vpop.permute.xlu0 %370
    %372 = vrot.lane.b32.xlu0 %v302, 1
    %v373 = vpop.permute.xlu0 %372
    %374 = vrot.lane.b32.xlu0 %v322, 1
    %v375 = vpop.permute.xlu0 %374
    %376 = vrot.lane.b32.xlu0 %v342, 1
    %v377 = vpop.permute.xlu0 %376
    %378 = vrot.lane.b32.xlu0 %v362, 1
    %v379 = vpop.permute.xlu0 %378
    %v380 = vlaneseq
    %v381 = vand.u32 %v380, 127
    %vm382 = vcmp.lt.s32.totalorder %v381, 1
    %v383 = vsel %vm382, %v377, %v379
    %v384 = vsel %vm382, %v375, %v377
    %v385 = vsel %vm382, %v373, %v375
    %v386 = vsel %vm382, %v371, %v373
    %v387 = vsel %vm382, %v369, %v371
    %v388 = vsel %vm382, %v367, %v369
    %v389 = vsel %vm382, %v365, %v367
    %v390 = vsel %vm382, %v379, %v365
    %v391 = vsel %vm106, %v390, 0.0
    %v392 = vsel %vm107, %v389, 0.0
    %v393 = vsel %vm108, %v388, 0.0
    %v394 = vsel %vm109, %v387, 0.0
    %v395 = vsel %vm110, %v386, 0.0
    %v396 = vsel %vm111, %v385, 0.0
    %v397 = vsel %vm112, %v384, 0.0
    %v398 = vsel %vm113, %v383, 0.0
    %399 = vrot.lane.b32.xlu0 %v222, 127
    %v400 = vpop.permute.xlu0 %399
    %401 = vrot.lane.b32.xlu0 %v242, 127
    %v402 = vpop.permute.xlu0 %401
    %403 = vrot.lane.b32.xlu0 %v262, 127
    %v404 = vpop.permute.xlu0 %403
    %405 = vrot.lane.b32.xlu0 %v282, 127
    %v406 = vpop.permute.xlu0 %405
    %407 = vrot.lane.b32.xlu0 %v302, 127
    %v408 = vpop.permute.xlu0 %407
    %409 = vrot.lane.b32.xlu0 %v322, 127
    %v410 = vpop.permute.xlu0 %409
    %411 = vrot.lane.b32.xlu0 %v342, 127
    %v412 = vpop.permute.xlu0 %411
    %413 = vrot.lane.b32.xlu0 %v362, 127
    %v414 = vpop.permute.xlu0 %413
    %vm415 = vcmp.lt.s32.totalorder %v381, 127
    %v416 = vsel %vm415, %v412, %v414
    %v417 = vsel %vm415, %v410, %v412
    %v418 = vsel %vm415, %v408, %v410
    %v419 = vsel %vm415, %v406, %v408
    %v420 = vsel %vm415, %v404, %v406
    %v421 = vsel %vm415, %v402, %v404
    %v422 = vsel %vm415, %v400, %v402
    %v423 = vsel %vm415, %v414, %v400
    %v424 = vsel %vm114, %v422, 0.0
    %v425 = vsel %vm115, %v421, 0.0
    %v426 = vsel %vm116, %v420, 0.0
    %v427 = vsel %vm117, %v419, 0.0
    %v428 = vsel %vm118, %v418, 0.0
    %v429 = vsel %vm119, %v417, 0.0
    %v430 = vsel %vm120, %v416, 0.0
    %v431 = vsel %vm121, %v423, 0.0
    %v432 = vld [vmem:[%s7] sm:$0xff]
    %v433 = vld [vmem:[%s8] sm:$0xff]
    %435 = vset.pattern.permute.xlu0 0
    %436 = vperm.xlu0 %435, %v433
    %v437 = vpop.permute.xlu0 %436
    %vm439 = vcmask 195584
    %v441 = vsel %vm439, %v432, 0
    %443 = vmatpush.msra.mxu0 0.0
    %444 = vmatpush.msra.mxu0 0.0
    %445 = vmatpush.msra.mxu0 0.0
    %446 = vmatpush.msra.mxu0 0.0
    %447 = vmatpush.msra.mxu0 0.0
    %448 = vmatpush.msra.mxu0 0.0
    %449 = vmatpush.msra.mxu0 0.0
    %450 = vmatpush.msra.mxu0 0.0
    %451 = vmatpush.msra.mxu0 0.0
    %452 = vmatpush.msra.mxu0 0.0
    %453 = vmatpush.msra.mxu0 0.0
    %454 = vmatpush.msra.mxu0 0.0
    %455 = vmatpush.msra.mxu0 0.0
    %456 = vmatpush.msra.mxu0 %v424
    %457 = vmatpush.msra.mxu0 %v222
    %458 = vmatpush.msra.mxu0 %v391
    %459 = vmatmul.f32.gmra.mxu0 %v441
    %v460 = vpop.f32.mrf.mxu0
    %v461 = vadd.f32 %v437, %v460
    %462 = vdwg.mxu0
    %463 = vmatpush.msra.mxu0 0.0
    %464 = vmatpush.msra.mxu0 0.0
    %465 = vmatpush.msra.mxu0 0.0
    %466 = vmatpush.msra.mxu0 0.0
    %467 = vmatpush.msra.mxu0 0.0
    %468 = vmatpush.msra.mxu0 0.0
    %469 = vmatpush.msra.mxu0 0.0
    %470 = vmatpush.msra.mxu0 0.0
    %471 = vmatpush.msra.mxu0 0.0
    %472 = vmatpush.msra.mxu0 0.0
    %473 = vmatpush.msra.mxu0 0.0
    %474 = vmatpush.msra.mxu0 0.0
    %475 = vmatpush.msra.mxu0 0.0
    %476 = vmatpush.msra.mxu0 %v425
    %477 = vmatpush.msra.mxu0 %v242
    %478 = vmatpush.msra.mxu0 %v392
    %479 = vmatmul.f32.gmra.mxu0 %v441
    %v480 = vpop.f32.mrf.mxu0
    %v481 = vadd.f32 %v437, %v480
    %482 = vdwg.mxu0
    %483 = vmatpush.msra.mxu0 0.0
    %484 = vmatpush.msra.mxu0 0.0
    %485 = vmatpush.msra.mxu0 0.0
    %486 = vmatpush.msra.mxu0 0.0
    %487 = vmatpush.msra.mxu0 0.0
    %488 = vmatpush.msra.mxu0 0.0
    %489 = vmatpush.msra.mxu0 0.0
    %490 = vmatpush.msra.mxu0 0.0
    %491 = vmatpush.msra.mxu0 0.0
    %492 = vmatpush.msra.mxu0 0.0
    %493 = vmatpush.msra.mxu0 0.0
    %494 = vmatpush.msra.mxu0 0.0
    %495 = vmatpush.msra.mxu0 0.0
    %496 = vmatpush.msra.mxu0 %v426
    %497 = vmatpush.msra.mxu0 %v262
    %498 = vmatpush.msra.mxu0 %v393
    %499 = vmatmul.f32.gmra.mxu0 %v441
    %v500 = vpop.f32.mrf.mxu0
    %v501 = vadd.f32 %v437, %v500
    %502 = vdwg.mxu0
    %503 = vmatpush.msra.mxu0 0.0
    %504 = vmatpush.msra.mxu0 0.0
    %505 = vmatpush.msra.mxu0 0.0
    %506 = vmatpush.msra.mxu0 0.0
    %507 = vmatpush.msra.mxu0 0.0
    %508 = vmatpush.msra.mxu0 0.0
    %509 = vmatpush.msra.mxu0 0.0
    %510 = vmatpush.msra.mxu0 0.0
    %511 = vmatpush.msra.mxu0 0.0
    %512 = vmatpush.msra.mxu0 0.0
    %513 = vmatpush.msra.mxu0 0.0
    %514 = vmatpush.msra.mxu0 0.0
    %515 = vmatpush.msra.mxu0 0.0
    %516 = vmatpush.msra.mxu0 %v427
    %517 = vmatpush.msra.mxu0 %v282
    %518 = vmatpush.msra.mxu0 %v394
    %519 = vmatmul.f32.gmra.mxu0 %v441
    %v520 = vpop.f32.mrf.mxu0
    %v521 = vadd.f32 %v437, %v520
    %522 = vdwg.mxu0
    %523 = vmatpush.msra.mxu0 0.0
    %524 = vmatpush.msra.mxu0 0.0
    %525 = vmatpush.msra.mxu0 0.0
    %526 = vmatpush.msra.mxu0 0.0
    %527 = vmatpush.msra.mxu0 0.0
    %528 = vmatpush.msra.mxu0 0.0
    %529 = vmatpush.msra.mxu0 0.0
    %530 = vmatpush.msra.mxu0 0.0
    %531 = vmatpush.msra.mxu0 0.0
    %532 = vmatpush.msra.mxu0 0.0
    %533 = vmatpush.msra.mxu0 0.0
    %534 = vmatpush.msra.mxu0 0.0
    %535 = vmatpush.msra.mxu0 0.0
    %536 = vmatpush.msra.mxu0 %v428
    %537 = vmatpush.msra.mxu0 %v302
    %538 = vmatpush.msra.mxu0 %v395
    %539 = vmatmul.f32.gmra.mxu0 %v441
    %v540 = vpop.f32.mrf.mxu0
    %v541 = vadd.f32 %v437, %v540
    %542 = vdwg.mxu0
    %543 = vmatpush.msra.mxu0 0.0
    %544 = vmatpush.msra.mxu0 0.0
    %545 = vmatpush.msra.mxu0 0.0
    %546 = vmatpush.msra.mxu0 0.0
    %547 = vmatpush.msra.mxu0 0.0
    %548 = vmatpush.msra.mxu0 0.0
    %549 = vmatpush.msra.mxu0 0.0
    %550 = vmatpush.msra.mxu0 0.0
    %551 = vmatpush.msra.mxu0 0.0
    %552 = vmatpush.msra.mxu0 0.0
    %553 = vmatpush.msra.mxu0 0.0
    %554 = vmatpush.msra.mxu0 0.0
    %555 = vmatpush.msra.mxu0 0.0
    %556 = vmatpush.msra.mxu0 %v429
    %557 = vmatpush.msra.mxu0 %v322
    %558 = vmatpush.msra.mxu0 %v396
    %559 = vmatmul.f32.gmra.mxu0 %v441
    %v560 = vpop.f32.mrf.mxu0
    %v561 = vadd.f32 %v437, %v560
    %562 = vdwg.mxu0
    %563 = vmatpush.msra.mxu0 0.0
    %564 = vmatpush.msra.mxu0 0.0
    %565 = vmatpush.msra.mxu0 0.0
    %566 = vmatpush.msra.mxu0 0.0
    %567 = vmatpush.msra.mxu0 0.0
    %568 = vmatpush.msra.mxu0 0.0
    %569 = vmatpush.msra.mxu0 0.0
    %570 = vmatpush.msra.mxu0 0.0
    %571 = vmatpush.msra.mxu0 0.0
    %572 = vmatpush.msra.mxu0 0.0
    %573 = vmatpush.msra.mxu0 0.0
    %574 = vmatpush.msra.mxu0 0.0
    %575 = vmatpush.msra.mxu0 0.0
    %576 = vmatpush.msra.mxu0 %v430
    %577 = vmatpush.msra.mxu0 %v342
    %578 = vmatpush.msra.mxu0 %v397
    %579 = vmatmul.f32.gmra.mxu0 %v441
    %v580 = vpop.f32.mrf.mxu0
    %v581 = vadd.f32 %v437, %v580
    %582 = vdwg.mxu0
    %583 = vmatpush.msra.mxu0 0.0
    %584 = vmatpush.msra.mxu0 0.0
    %585 = vmatpush.msra.mxu0 0.0
    %586 = vmatpush.msra.mxu0 0.0
    %587 = vmatpush.msra.mxu0 0.0
    %588 = vmatpush.msra.mxu0 0.0
    %589 = vmatpush.msra.mxu0 0.0
    %590 = vmatpush.msra.mxu0 0.0
    %591 = vmatpush.msra.mxu0 0.0
    %592 = vmatpush.msra.mxu0 0.0
    %593 = vmatpush.msra.mxu0 0.0
    %594 = vmatpush.msra.mxu0 0.0
    %595 = vmatpush.msra.mxu0 0.0
    %596 = vmatpush.msra.mxu0 %v431
    %597 = vmatpush.msra.mxu0 %v362
    %598 = vmatpush.msra.mxu0 %v398
    %599 = vmatmul.f32.gmra.mxu0 %v441
    %v600 = vpop.f32.mrf.mxu0
    %v601 = vadd.f32 %v437, %v600
    %602 = vdwg.mxu0
    %v603 = vmax.f32 %v461, 0.0
    %v604 = vmax.f32 %v481, 0.0
    %v605 = vmax.f32 %v501, 0.0
    %v606 = vmax.f32 %v521, 0.0
    %v607 = vmax.f32 %v541, 0.0
    %v608 = vmax.f32 %v561, 0.0
    %v609 = vmax.f32 %v581, 0.0
    %v610 = vmax.f32 %v601, 0.0
    %v611 = vld [vmem:[%s9] sm:$0xff]
    %v612 = vld [vmem:[%s10] sm:$0xff]
    %614 = vset.pattern.permute.xlu0 0
    %615 = vperm.xlu0 %614, %v612
    %v616 = vpop.permute.xlu0 %615
    %vm618 = vcmask 64512
    %v620 = vsel %vm618, %v611, 0
    %622 = vmatpush.msra.mxu0 0.0
    %623 = vmatpush.msra.mxu0 0.0
    %624 = vmatpush.msra.mxu0 0.0
    %625 = vmatpush.msra.mxu0 0.0
    %626 = vmatpush.msra.mxu0 0.0
    %627 = vmatpush.msra.mxu0 0.0
    %628 = vmatpush.msra.mxu0 0.0
    %629 = vmatpush.msra.mxu0 0.0
    %630 = vmatpush.msra.mxu0 0.0
    %631 = vmatpush.msra.mxu0 0.0
    %632 = vmatpush.msra.mxu0 0.0
    %633 = vmatpush.msra.mxu0 0.0
    %634 = vmatpush.msra.mxu0 0.0
    %635 = vmatpush.msra.mxu0 0.0
    %636 = vmatpush.msra.mxu0 0.0
    %637 = vmatpush.msra.mxu0 %v603
    %638 = vmatmul.f32.gmra.mxu0 %v620
    %v639 = vpop.f32.mrf.mxu0
    %v640 = vadd.f32 %v616, %v639
    %641 = vdwg.mxu0
    %642 = vmatpush.msra.mxu0 0.0
    %643 = vmatpush.msra.mxu0 0.0
    %644 = vmatpush.msra.mxu0 0.0
    %645 = vmatpush.msra.mxu0 0.0
    %646 = vmatpush.msra.mxu0 0.0
    %647 = vmatpush.msra.mxu0 0.0
    %648 = vmatpush.msra.mxu0 0.0
    %649 = vmatpush.msra.mxu0 0.0
    %650 = vmatpush.msra.mxu0 0.0
    %651 = vmatpush.msra.mxu0 0.0
    %652 = vmatpush.msra.mxu0 0.0
    %653 = vmatpush.msra.mxu0 0.0
    %654 = vmatpush.msra.mxu0 0.0
    %655 = vmatpush.msra.mxu0 0.0
    %656 = vmatpush.msra.mxu0 0.0
    %657 = vmatpush.msra.mxu0 %v604
    %658 = vmatmul.f32.gmra.mxu0 %v620
    %v659 = vpop.f32.mrf.mxu0
    %v660 = vadd.f32 %v616, %v659
    %661 = vdwg.mxu0
    %662 = vmatpush.msra.mxu0 0.0
    %663 = vmatpush.msra.mxu0 0.0
    %664 = vmatpush.msra.mxu0 0.0
    %665 = vmatpush.msra.mxu0 0.0
    %666 = vmatpush.msra.mxu0 0.0
    %667 = vmatpush.msra.mxu0 0.0
    %668 = vmatpush.msra.mxu0 0.0
    %669 = vmatpush.msra.mxu0 0.0
    %670 = vmatpush.msra.mxu0 0.0
    %671 = vmatpush.msra.mxu0 0.0
    %672 = vmatpush.msra.mxu0 0.0
    %673 = vmatpush.msra.mxu0 0.0
    %674 = vmatpush.msra.mxu0 0.0
    %675 = vmatpush.msra.mxu0 0.0
    %676 = vmatpush.msra.mxu0 0.0
    %677 = vmatpush.msra.mxu0 %v605
    %678 = vmatmul.f32.gmra.mxu0 %v620
    %v679 = vpop.f32.mrf.mxu0
    %v680 = vadd.f32 %v616, %v679
    %681 = vdwg.mxu0
    %682 = vmatpush.msra.mxu0 0.0
    %683 = vmatpush.msra.mxu0 0.0
    %684 = vmatpush.msra.mxu0 0.0
    %685 = vmatpush.msra.mxu0 0.0
    %686 = vmatpush.msra.mxu0 0.0
    %687 = vmatpush.msra.mxu0 0.0
    %688 = vmatpush.msra.mxu0 0.0
    %689 = vmatpush.msra.mxu0 0.0
    %690 = vmatpush.msra.mxu0 0.0
    %691 = vmatpush.msra.mxu0 0.0
    %692 = vmatpush.msra.mxu0 0.0
    %693 = vmatpush.msra.mxu0 0.0
    %694 = vmatpush.msra.mxu0 0.0
    %695 = vmatpush.msra.mxu0 0.0
    %696 = vmatpush.msra.mxu0 0.0
    %697 = vmatpush.msra.mxu0 %v606
    %698 = vmatmul.f32.gmra.mxu0 %v620
    %v699 = vpop.f32.mrf.mxu0
    %v700 = vadd.f32 %v616, %v699
    %701 = vdwg.mxu0
    %702 = vmatpush.msra.mxu0 0.0
    %703 = vmatpush.msra.mxu0 0.0
    %704 = vmatpush.msra.mxu0 0.0
    %705 = vmatpush.msra.mxu0 0.0
    %706 = vmatpush.msra.mxu0 0.0
    %707 = vmatpush.msra.mxu0 0.0
    %708 = vmatpush.msra.mxu0 0.0
    %709 = vmatpush.msra.mxu0 0.0
    %710 = vmatpush.msra.mxu0 0.0
    %711 = vmatpush.msra.mxu0 0.0
    %712 = vmatpush.msra.mxu0 0.0
    %713 = vmatpush.msra.mxu0 0.0
    %714 = vmatpush.msra.mxu0 0.0
    %715 = vmatpush.msra.mxu0 0.0
    %716 = vmatpush.msra.mxu0 0.0
    %717 = vmatpush.msra.mxu0 %v607
    %718 = vmatmul.f32.gmra.mxu0 %v620
    %v719 = vpop.f32.mrf.mxu0
    %v720 = vadd.f32 %v616, %v719
    %721 = vdwg.mxu0
    %722 = vmatpush.msra.mxu0 0.0
    %723 = vmatpush.msra.mxu0 0.0
    %724 = vmatpush.msra.mxu0 0.0
    %725 = vmatpush.msra.mxu0 0.0
    %726 = vmatpush.msra.mxu0 0.0
    %727 = vmatpush.msra.mxu0 0.0
    %728 = vmatpush.msra.mxu0 0.0
    %729 = vmatpush.msra.mxu0 0.0
    %730 = vmatpush.msra.mxu0 0.0
    %731 = vmatpush.msra.mxu0 0.0
    %732 = vmatpush.msra.mxu0 0.0
    %733 = vmatpush.msra.mxu0 0.0
    %734 = vmatpush.msra.mxu0 0.0
    %735 = vmatpush.msra.mxu0 0.0
    %736 = vmatpush.msra.mxu0 0.0
    %737 = vmatpush.msra.mxu0 %v608
    %738 = vmatmul.f32.gmra.mxu0 %v620
    %v739 = vpop.f32.mrf.mxu0
    %v740 = vadd.f32 %v616, %v739
    %741 = vdwg.mxu0
    %742 = vmatpush.msra.mxu0 0.0
    %743 = vmatpush.msra.mxu0 0.0
    %744 = vmatpush.msra.mxu0 0.0
    %745 = vmatpush.msra.mxu0 0.0
    %746 = vmatpush.msra.mxu0 0.0
    %747 = vmatpush.msra.mxu0 0.0
    %748 = vmatpush.msra.mxu0 0.0
    %749 = vmatpush.msra.mxu0 0.0
    %750 = vmatpush.msra.mxu0 0.0
    %751 = vmatpush.msra.mxu0 0.0
    %752 = vmatpush.msra.mxu0 0.0
    %753 = vmatpush.msra.mxu0 0.0
    %754 = vmatpush.msra.mxu0 0.0
    %755 = vmatpush.msra.mxu0 0.0
    %756 = vmatpush.msra.mxu0 0.0
    %757 = vmatpush.msra.mxu0 %v609
    %758 = vmatmul.f32.gmra.mxu0 %v620
    %v759 = vpop.f32.mrf.mxu0
    %v760 = vadd.f32 %v616, %v759
    %761 = vdwg.mxu0
    %762 = vmatpush.msra.mxu0 0.0
    %763 = vmatpush.msra.mxu0 0.0
    %764 = vmatpush.msra.mxu0 0.0
    %765 = vmatpush.msra.mxu0 0.0
    %766 = vmatpush.msra.mxu0 0.0
    %767 = vmatpush.msra.mxu0 0.0
    %768 = vmatpush.msra.mxu0 0.0
    %769 = vmatpush.msra.mxu0 0.0
    %770 = vmatpush.msra.mxu0 0.0
    %771 = vmatpush.msra.mxu0 0.0
    %772 = vmatpush.msra.mxu0 0.0
    %773 = vmatpush.msra.mxu0 0.0
    %774 = vmatpush.msra.mxu0 0.0
    %775 = vmatpush.msra.mxu0 0.0
    %776 = vmatpush.msra.mxu0 0.0
    %777 = vmatpush.msra.mxu0 %v610
    %778 = vmatmul.f32.gmra.mxu0 %v620
    %v779 = vpop.f32.mrf.mxu0
    %v780 = vadd.f32 %v616, %v779
    %781 = vdwg.mxu0
    %v782 = vadd.f32 %v222, %v640
    %v783 = vadd.f32 %v242, %v660
    %v784 = vadd.f32 %v262, %v680
    %v785 = vadd.f32 %v282, %v700
    %v786 = vadd.f32 %v302, %v720
    %v787 = vadd.f32 %v322, %v740
    %v788 = vadd.f32 %v342, %v760
    %v789 = vadd.f32 %v362, %v780
    %v790 = vmul.f32 %v782, %v90
    %v791 = vmul.f32 %v783, %v91
    %v792 = vmul.f32 %v784, %v92
    %v793 = vmul.f32 %v785, %v93
    %v794 = vmul.f32 %v786, %v94
    %v795 = vmul.f32 %v787, %v95
    %v796 = vmul.f32 %v788, %v96
    %v797 = vmul.f32 %v789, %v97
    %798 = vrot.lane.b32.xlu0 %v790, 2
    %v799 = vpop.permute.xlu0 %798
    %800 = vrot.lane.b32.xlu0 %v791, 2
    %v801 = vpop.permute.xlu0 %800
    %802 = vrot.lane.b32.xlu0 %v792, 2
    %v803 = vpop.permute.xlu0 %802
    %804 = vrot.lane.b32.xlu0 %v793, 2
    %v805 = vpop.permute.xlu0 %804
    %806 = vrot.lane.b32.xlu0 %v794, 2
    %v807 = vpop.permute.xlu0 %806
    %808 = vrot.lane.b32.xlu0 %v795, 2
    %v809 = vpop.permute.xlu0 %808
    %810 = vrot.lane.b32.xlu0 %v796, 2
    %v811 = vpop.permute.xlu0 %810
    %812 = vrot.lane.b32.xlu0 %v797, 2
    %v813 = vpop.permute.xlu0 %812
    %vm814 = vcmp.lt.s32.totalorder %v381, 2
    %v815 = vsel %vm814, %v811, %v813
    %v816 = vsel %vm814, %v809, %v811
    %v817 = vsel %vm814, %v807, %v809
    %v818 = vsel %vm814, %v805, %v807
    %v819 = vsel %vm814, %v803, %v805
    %v820 = vsel %vm814, %v801, %v803
    %v821 = vsel %vm814, %v799, %v801
    %v822 = vsel %vm814, %v813, %v799
    %v823 = vsel %vm122, %v822, 0.0
    %v824 = vsel %vm123, %v821, 0.0
    %v825 = vsel %vm124, %v820, 0.0
    %v826 = vsel %vm125, %v819, 0.0
    %v827 = vsel %vm126, %v818, 0.0
    %v828 = vsel %vm127, %v817, 0.0
    %v829 = vsel %vm128, %v816, 0.0
    %v830 = vsel %vm129, %v815, 0.0
    %831 = vrot.lane.b32.xlu0 %v790, 126
    %v832 = vpop.permute.xlu0 %831
    %833 = vrot.lane.b32.xlu0 %v791, 126
    %v834 = vpop.permute.xlu0 %833
    %835 = vrot.lane.b32.xlu0 %v792, 126
    %v836 = vpop.permute.xlu0 %835
    %837 = vrot.lane.b32.xlu0 %v793, 126
    %v838 = vpop.permute.xlu0 %837
    %839 = vrot.lane.b32.xlu0 %v794, 126
    %v840 = vpop.permute.xlu0 %839
    %841 = vrot.lane.b32.xlu0 %v795, 126
    %v842 = vpop.permute.xlu0 %841
    %843 = vrot.lane.b32.xlu0 %v796, 126
    %v844 = vpop.permute.xlu0 %843
    %845 = vrot.lane.b32.xlu0 %v797, 126
    %v846 = vpop.permute.xlu0 %845
    %vm847 = vcmp.lt.s32.totalorder %v381, 126
    %v848 = vsel %vm847, %v844, %v846
    %v849 = vsel %vm847, %v842, %v844
    %v850 = vsel %vm847, %v840, %v842
    %v851 = vsel %vm847, %v838, %v840
    %v852 = vsel %vm847, %v836, %v838
    %v853 = vsel %vm847, %v834, %v836
    %v854 = vsel %vm847, %v832, %v834
    %v855 = vsel %vm847, %v846, %v832
    %v856 = vsel %vm130, %v854, 0.0
    %v857 = vsel %vm131, %v853, 0.0
    %v858 = vsel %vm132, %v852, 0.0
    %v859 = vsel %vm133, %v851, 0.0
    %v860 = vsel %vm134, %v850, 0.0
    %v861 = vsel %vm135, %v849, 0.0
    %v862 = vsel %vm136, %v848, 0.0
    %v863 = vsel %vm137, %v855, 0.0
    %s864 = scalar_lea.vmem %s7, 8
    %v865 = vld [vmem:[%s864] sm:$0xff]
    %s866 = scalar_lea.vmem %s8, 8
    %v867 = vld [vmem:[%s866] sm:$0xff]
    %869 = vset.pattern.permute.xlu0 0
    %870 = vperm.xlu0 %869, %v867
    %v871 = vpop.permute.xlu0 %870
    %v874 = vsel %vm439, %v865, 0
    %876 = vmatpush.msra.mxu0 0.0
    %877 = vmatpush.msra.mxu0 0.0
    %878 = vmatpush.msra.mxu0 0.0
    %879 = vmatpush.msra.mxu0 0.0
    %880 = vmatpush.msra.mxu0 0.0
    %881 = vmatpush.msra.mxu0 0.0
    %882 = vmatpush.msra.mxu0 0.0
    %883 = vmatpush.msra.mxu0 0.0
    %884 = vmatpush.msra.mxu0 0.0
    %885 = vmatpush.msra.mxu0 0.0
    %886 = vmatpush.msra.mxu0 0.0
    %887 = vmatpush.msra.mxu0 0.0
    %888 = vmatpush.msra.mxu0 0.0
    %889 = vmatpush.msra.mxu0 %v856
    %890 = vmatpush.msra.mxu0 %v790
    %891 = vmatpush.msra.mxu0 %v823
    %892 = vmatmul.f32.gmra.mxu0 %v874
    %v893 = vpop.f32.mrf.mxu0
    %v894 = vadd.f32 %v871, %v893
    %895 = vdwg.mxu0
    %896 = vmatpush.msra.mxu0 0.0
    %897 = vmatpush.msra.mxu0 0.0
    %898 = vmatpush.msra.mxu0 0.0
    %899 = vmatpush.msra.mxu0 0.0
    %900 = vmatpush.msra.mxu0 0.0
    %901 = vmatpush.msra.mxu0 0.0
    %902 = vmatpush.msra.mxu0 0.0
    %903 = vmatpush.msra.mxu0 0.0
    %904 = vmatpush.msra.mxu0 0.0
    %905 = vmatpush.msra.mxu0 0.0
    %906 = vmatpush.msra.mxu0 0.0
    %907 = vmatpush.msra.mxu0 0.0
    %908 = vmatpush.msra.mxu0 0.0
    %909 = vmatpush.msra.mxu0 %v857
    %910 = vmatpush.msra.mxu0 %v791
    %911 = vmatpush.msra.mxu0 %v824
    %912 = vmatmul.f32.gmra.mxu0 %v874
    %v913 = vpop.f32.mrf.mxu0
    %v914 = vadd.f32 %v871, %v913
    %915 = vdwg.mxu0
    %916 = vmatpush.msra.mxu0 0.0
    %917 = vmatpush.msra.mxu0 0.0
    %918 = vmatpush.msra.mxu0 0.0
    %919 = vmatpush.msra.mxu0 0.0
    %920 = vmatpush.msra.mxu0 0.0
    %921 = vmatpush.msra.mxu0 0.0
    %922 = vmatpush.msra.mxu0 0.0
    %923 = vmatpush.msra.mxu0 0.0
    %924 = vmatpush.msra.mxu0 0.0
    %925 = vmatpush.msra.mxu0 0.0
    %926 = vmatpush.msra.mxu0 0.0
    %927 = vmatpush.msra.mxu0 0.0
    %928 = vmatpush.msra.mxu0 0.0
    %929 = vmatpush.msra.mxu0 %v858
    %930 = vmatpush.msra.mxu0 %v792
    %931 = vmatpush.msra.mxu0 %v825
    %932 = vmatmul.f32.gmra.mxu0 %v874
    %v933 = vpop.f32.mrf.mxu0
    %v934 = vadd.f32 %v871, %v933
    %935 = vdwg.mxu0
    %936 = vmatpush.msra.mxu0 0.0
    %937 = vmatpush.msra.mxu0 0.0
    %938 = vmatpush.msra.mxu0 0.0
    %939 = vmatpush.msra.mxu0 0.0
    %940 = vmatpush.msra.mxu0 0.0
    %941 = vmatpush.msra.mxu0 0.0
    %942 = vmatpush.msra.mxu0 0.0
    %943 = vmatpush.msra.mxu0 0.0
    %944 = vmatpush.msra.mxu0 0.0
    %945 = vmatpush.msra.mxu0 0.0
    %946 = vmatpush.msra.mxu0 0.0
    %947 = vmatpush.msra.mxu0 0.0
    %948 = vmatpush.msra.mxu0 0.0
    %949 = vmatpush.msra.mxu0 %v859
    %950 = vmatpush.msra.mxu0 %v793
    %951 = vmatpush.msra.mxu0 %v826
    %952 = vmatmul.f32.gmra.mxu0 %v874
    %v953 = vpop.f32.mrf.mxu0
    %v954 = vadd.f32 %v871, %v953
    %955 = vdwg.mxu0
    %956 = vmatpush.msra.mxu0 0.0
    %957 = vmatpush.msra.mxu0 0.0
    %958 = vmatpush.msra.mxu0 0.0
    %959 = vmatpush.msra.mxu0 0.0
    %960 = vmatpush.msra.mxu0 0.0
    %961 = vmatpush.msra.mxu0 0.0
    %962 = vmatpush.msra.mxu0 0.0
    %963 = vmatpush.msra.mxu0 0.0
    %964 = vmatpush.msra.mxu0 0.0
    %965 = vmatpush.msra.mxu0 0.0
    %966 = vmatpush.msra.mxu0 0.0
    %967 = vmatpush.msra.mxu0 0.0
    %968 = vmatpush.msra.mxu0 0.0
    %969 = vmatpush.msra.mxu0 %v860
    %970 = vmatpush.msra.mxu0 %v794
    %971 = vmatpush.msra.mxu0 %v827
    %972 = vmatmul.f32.gmra.mxu0 %v874
    %v973 = vpop.f32.mrf.mxu0
    %v974 = vadd.f32 %v871, %v973
    %975 = vdwg.mxu0
    %976 = vmatpush.msra.mxu0 0.0
    %977 = vmatpush.msra.mxu0 0.0
    %978 = vmatpush.msra.mxu0 0.0
    %979 = vmatpush.msra.mxu0 0.0
    %980 = vmatpush.msra.mxu0 0.0
    %981 = vmatpush.msra.mxu0 0.0
    %982 = vmatpush.msra.mxu0 0.0
    %983 = vmatpush.msra.mxu0 0.0
    %984 = vmatpush.msra.mxu0 0.0
    %985 = vmatpush.msra.mxu0 0.0
    %986 = vmatpush.msra.mxu0 0.0
    %987 = vmatpush.msra.mxu0 0.0
    %988 = vmatpush.msra.mxu0 0.0
    %989 = vmatpush.msra.mxu0 %v861
    %990 = vmatpush.msra.mxu0 %v795
    %991 = vmatpush.msra.mxu0 %v828
    %992 = vmatmul.f32.gmra.mxu0 %v874
    %v993 = vpop.f32.mrf.mxu0
    %v994 = vadd.f32 %v871, %v993
    %995 = vdwg.mxu0
    %996 = vmatpush.msra.mxu0 0.0
    %997 = vmatpush.msra.mxu0 0.0
    %998 = vmatpush.msra.mxu0 0.0
    %999 = vmatpush.msra.mxu0 0.0
    %1000 = vmatpush.msra.mxu0 0.0
    %1001 = vmatpush.msra.mxu0 0.0
    %1002 = vmatpush.msra.mxu0 0.0
    %1003 = vmatpush.msra.mxu0 0.0
    %1004 = vmatpush.msra.mxu0 0.0
    %1005 = vmatpush.msra.mxu0 0.0
    %1006 = vmatpush.msra.mxu0 0.0
    %1007 = vmatpush.msra.mxu0 0.0
    %1008 = vmatpush.msra.mxu0 0.0
    %1009 = vmatpush.msra.mxu0 %v862
    %1010 = vmatpush.msra.mxu0 %v796
    %1011 = vmatpush.msra.mxu0 %v829
    %1012 = vmatmul.f32.gmra.mxu0 %v874
    %v1013 = vpop.f32.mrf.mxu0
    %v1014 = vadd.f32 %v871, %v1013
    %1015 = vdwg.mxu0
    %1016 = vmatpush.msra.mxu0 0.0
    %1017 = vmatpush.msra.mxu0 0.0
    %1018 = vmatpush.msra.mxu0 0.0
    %1019 = vmatpush.msra.mxu0 0.0
    %1020 = vmatpush.msra.mxu0 0.0
    %1021 = vmatpush.msra.mxu0 0.0
    %1022 = vmatpush.msra.mxu0 0.0
    %1023 = vmatpush.msra.mxu0 0.0
    %1024 = vmatpush.msra.mxu0 0.0
    %1025 = vmatpush.msra.mxu0 0.0
    %1026 = vmatpush.msra.mxu0 0.0
    %1027 = vmatpush.msra.mxu0 0.0
    %1028 = vmatpush.msra.mxu0 0.0
    %1029 = vmatpush.msra.mxu0 %v863
    %1030 = vmatpush.msra.mxu0 %v797
    %1031 = vmatpush.msra.mxu0 %v830
    %1032 = vmatmul.f32.gmra.mxu0 %v874
    %v1033 = vpop.f32.mrf.mxu0
    %v1034 = vadd.f32 %v871, %v1033
    %1035 = vdwg.mxu0
    %v1036 = vmax.f32 %v894, 0.0
    %v1037 = vmax.f32 %v914, 0.0
    %v1038 = vmax.f32 %v934, 0.0
    %v1039 = vmax.f32 %v954, 0.0
    %v1040 = vmax.f32 %v974, 0.0
    %v1041 = vmax.f32 %v994, 0.0
    %v1042 = vmax.f32 %v1014, 0.0
    %v1043 = vmax.f32 %v1034, 0.0
    %s1044 = scalar_lea.vmem %s9, 8
    %v1045 = vld [vmem:[%s1044] sm:$0xff]
    %s1046 = scalar_lea.vmem %s10, 8
    %v1047 = vld [vmem:[%s1046] sm:$0xff]
    %1049 = vset.pattern.permute.xlu0 0
    %1050 = vperm.xlu0 %1049, %v1047
    %v1051 = vpop.permute.xlu0 %1050
    %v1054 = vsel %vm618, %v1045, 0
    %1056 = vmatpush.msra.mxu0 0.0
    %1057 = vmatpush.msra.mxu0 0.0
    %1058 = vmatpush.msra.mxu0 0.0
    %1059 = vmatpush.msra.mxu0 0.0
    %1060 = vmatpush.msra.mxu0 0.0
    %1061 = vmatpush.msra.mxu0 0.0
    %1062 = vmatpush.msra.mxu0 0.0
    %1063 = vmatpush.msra.mxu0 0.0
    %1064 = vmatpush.msra.mxu0 0.0
    %1065 = vmatpush.msra.mxu0 0.0
    %1066 = vmatpush.msra.mxu0 0.0
    %1067 = vmatpush.msra.mxu0 0.0
    %1068 = vmatpush.msra.mxu0 0.0
    %1069 = vmatpush.msra.mxu0 0.0
    %1070 = vmatpush.msra.mxu0 0.0
    %1071 = vmatpush.msra.mxu0 %v1036
    %1072 = vmatmul.f32.gmra.mxu0 %v1054
    %v1073 = vpop.f32.mrf.mxu0
    %v1074 = vadd.f32 %v1051, %v1073
    %1075 = vdwg.mxu0
    %1076 = vmatpush.msra.mxu0 0.0
    %1077 = vmatpush.msra.mxu0 0.0
    %1078 = vmatpush.msra.mxu0 0.0
    %1079 = vmatpush.msra.mxu0 0.0
    %1080 = vmatpush.msra.mxu0 0.0
    %1081 = vmatpush.msra.mxu0 0.0
    %1082 = vmatpush.msra.mxu0 0.0
    %1083 = vmatpush.msra.mxu0 0.0
    %1084 = vmatpush.msra.mxu0 0.0
    %1085 = vmatpush.msra.mxu0 0.0
    %1086 = vmatpush.msra.mxu0 0.0
    %1087 = vmatpush.msra.mxu0 0.0
    %1088 = vmatpush.msra.mxu0 0.0
    %1089 = vmatpush.msra.mxu0 0.0
    %1090 = vmatpush.msra.mxu0 0.0
    %1091 = vmatpush.msra.mxu0 %v1037
    %1092 = vmatmul.f32.gmra.mxu0 %v1054
    %v1093 = vpop.f32.mrf.mxu0
    %v1094 = vadd.f32 %v1051, %v1093
    %1095 = vdwg.mxu0
    %1096 = vmatpush.msra.mxu0 0.0
    %1097 = vmatpush.msra.mxu0 0.0
    %1098 = vmatpush.msra.mxu0 0.0
    %1099 = vmatpush.msra.mxu0 0.0
    %1100 = vmatpush.msra.mxu0 0.0
    %1101 = vmatpush.msra.mxu0 0.0
    %1102 = vmatpush.msra.mxu0 0.0
    %1103 = vmatpush.msra.mxu0 0.0
    %1104 = vmatpush.msra.mxu0 0.0
    %1105 = vmatpush.msra.mxu0 0.0
    %1106 = vmatpush.msra.mxu0 0.0
    %1107 = vmatpush.msra.mxu0 0.0
    %1108 = vmatpush.msra.mxu0 0.0
    %1109 = vmatpush.msra.mxu0 0.0
    %1110 = vmatpush.msra.mxu0 0.0
    %1111 = vmatpush.msra.mxu0 %v1038
    %1112 = vmatmul.f32.gmra.mxu0 %v1054
    %v1113 = vpop.f32.mrf.mxu0
    %v1114 = vadd.f32 %v1051, %v1113
    %1115 = vdwg.mxu0
    %1116 = vmatpush.msra.mxu0 0.0
    %1117 = vmatpush.msra.mxu0 0.0
    %1118 = vmatpush.msra.mxu0 0.0
    %1119 = vmatpush.msra.mxu0 0.0
    %1120 = vmatpush.msra.mxu0 0.0
    %1121 = vmatpush.msra.mxu0 0.0
    %1122 = vmatpush.msra.mxu0 0.0
    %1123 = vmatpush.msra.mxu0 0.0
    %1124 = vmatpush.msra.mxu0 0.0
    %1125 = vmatpush.msra.mxu0 0.0
    %1126 = vmatpush.msra.mxu0 0.0
    %1127 = vmatpush.msra.mxu0 0.0
    %1128 = vmatpush.msra.mxu0 0.0
    %1129 = vmatpush.msra.mxu0 0.0
    %1130 = vmatpush.msra.mxu0 0.0
    %1131 = vmatpush.msra.mxu0 %v1039
    %1132 = vmatmul.f32.gmra.mxu0 %v1054
    %v1133 = vpop.f32.mrf.mxu0
    %v1134 = vadd.f32 %v1051, %v1133
    %1135 = vdwg.mxu0
    %1136 = vmatpush.msra.mxu0 0.0
    %1137 = vmatpush.msra.mxu0 0.0
    %1138 = vmatpush.msra.mxu0 0.0
    %1139 = vmatpush.msra.mxu0 0.0
    %1140 = vmatpush.msra.mxu0 0.0
    %1141 = vmatpush.msra.mxu0 0.0
    %1142 = vmatpush.msra.mxu0 0.0
    %1143 = vmatpush.msra.mxu0 0.0
    %1144 = vmatpush.msra.mxu0 0.0
    %1145 = vmatpush.msra.mxu0 0.0
    %1146 = vmatpush.msra.mxu0 0.0
    %1147 = vmatpush.msra.mxu0 0.0
    %1148 = vmatpush.msra.mxu0 0.0
    %1149 = vmatpush.msra.mxu0 0.0
    %1150 = vmatpush.msra.mxu0 0.0
    %1151 = vmatpush.msra.mxu0 %v1040
    %1152 = vmatmul.f32.gmra.mxu0 %v1054
    %v1153 = vpop.f32.mrf.mxu0
    %v1154 = vadd.f32 %v1051, %v1153
    %1155 = vdwg.mxu0
    %1156 = vmatpush.msra.mxu0 0.0
    %1157 = vmatpush.msra.mxu0 0.0
    %1158 = vmatpush.msra.mxu0 0.0
    %1159 = vmatpush.msra.mxu0 0.0
    %1160 = vmatpush.msra.mxu0 0.0
    %1161 = vmatpush.msra.mxu0 0.0
    %1162 = vmatpush.msra.mxu0 0.0
    %1163 = vmatpush.msra.mxu0 0.0
    %1164 = vmatpush.msra.mxu0 0.0
    %1165 = vmatpush.msra.mxu0 0.0
    %1166 = vmatpush.msra.mxu0 0.0
    %1167 = vmatpush.msra.mxu0 0.0
    %1168 = vmatpush.msra.mxu0 0.0
    %1169 = vmatpush.msra.mxu0 0.0
    %1170 = vmatpush.msra.mxu0 0.0
    %1171 = vmatpush.msra.mxu0 %v1041
    %1172 = vmatmul.f32.gmra.mxu0 %v1054
    %v1173 = vpop.f32.mrf.mxu0
    %v1174 = vadd.f32 %v1051, %v1173
    %1175 = vdwg.mxu0
    %1176 = vmatpush.msra.mxu0 0.0
    %1177 = vmatpush.msra.mxu0 0.0
    %1178 = vmatpush.msra.mxu0 0.0
    %1179 = vmatpush.msra.mxu0 0.0
    %1180 = vmatpush.msra.mxu0 0.0
    %1181 = vmatpush.msra.mxu0 0.0
    %1182 = vmatpush.msra.mxu0 0.0
    %1183 = vmatpush.msra.mxu0 0.0
    %1184 = vmatpush.msra.mxu0 0.0
    %1185 = vmatpush.msra.mxu0 0.0
    %1186 = vmatpush.msra.mxu0 0.0
    %1187 = vmatpush.msra.mxu0 0.0
    %1188 = vmatpush.msra.mxu0 0.0
    %1189 = vmatpush.msra.mxu0 0.0
    %1190 = vmatpush.msra.mxu0 0.0
    %1191 = vmatpush.msra.mxu0 %v1042
    %1192 = vmatmul.f32.gmra.mxu0 %v1054
    %v1193 = vpop.f32.mrf.mxu0
    %v1194 = vadd.f32 %v1051, %v1193
    %1195 = vdwg.mxu0
    %1196 = vmatpush.msra.mxu0 0.0
    %1197 = vmatpush.msra.mxu0 0.0
    %1198 = vmatpush.msra.mxu0 0.0
    %1199 = vmatpush.msra.mxu0 0.0
    %1200 = vmatpush.msra.mxu0 0.0
    %1201 = vmatpush.msra.mxu0 0.0
    %1202 = vmatpush.msra.mxu0 0.0
    %1203 = vmatpush.msra.mxu0 0.0
    %1204 = vmatpush.msra.mxu0 0.0
    %1205 = vmatpush.msra.mxu0 0.0
    %1206 = vmatpush.msra.mxu0 0.0
    %1207 = vmatpush.msra.mxu0 0.0
    %1208 = vmatpush.msra.mxu0 0.0
    %1209 = vmatpush.msra.mxu0 0.0
    %1210 = vmatpush.msra.mxu0 0.0
    %1211 = vmatpush.msra.mxu0 %v1043
    %1212 = vmatmul.f32.gmra.mxu0 %v1054
    %v1213 = vpop.f32.mrf.mxu0
    %v1214 = vadd.f32 %v1051, %v1213
    %1215 = vdwg.mxu0
    %v1216 = vadd.f32 %v790, %v1074
    %v1217 = vadd.f32 %v791, %v1094
    %v1218 = vadd.f32 %v792, %v1114
    %v1219 = vadd.f32 %v793, %v1134
    %v1220 = vadd.f32 %v794, %v1154
    %v1221 = vadd.f32 %v795, %v1174
    %v1222 = vadd.f32 %v796, %v1194
    %v1223 = vadd.f32 %v797, %v1214
    %v1224 = vmul.f32 %v1216, %v90
    %v1225 = vmul.f32 %v1217, %v91
    %v1226 = vmul.f32 %v1218, %v92
    %v1227 = vmul.f32 %v1219, %v93
    %v1228 = vmul.f32 %v1220, %v94
    %v1229 = vmul.f32 %v1221, %v95
    %v1230 = vmul.f32 %v1222, %v96
    %v1231 = vmul.f32 %v1223, %v97
    %1232 = vrot.lane.b32.xlu0 %v1224, 4
    %v1233 = vpop.permute.xlu0 %1232
    %1234 = vrot.lane.b32.xlu0 %v1225, 4
    %v1235 = vpop.permute.xlu0 %1234
    %1236 = vrot.lane.b32.xlu0 %v1226, 4
    %v1237 = vpop.permute.xlu0 %1236
    %1238 = vrot.lane.b32.xlu0 %v1227, 4
    %v1239 = vpop.permute.xlu0 %1238
    %1240 = vrot.lane.b32.xlu0 %v1228, 4
    %v1241 = vpop.permute.xlu0 %1240
    %1242 = vrot.lane.b32.xlu0 %v1229, 4
    %v1243 = vpop.permute.xlu0 %1242
    %1244 = vrot.lane.b32.xlu0 %v1230, 4
    %v1245 = vpop.permute.xlu0 %1244
    %1246 = vrot.lane.b32.xlu0 %v1231, 4
    %v1247 = vpop.permute.xlu0 %1246
    %vm1248 = vcmp.lt.s32.totalorder %v381, 4
    %v1249 = vsel %vm1248, %v1245, %v1247
    %v1250 = vsel %vm1248, %v1243, %v1245
    %v1251 = vsel %vm1248, %v1241, %v1243
    %v1252 = vsel %vm1248, %v1239, %v1241
    %v1253 = vsel %vm1248, %v1237, %v1239
    %v1254 = vsel %vm1248, %v1235, %v1237
    %v1255 = vsel %vm1248, %v1233, %v1235
    %v1256 = vsel %vm1248, %v1247, %v1233
    %v1257 = vsel %vm138, %v1256, 0.0
    %v1258 = vsel %vm139, %v1255, 0.0
    %v1259 = vsel %vm140, %v1254, 0.0
    %v1260 = vsel %vm141, %v1253, 0.0
    %v1261 = vsel %vm142, %v1252, 0.0
    %v1262 = vsel %vm143, %v1251, 0.0
    %v1263 = vsel %vm144, %v1250, 0.0
    %v1264 = vsel %vm145, %v1249, 0.0
    %1265 = vrot.lane.b32.xlu0 %v1224, 124
    %v1266 = vpop.permute.xlu0 %1265
    %1267 = vrot.lane.b32.xlu0 %v1225, 124
    %v1268 = vpop.permute.xlu0 %1267
    %1269 = vrot.lane.b32.xlu0 %v1226, 124
    %v1270 = vpop.permute.xlu0 %1269
    %1271 = vrot.lane.b32.xlu0 %v1227, 124
    %v1272 = vpop.permute.xlu0 %1271
    %1273 = vrot.lane.b32.xlu0 %v1228, 124
    %v1274 = vpop.permute.xlu0 %1273
    %1275 = vrot.lane.b32.xlu0 %v1229, 124
    %v1276 = vpop.permute.xlu0 %1275
    %1277 = vrot.lane.b32.xlu0 %v1230, 124
    %v1278 = vpop.permute.xlu0 %1277
    %1279 = vrot.lane.b32.xlu0 %v1231, 124
    %v1280 = vpop.permute.xlu0 %1279
    %vm1281 = vcmp.lt.s32.totalorder %v381, 124
    %v1282 = vsel %vm1281, %v1278, %v1280
    %v1283 = vsel %vm1281, %v1276, %v1278
    %v1284 = vsel %vm1281, %v1274, %v1276
    %v1285 = vsel %vm1281, %v1272, %v1274
    %v1286 = vsel %vm1281, %v1270, %v1272
    %v1287 = vsel %vm1281, %v1268, %v1270
    %v1288 = vsel %vm1281, %v1266, %v1268
    %v1289 = vsel %vm1281, %v1280, %v1266
    %v1290 = vsel %vm146, %v1288, 0.0
    %v1291 = vsel %vm147, %v1287, 0.0
    %v1292 = vsel %vm148, %v1286, 0.0
    %v1293 = vsel %vm149, %v1285, 0.0
    %v1294 = vsel %vm150, %v1284, 0.0
    %v1295 = vsel %vm151, %v1283, 0.0
    %v1296 = vsel %vm152, %v1282, 0.0
    %v1297 = vsel %vm153, %v1289, 0.0
    %s1298 = scalar_lea.vmem %s7, 16
    %v1299 = vld [vmem:[%s1298] sm:$0xff]
    %s1300 = scalar_lea.vmem %s8, 16
    %v1301 = vld [vmem:[%s1300] sm:$0xff]
    %1303 = vset.pattern.permute.xlu0 0
    %1304 = vperm.xlu0 %1303, %v1301
    %v1305 = vpop.permute.xlu0 %1304
    %v1308 = vsel %vm439, %v1299, 0
    %1310 = vmatpush.msra.mxu0 0.0
    %1311 = vmatpush.msra.mxu0 0.0
    %1312 = vmatpush.msra.mxu0 0.0
    %1313 = vmatpush.msra.mxu0 0.0
    %1314 = vmatpush.msra.mxu0 0.0
    %1315 = vmatpush.msra.mxu0 0.0
    %1316 = vmatpush.msra.mxu0 0.0
    %1317 = vmatpush.msra.mxu0 0.0
    %1318 = vmatpush.msra.mxu0 0.0
    %1319 = vmatpush.msra.mxu0 0.0
    %1320 = vmatpush.msra.mxu0 0.0
    %1321 = vmatpush.msra.mxu0 0.0
    %1322 = vmatpush.msra.mxu0 0.0
    %1323 = vmatpush.msra.mxu0 %v1290
    %1324 = vmatpush.msra.mxu0 %v1224
    %1325 = vmatpush.msra.mxu0 %v1257
    %1326 = vmatmul.f32.gmra.mxu0 %v1308
    %v1327 = vpop.f32.mrf.mxu0
    %v1328 = vadd.f32 %v1305, %v1327
    %1329 = vdwg.mxu0
    %1330 = vmatpush.msra.mxu0 0.0
    %1331 = vmatpush.msra.mxu0 0.0
    %1332 = vmatpush.msra.mxu0 0.0
    %1333 = vmatpush.msra.mxu0 0.0
    %1334 = vmatpush.msra.mxu0 0.0
    %1335 = vmatpush.msra.mxu0 0.0
    %1336 = vmatpush.msra.mxu0 0.0
    %1337 = vmatpush.msra.mxu0 0.0
    %1338 = vmatpush.msra.mxu0 0.0
    %1339 = vmatpush.msra.mxu0 0.0
    %1340 = vmatpush.msra.mxu0 0.0
    %1341 = vmatpush.msra.mxu0 0.0
    %1342 = vmatpush.msra.mxu0 0.0
    %1343 = vmatpush.msra.mxu0 %v1291
    %1344 = vmatpush.msra.mxu0 %v1225
    %1345 = vmatpush.msra.mxu0 %v1258
    %1346 = vmatmul.f32.gmra.mxu0 %v1308
    %v1347 = vpop.f32.mrf.mxu0
    %v1348 = vadd.f32 %v1305, %v1347
    %1349 = vdwg.mxu0
    %1350 = vmatpush.msra.mxu0 0.0
    %1351 = vmatpush.msra.mxu0 0.0
    %1352 = vmatpush.msra.mxu0 0.0
    %1353 = vmatpush.msra.mxu0 0.0
    %1354 = vmatpush.msra.mxu0 0.0
    %1355 = vmatpush.msra.mxu0 0.0
    %1356 = vmatpush.msra.mxu0 0.0
    %1357 = vmatpush.msra.mxu0 0.0
    %1358 = vmatpush.msra.mxu0 0.0
    %1359 = vmatpush.msra.mxu0 0.0
    %1360 = vmatpush.msra.mxu0 0.0
    %1361 = vmatpush.msra.mxu0 0.0
    %1362 = vmatpush.msra.mxu0 0.0
    %1363 = vmatpush.msra.mxu0 %v1292
    %1364 = vmatpush.msra.mxu0 %v1226
    %1365 = vmatpush.msra.mxu0 %v1259
    %1366 = vmatmul.f32.gmra.mxu0 %v1308
    %v1367 = vpop.f32.mrf.mxu0
    %v1368 = vadd.f32 %v1305, %v1367
    %1369 = vdwg.mxu0
    %1370 = vmatpush.msra.mxu0 0.0
    %1371 = vmatpush.msra.mxu0 0.0
    %1372 = vmatpush.msra.mxu0 0.0
    %1373 = vmatpush.msra.mxu0 0.0
    %1374 = vmatpush.msra.mxu0 0.0
    %1375 = vmatpush.msra.mxu0 0.0
    %1376 = vmatpush.msra.mxu0 0.0
    %1377 = vmatpush.msra.mxu0 0.0
    %1378 = vmatpush.msra.mxu0 0.0
    %1379 = vmatpush.msra.mxu0 0.0
    %1380 = vmatpush.msra.mxu0 0.0
    %1381 = vmatpush.msra.mxu0 0.0
    %1382 = vmatpush.msra.mxu0 0.0
    %1383 = vmatpush.msra.mxu0 %v1293
    %1384 = vmatpush.msra.mxu0 %v1227
    %1385 = vmatpush.msra.mxu0 %v1260
    %1386 = vmatmul.f32.gmra.mxu0 %v1308
    %v1387 = vpop.f32.mrf.mxu0
    %v1388 = vadd.f32 %v1305, %v1387
    %1389 = vdwg.mxu0
    %1390 = vmatpush.msra.mxu0 0.0
    %1391 = vmatpush.msra.mxu0 0.0
    %1392 = vmatpush.msra.mxu0 0.0
    %1393 = vmatpush.msra.mxu0 0.0
    %1394 = vmatpush.msra.mxu0 0.0
    %1395 = vmatpush.msra.mxu0 0.0
    %1396 = vmatpush.msra.mxu0 0.0
    %1397 = vmatpush.msra.mxu0 0.0
    %1398 = vmatpush.msra.mxu0 0.0
    %1399 = vmatpush.msra.mxu0 0.0
    %1400 = vmatpush.msra.mxu0 0.0
    %1401 = vmatpush.msra.mxu0 0.0
    %1402 = vmatpush.msra.mxu0 0.0
    %1403 = vmatpush.msra.mxu0 %v1294
    %1404 = vmatpush.msra.mxu0 %v1228
    %1405 = vmatpush.msra.mxu0 %v1261
    %1406 = vmatmul.f32.gmra.mxu0 %v1308
    %v1407 = vpop.f32.mrf.mxu0
    %v1408 = vadd.f32 %v1305, %v1407
    %1409 = vdwg.mxu0
    %1410 = vmatpush.msra.mxu0 0.0
    %1411 = vmatpush.msra.mxu0 0.0
    %1412 = vmatpush.msra.mxu0 0.0
    %1413 = vmatpush.msra.mxu0 0.0
    %1414 = vmatpush.msra.mxu0 0.0
    %1415 = vmatpush.msra.mxu0 0.0
    %1416 = vmatpush.msra.mxu0 0.0
    %1417 = vmatpush.msra.mxu0 0.0
    %1418 = vmatpush.msra.mxu0 0.0
    %1419 = vmatpush.msra.mxu0 0.0
    %1420 = vmatpush.msra.mxu0 0.0
    %1421 = vmatpush.msra.mxu0 0.0
    %1422 = vmatpush.msra.mxu0 0.0
    %1423 = vmatpush.msra.mxu0 %v1295
    %1424 = vmatpush.msra.mxu0 %v1229
    %1425 = vmatpush.msra.mxu0 %v1262
    %1426 = vmatmul.f32.gmra.mxu0 %v1308
    %v1427 = vpop.f32.mrf.mxu0
    %v1428 = vadd.f32 %v1305, %v1427
    %1429 = vdwg.mxu0
    %1430 = vmatpush.msra.mxu0 0.0
    %1431 = vmatpush.msra.mxu0 0.0
    %1432 = vmatpush.msra.mxu0 0.0
    %1433 = vmatpush.msra.mxu0 0.0
    %1434 = vmatpush.msra.mxu0 0.0
    %1435 = vmatpush.msra.mxu0 0.0
    %1436 = vmatpush.msra.mxu0 0.0
    %1437 = vmatpush.msra.mxu0 0.0
    %1438 = vmatpush.msra.mxu0 0.0
    %1439 = vmatpush.msra.mxu0 0.0
    %1440 = vmatpush.msra.mxu0 0.0
    %1441 = vmatpush.msra.mxu0 0.0
    %1442 = vmatpush.msra.mxu0 0.0
    %1443 = vmatpush.msra.mxu0 %v1296
    %1444 = vmatpush.msra.mxu0 %v1230
    %1445 = vmatpush.msra.mxu0 %v1263
    %1446 = vmatmul.f32.gmra.mxu0 %v1308
    %v1447 = vpop.f32.mrf.mxu0
    %v1448 = vadd.f32 %v1305, %v1447
    %1449 = vdwg.mxu0
    %1450 = vmatpush.msra.mxu0 0.0
    %1451 = vmatpush.msra.mxu0 0.0
    %1452 = vmatpush.msra.mxu0 0.0
    %1453 = vmatpush.msra.mxu0 0.0
    %1454 = vmatpush.msra.mxu0 0.0
    %1455 = vmatpush.msra.mxu0 0.0
    %1456 = vmatpush.msra.mxu0 0.0
    %1457 = vmatpush.msra.mxu0 0.0
    %1458 = vmatpush.msra.mxu0 0.0
    %1459 = vmatpush.msra.mxu0 0.0
    %1460 = vmatpush.msra.mxu0 0.0
    %1461 = vmatpush.msra.mxu0 0.0
    %1462 = vmatpush.msra.mxu0 0.0
    %1463 = vmatpush.msra.mxu0 %v1297
    %1464 = vmatpush.msra.mxu0 %v1231
    %1465 = vmatpush.msra.mxu0 %v1264
    %1466 = vmatmul.f32.gmra.mxu0 %v1308
    %v1467 = vpop.f32.mrf.mxu0
    %v1468 = vadd.f32 %v1305, %v1467
    %1469 = vdwg.mxu0
    %v1470 = vmax.f32 %v1328, 0.0
    %v1471 = vmax.f32 %v1348, 0.0
    %v1472 = vmax.f32 %v1368, 0.0
    %v1473 = vmax.f32 %v1388, 0.0
    %v1474 = vmax.f32 %v1408, 0.0
    %v1475 = vmax.f32 %v1428, 0.0
    %v1476 = vmax.f32 %v1448, 0.0
    %v1477 = vmax.f32 %v1468, 0.0
    %s1478 = scalar_lea.vmem %s9, 16
    %v1479 = vld [vmem:[%s1478] sm:$0xff]
    %s1480 = scalar_lea.vmem %s10, 16
    %v1481 = vld [vmem:[%s1480] sm:$0xff]
    %1483 = vset.pattern.permute.xlu0 0
    %1484 = vperm.xlu0 %1483, %v1481
    %v1485 = vpop.permute.xlu0 %1484
    %v1488 = vsel %vm618, %v1479, 0
    %1490 = vmatpush.msra.mxu0 0.0
    %1491 = vmatpush.msra.mxu0 0.0
    %1492 = vmatpush.msra.mxu0 0.0
    %1493 = vmatpush.msra.mxu0 0.0
    %1494 = vmatpush.msra.mxu0 0.0
    %1495 = vmatpush.msra.mxu0 0.0
    %1496 = vmatpush.msra.mxu0 0.0
    %1497 = vmatpush.msra.mxu0 0.0
    %1498 = vmatpush.msra.mxu0 0.0
    %1499 = vmatpush.msra.mxu0 0.0
    %1500 = vmatpush.msra.mxu0 0.0
    %1501 = vmatpush.msra.mxu0 0.0
    %1502 = vmatpush.msra.mxu0 0.0
    %1503 = vmatpush.msra.mxu0 0.0
    %1504 = vmatpush.msra.mxu0 0.0
    %1505 = vmatpush.msra.mxu0 %v1470
    %1506 = vmatmul.f32.gmra.mxu0 %v1488
    %v1507 = vpop.f32.mrf.mxu0
    %v1508 = vadd.f32 %v1485, %v1507
    %1509 = vdwg.mxu0
    %1510 = vmatpush.msra.mxu0 0.0
    %1511 = vmatpush.msra.mxu0 0.0
    %1512 = vmatpush.msra.mxu0 0.0
    %1513 = vmatpush.msra.mxu0 0.0
    %1514 = vmatpush.msra.mxu0 0.0
    %1515 = vmatpush.msra.mxu0 0.0
    %1516 = vmatpush.msra.mxu0 0.0
    %1517 = vmatpush.msra.mxu0 0.0
    %1518 = vmatpush.msra.mxu0 0.0
    %1519 = vmatpush.msra.mxu0 0.0
    %1520 = vmatpush.msra.mxu0 0.0
    %1521 = vmatpush.msra.mxu0 0.0
    %1522 = vmatpush.msra.mxu0 0.0
    %1523 = vmatpush.msra.mxu0 0.0
    %1524 = vmatpush.msra.mxu0 0.0
    %1525 = vmatpush.msra.mxu0 %v1471
    %1526 = vmatmul.f32.gmra.mxu0 %v1488
    %v1527 = vpop.f32.mrf.mxu0
    %v1528 = vadd.f32 %v1485, %v1527
    %1529 = vdwg.mxu0
    %1530 = vmatpush.msra.mxu0 0.0
    %1531 = vmatpush.msra.mxu0 0.0
    %1532 = vmatpush.msra.mxu0 0.0
    %1533 = vmatpush.msra.mxu0 0.0
    %1534 = vmatpush.msra.mxu0 0.0
    %1535 = vmatpush.msra.mxu0 0.0
    %1536 = vmatpush.msra.mxu0 0.0
    %1537 = vmatpush.msra.mxu0 0.0
    %1538 = vmatpush.msra.mxu0 0.0
    %1539 = vmatpush.msra.mxu0 0.0
    %1540 = vmatpush.msra.mxu0 0.0
    %1541 = vmatpush.msra.mxu0 0.0
    %1542 = vmatpush.msra.mxu0 0.0
    %1543 = vmatpush.msra.mxu0 0.0
    %1544 = vmatpush.msra.mxu0 0.0
    %1545 = vmatpush.msra.mxu0 %v1472
    %1546 = vmatmul.f32.gmra.mxu0 %v1488
    %v1547 = vpop.f32.mrf.mxu0
    %v1548 = vadd.f32 %v1485, %v1547
    %1549 = vdwg.mxu0
    %1550 = vmatpush.msra.mxu0 0.0
    %1551 = vmatpush.msra.mxu0 0.0
    %1552 = vmatpush.msra.mxu0 0.0
    %1553 = vmatpush.msra.mxu0 0.0
    %1554 = vmatpush.msra.mxu0 0.0
    %1555 = vmatpush.msra.mxu0 0.0
    %1556 = vmatpush.msra.mxu0 0.0
    %1557 = vmatpush.msra.mxu0 0.0
    %1558 = vmatpush.msra.mxu0 0.0
    %1559 = vmatpush.msra.mxu0 0.0
    %1560 = vmatpush.msra.mxu0 0.0
    %1561 = vmatpush.msra.mxu0 0.0
    %1562 = vmatpush.msra.mxu0 0.0
    %1563 = vmatpush.msra.mxu0 0.0
    %1564 = vmatpush.msra.mxu0 0.0
    %1565 = vmatpush.msra.mxu0 %v1473
    %1566 = vmatmul.f32.gmra.mxu0 %v1488
    %v1567 = vpop.f32.mrf.mxu0
    %v1568 = vadd.f32 %v1485, %v1567
    %1569 = vdwg.mxu0
    %1570 = vmatpush.msra.mxu0 0.0
    %1571 = vmatpush.msra.mxu0 0.0
    %1572 = vmatpush.msra.mxu0 0.0
    %1573 = vmatpush.msra.mxu0 0.0
    %1574 = vmatpush.msra.mxu0 0.0
    %1575 = vmatpush.msra.mxu0 0.0
    %1576 = vmatpush.msra.mxu0 0.0
    %1577 = vmatpush.msra.mxu0 0.0
    %1578 = vmatpush.msra.mxu0 0.0
    %1579 = vmatpush.msra.mxu0 0.0
    %1580 = vmatpush.msra.mxu0 0.0
    %1581 = vmatpush.msra.mxu0 0.0
    %1582 = vmatpush.msra.mxu0 0.0
    %1583 = vmatpush.msra.mxu0 0.0
    %1584 = vmatpush.msra.mxu0 0.0
    %1585 = vmatpush.msra.mxu0 %v1474
    %1586 = vmatmul.f32.gmra.mxu0 %v1488
    %v1587 = vpop.f32.mrf.mxu0
    %v1588 = vadd.f32 %v1485, %v1587
    %1589 = vdwg.mxu0
    %1590 = vmatpush.msra.mxu0 0.0
    %1591 = vmatpush.msra.mxu0 0.0
    %1592 = vmatpush.msra.mxu0 0.0
    %1593 = vmatpush.msra.mxu0 0.0
    %1594 = vmatpush.msra.mxu0 0.0
    %1595 = vmatpush.msra.mxu0 0.0
    %1596 = vmatpush.msra.mxu0 0.0
    %1597 = vmatpush.msra.mxu0 0.0
    %1598 = vmatpush.msra.mxu0 0.0
    %1599 = vmatpush.msra.mxu0 0.0
    %1600 = vmatpush.msra.mxu0 0.0
    %1601 = vmatpush.msra.mxu0 0.0
    %1602 = vmatpush.msra.mxu0 0.0
    %1603 = vmatpush.msra.mxu0 0.0
    %1604 = vmatpush.msra.mxu0 0.0
    %1605 = vmatpush.msra.mxu0 %v1475
    %1606 = vmatmul.f32.gmra.mxu0 %v1488
    %v1607 = vpop.f32.mrf.mxu0
    %v1608 = vadd.f32 %v1485, %v1607
    %1609 = vdwg.mxu0
    %1610 = vmatpush.msra.mxu0 0.0
    %1611 = vmatpush.msra.mxu0 0.0
    %1612 = vmatpush.msra.mxu0 0.0
    %1613 = vmatpush.msra.mxu0 0.0
    %1614 = vmatpush.msra.mxu0 0.0
    %1615 = vmatpush.msra.mxu0 0.0
    %1616 = vmatpush.msra.mxu0 0.0
    %1617 = vmatpush.msra.mxu0 0.0
    %1618 = vmatpush.msra.mxu0 0.0
    %1619 = vmatpush.msra.mxu0 0.0
    %1620 = vmatpush.msra.mxu0 0.0
    %1621 = vmatpush.msra.mxu0 0.0
    %1622 = vmatpush.msra.mxu0 0.0
    %1623 = vmatpush.msra.mxu0 0.0
    %1624 = vmatpush.msra.mxu0 0.0
    %1625 = vmatpush.msra.mxu0 %v1476
    %1626 = vmatmul.f32.gmra.mxu0 %v1488
    %v1627 = vpop.f32.mrf.mxu0
    %v1628 = vadd.f32 %v1485, %v1627
    %1629 = vdwg.mxu0
    %1630 = vmatpush.msra.mxu0 0.0
    %1631 = vmatpush.msra.mxu0 0.0
    %1632 = vmatpush.msra.mxu0 0.0
    %1633 = vmatpush.msra.mxu0 0.0
    %1634 = vmatpush.msra.mxu0 0.0
    %1635 = vmatpush.msra.mxu0 0.0
    %1636 = vmatpush.msra.mxu0 0.0
    %1637 = vmatpush.msra.mxu0 0.0
    %1638 = vmatpush.msra.mxu0 0.0
    %1639 = vmatpush.msra.mxu0 0.0
    %1640 = vmatpush.msra.mxu0 0.0
    %1641 = vmatpush.msra.mxu0 0.0
    %1642 = vmatpush.msra.mxu0 0.0
    %1643 = vmatpush.msra.mxu0 0.0
    %1644 = vmatpush.msra.mxu0 0.0
    %1645 = vmatpush.msra.mxu0 %v1477
    %1646 = vmatmul.f32.gmra.mxu0 %v1488
    %v1647 = vpop.f32.mrf.mxu0
    %v1648 = vadd.f32 %v1485, %v1647
    %1649 = vdwg.mxu0
    %v1650 = vadd.f32 %v1224, %v1508
    %v1651 = vadd.f32 %v1225, %v1528
    %v1652 = vadd.f32 %v1226, %v1548
    %v1653 = vadd.f32 %v1227, %v1568
    %v1654 = vadd.f32 %v1228, %v1588
    %v1655 = vadd.f32 %v1229, %v1608
    %v1656 = vadd.f32 %v1230, %v1628
    %v1657 = vadd.f32 %v1231, %v1648
    %v1658 = vmul.f32 %v1650, %v90
    %v1659 = vmul.f32 %v1651, %v91
    %v1660 = vmul.f32 %v1652, %v92
    %v1661 = vmul.f32 %v1653, %v93
    %v1662 = vmul.f32 %v1654, %v94
    %v1663 = vmul.f32 %v1655, %v95
    %v1664 = vmul.f32 %v1656, %v96
    %v1665 = vmul.f32 %v1657, %v97
    %v1666 = vld [vmem:[#allocation5] sm:$0xff]
    %v1667 = vld [vmem:[%s12] sm:$0xff]
    %1669 = vset.pattern.permute.xlu0 0
    %1670 = vperm.xlu0 %1669, %v1667
    %v1671 = vpop.permute.xlu0 %1670
    %v1674 = vsel %vm618, %v1666, 0
    %1676 = vmatpush.msra.mxu0 0.0
    %1677 = vmatpush.msra.mxu0 0.0
    %1678 = vmatpush.msra.mxu0 0.0
    %1679 = vmatpush.msra.mxu0 0.0
    %1680 = vmatpush.msra.mxu0 0.0
    %1681 = vmatpush.msra.mxu0 0.0
    %1682 = vmatpush.msra.mxu0 0.0
    %1683 = vmatpush.msra.mxu0 0.0
    %1684 = vmatpush.msra.mxu0 0.0
    %1685 = vmatpush.msra.mxu0 0.0
    %1686 = vmatpush.msra.mxu0 0.0
    %1687 = vmatpush.msra.mxu0 0.0
    %1688 = vmatpush.msra.mxu0 0.0
    %1689 = vmatpush.msra.mxu0 0.0
    %1690 = vmatpush.msra.mxu0 0.0
    %1691 = vmatpush.msra.mxu0 %v1658
    %1692 = vmatmul.f32.gmra.mxu0 %v1674
    %v1693 = vpop.f32.mrf.mxu0
    %v1694 = vadd.f32 %v1671, %v1693
    %1695 = vdwg.mxu0
    %1696 = vmatpush.msra.mxu0 0.0
    %1697 = vmatpush.msra.mxu0 0.0
    %1698 = vmatpush.msra.mxu0 0.0
    %1699 = vmatpush.msra.mxu0 0.0
    %1700 = vmatpush.msra.mxu0 0.0
    %1701 = vmatpush.msra.mxu0 0.0
    %1702 = vmatpush.msra.mxu0 0.0
    %1703 = vmatpush.msra.mxu0 0.0
    %1704 = vmatpush.msra.mxu0 0.0
    %1705 = vmatpush.msra.mxu0 0.0
    %1706 = vmatpush.msra.mxu0 0.0
    %1707 = vmatpush.msra.mxu0 0.0
    %1708 = vmatpush.msra.mxu0 0.0
    %1709 = vmatpush.msra.mxu0 0.0
    %1710 = vmatpush.msra.mxu0 0.0
    %1711 = vmatpush.msra.mxu0 %v1659
    %1712 = vmatmul.f32.gmra.mxu0 %v1674
    %v1713 = vpop.f32.mrf.mxu0
    %v1714 = vadd.f32 %v1671, %v1713
    %1715 = vdwg.mxu0
    %1716 = vmatpush.msra.mxu0 0.0
    %1717 = vmatpush.msra.mxu0 0.0
    %1718 = vmatpush.msra.mxu0 0.0
    %1719 = vmatpush.msra.mxu0 0.0
    %1720 = vmatpush.msra.mxu0 0.0
    %1721 = vmatpush.msra.mxu0 0.0
    %1722 = vmatpush.msra.mxu0 0.0
    %1723 = vmatpush.msra.mxu0 0.0
    %1724 = vmatpush.msra.mxu0 0.0
    %1725 = vmatpush.msra.mxu0 0.0
    %1726 = vmatpush.msra.mxu0 0.0
    %1727 = vmatpush.msra.mxu0 0.0
    %1728 = vmatpush.msra.mxu0 0.0
    %1729 = vmatpush.msra.mxu0 0.0
    %1730 = vmatpush.msra.mxu0 0.0
    %1731 = vmatpush.msra.mxu0 %v1660
    %1732 = vmatmul.f32.gmra.mxu0 %v1674
    %v1733 = vpop.f32.mrf.mxu0
    %v1734 = vadd.f32 %v1671, %v1733
    %1735 = vdwg.mxu0
    %1736 = vmatpush.msra.mxu0 0.0
    %1737 = vmatpush.msra.mxu0 0.0
    %1738 = vmatpush.msra.mxu0 0.0
    %1739 = vmatpush.msra.mxu0 0.0
    %1740 = vmatpush.msra.mxu0 0.0
    %1741 = vmatpush.msra.mxu0 0.0
    %1742 = vmatpush.msra.mxu0 0.0
    %1743 = vmatpush.msra.mxu0 0.0
    %1744 = vmatpush.msra.mxu0 0.0
    %1745 = vmatpush.msra.mxu0 0.0
    %1746 = vmatpush.msra.mxu0 0.0
    %1747 = vmatpush.msra.mxu0 0.0
    %1748 = vmatpush.msra.mxu0 0.0
    %1749 = vmatpush.msra.mxu0 0.0
    %1750 = vmatpush.msra.mxu0 0.0
    %1751 = vmatpush.msra.mxu0 %v1661
    %1752 = vmatmul.f32.gmra.mxu0 %v1674
    %v1753 = vpop.f32.mrf.mxu0
    %v1754 = vadd.f32 %v1671, %v1753
    %1755 = vdwg.mxu0
    %1756 = vmatpush.msra.mxu0 0.0
    %1757 = vmatpush.msra.mxu0 0.0
    %1758 = vmatpush.msra.mxu0 0.0
    %1759 = vmatpush.msra.mxu0 0.0
    %1760 = vmatpush.msra.mxu0 0.0
    %1761 = vmatpush.msra.mxu0 0.0
    %1762 = vmatpush.msra.mxu0 0.0
    %1763 = vmatpush.msra.mxu0 0.0
    %1764 = vmatpush.msra.mxu0 0.0
    %1765 = vmatpush.msra.mxu0 0.0
    %1766 = vmatpush.msra.mxu0 0.0
    %1767 = vmatpush.msra.mxu0 0.0
    %1768 = vmatpush.msra.mxu0 0.0
    %1769 = vmatpush.msra.mxu0 0.0
    %1770 = vmatpush.msra.mxu0 0.0
    %1771 = vmatpush.msra.mxu0 %v1662
    %1772 = vmatmul.f32.gmra.mxu0 %v1674
    %v1773 = vpop.f32.mrf.mxu0
    %v1774 = vadd.f32 %v1671, %v1773
    %1775 = vdwg.mxu0
    %1776 = vmatpush.msra.mxu0 0.0
    %1777 = vmatpush.msra.mxu0 0.0
    %1778 = vmatpush.msra.mxu0 0.0
    %1779 = vmatpush.msra.mxu0 0.0
    %1780 = vmatpush.msra.mxu0 0.0
    %1781 = vmatpush.msra.mxu0 0.0
    %1782 = vmatpush.msra.mxu0 0.0
    %1783 = vmatpush.msra.mxu0 0.0
    %1784 = vmatpush.msra.mxu0 0.0
    %1785 = vmatpush.msra.mxu0 0.0
    %1786 = vmatpush.msra.mxu0 0.0
    %1787 = vmatpush.msra.mxu0 0.0
    %1788 = vmatpush.msra.mxu0 0.0
    %1789 = vmatpush.msra.mxu0 0.0
    %1790 = vmatpush.msra.mxu0 0.0
    %1791 = vmatpush.msra.mxu0 %v1663
    %1792 = vmatmul.f32.gmra.mxu0 %v1674
    %v1793 = vpop.f32.mrf.mxu0
    %v1794 = vadd.f32 %v1671, %v1793
    %1795 = vdwg.mxu0
    %1796 = vmatpush.msra.mxu0 0.0
    %1797 = vmatpush.msra.mxu0 0.0
    %1798 = vmatpush.msra.mxu0 0.0
    %1799 = vmatpush.msra.mxu0 0.0
    %1800 = vmatpush.msra.mxu0 0.0
    %1801 = vmatpush.msra.mxu0 0.0
    %1802 = vmatpush.msra.mxu0 0.0
    %1803 = vmatpush.msra.mxu0 0.0
    %1804 = vmatpush.msra.mxu0 0.0
    %1805 = vmatpush.msra.mxu0 0.0
    %1806 = vmatpush.msra.mxu0 0.0
    %1807 = vmatpush.msra.mxu0 0.0
    %1808 = vmatpush.msra.mxu0 0.0
    %1809 = vmatpush.msra.mxu0 0.0
    %1810 = vmatpush.msra.mxu0 0.0
    %1811 = vmatpush.msra.mxu0 %v1664
    %1812 = vmatmul.f32.gmra.mxu0 %v1674
    %v1813 = vpop.f32.mrf.mxu0
    %v1814 = vadd.f32 %v1671, %v1813
    %1815 = vdwg.mxu0
    %1816 = vmatpush.msra.mxu0 0.0
    %1817 = vmatpush.msra.mxu0 0.0
    %1818 = vmatpush.msra.mxu0 0.0
    %1819 = vmatpush.msra.mxu0 0.0
    %1820 = vmatpush.msra.mxu0 0.0
    %1821 = vmatpush.msra.mxu0 0.0
    %1822 = vmatpush.msra.mxu0 0.0
    %1823 = vmatpush.msra.mxu0 0.0
    %1824 = vmatpush.msra.mxu0 0.0
    %1825 = vmatpush.msra.mxu0 0.0
    %1826 = vmatpush.msra.mxu0 0.0
    %1827 = vmatpush.msra.mxu0 0.0
    %1828 = vmatpush.msra.mxu0 0.0
    %1829 = vmatpush.msra.mxu0 0.0
    %1830 = vmatpush.msra.mxu0 0.0
    %1831 = vmatpush.msra.mxu0 %v1665
    %1832 = vmatmul.f32.gmra.mxu0 %v1674
    %v1833 = vpop.f32.mrf.mxu0
    %v1834 = vadd.f32 %v1671, %v1833
    %1835 = vdwg.mxu0
    %v1836 = vmul.f32 %v1694, %v90
    %v1837 = vmul.f32 %v1714, %v91
    %v1838 = vmul.f32 %v1734, %v92
    %v1839 = vmul.f32 %v1754, %v93
    %v1840 = vmul.f32 %v1774, %v94
    %v1841 = vmul.f32 %v1794, %v95
    %v1842 = vmul.f32 %v1814, %v96
    %v1843 = vmul.f32 %v1834, %v97
    %1844 = vst [vmem:[#allocation7] sm:$0xff] %v1836
    %1845 = vst [vmem:[#allocation7 + $0x8] sm:$0xff] %v1837
    %1846 = vst [vmem:[#allocation7 + $0x10] sm:$0xff] %v1838
    %1847 = vst [vmem:[#allocation7 + $0x18] sm:$0xff] %v1839
    %1848 = vst [vmem:[#allocation7 + $0x20] sm:$0xff] %v1840
    %1849 = vst [vmem:[#allocation7 + $0x28] sm:$0xff] %v1841
    %1850 = vst [vmem:[#allocation7 + $0x30] sm:$0xff] %v1842
    %1851 = vst [vmem:[#allocation7 + $0x38] sm:$0xff] %v1843
    %v1852 = vsel %vm156, %v1836, -1e+30
    %v1853 = vsel %vm156, %v1837, -1e+30
    %v1854 = vsel %vm156, %v1838, -1e+30
    %v1855 = vsel %vm156, %v1839, -1e+30
    %v1856 = vsel %vm156, %v1840, -1e+30
    %v1857 = vsel %vm156, %v1841, -1e+30
    %v1858 = vsel %vm156, %v1842, -1e+30
    %v1859 = vsel %vm156, %v1843, -1e+30
    %v1860 = vrot.slane %v1852, 4
    %v1861 = vmax.f32 %v1852, %v1860
    %v1862 = vrot.slane %v1861, 2
    %v1863 = vmax.f32 %v1861, %v1862
    %v1864 = vrot.slane %v1863, 1
    %v1865 = vmax.f32 %v1863, %v1864
    %v1866 = vrot.slane %v1853, 4
    %v1867 = vmax.f32 %v1853, %v1866
    %v1868 = vrot.slane %v1867, 2
    %v1869 = vmax.f32 %v1867, %v1868
    %v1870 = vrot.slane %v1869, 1
    %v1871 = vmax.f32 %v1869, %v1870
    %v1872 = vrot.slane %v1854, 4
    %v1873 = vmax.f32 %v1854, %v1872
    %v1874 = vrot.slane %v1873, 2
    %v1875 = vmax.f32 %v1873, %v1874
    %v1876 = vrot.slane %v1875, 1
    %v1877 = vmax.f32 %v1875, %v1876
    %v1878 = vrot.slane %v1855, 4
    %v1879 = vmax.f32 %v1855, %v1878
    %v1880 = vrot.slane %v1879, 2
    %v1881 = vmax.f32 %v1879, %v1880
    %v1882 = vrot.slane %v1881, 1
    %v1883 = vmax.f32 %v1881, %v1882
    %v1884 = vrot.slane %v1856, 4
    %v1885 = vmax.f32 %v1856, %v1884
    %v1886 = vrot.slane %v1885, 2
    %v1887 = vmax.f32 %v1885, %v1886
    %v1888 = vrot.slane %v1887, 1
    %v1889 = vmax.f32 %v1887, %v1888
    %v1890 = vrot.slane %v1857, 4
    %v1891 = vmax.f32 %v1857, %v1890
    %v1892 = vrot.slane %v1891, 2
    %v1893 = vmax.f32 %v1891, %v1892
    %v1894 = vrot.slane %v1893, 1
    %v1895 = vmax.f32 %v1893, %v1894
    %v1896 = vrot.slane %v1858, 4
    %v1897 = vmax.f32 %v1858, %v1896
    %v1898 = vrot.slane %v1897, 2
    %v1899 = vmax.f32 %v1897, %v1898
    %v1900 = vrot.slane %v1899, 1
    %v1901 = vmax.f32 %v1899, %v1900
    %v1902 = vrot.slane %v1859, 4
    %v1903 = vmax.f32 %v1859, %v1902
    %v1904 = vrot.slane %v1903, 2
    %v1905 = vmax.f32 %v1903, %v1904
    %v1906 = vrot.slane %v1905, 1
    %v1907 = vmax.f32 %v1905, %v1906
    %v1908 = vsub.f32 %v1852, %v1865
    %v1909 = vsub.f32 %v1853, %v1871
    %v1910 = vsub.f32 %v1854, %v1877
    %v1911 = vsub.f32 %v1855, %v1883
    %v1912 = vsub.f32 %v1856, %v1889
    %v1913 = vsub.f32 %v1857, %v1895
    %v1914 = vsub.f32 %v1858, %v1901
    %v1915 = vsub.f32 %v1859, %v1907
    %v1916 = vmul.f32 %v1908, 1.442695
    %v1917 = vpow.pop %v1916
    %v1918 = vmul.f32 %v1909, 1.442695
    %v1919 = vpow.pop %v1918
    %v1920 = vmul.f32 %v1910, 1.442695
    %v1921 = vpow.pop %v1920
    %v1922 = vmul.f32 %v1911, 1.442695
    %v1923 = vpow.pop %v1922
    %v1924 = vmul.f32 %v1912, 1.442695
    %v1925 = vpow.pop %v1924
    %v1926 = vmul.f32 %v1913, 1.442695
    %v1927 = vpow.pop %v1926
    %v1928 = vmul.f32 %v1914, 1.442695
    %v1929 = vpow.pop %v1928
    %v1930 = vmul.f32 %v1915, 1.442695
    %v1931 = vpow.pop %v1930
    %v1932 = vrot.slane %v1917, 4
    %v1933 = vadd.f32 %v1917, %v1932
    %v1934 = vrot.slane %v1933, 2
    %v1935 = vadd.f32 %v1933, %v1934
    %v1936 = vrot.slane %v1935, 1
    %v1937 = vadd.f32 %v1935, %v1936
    %v1938 = vrot.slane %v1919, 4
    %v1939 = vadd.f32 %v1919, %v1938
    %v1940 = vrot.slane %v1939, 2
    %v1941 = vadd.f32 %v1939, %v1940
    %v1942 = vrot.slane %v1941, 1
    %v1943 = vadd.f32 %v1941, %v1942
    %v1944 = vrot.slane %v1921, 4
    %v1945 = vadd.f32 %v1921, %v1944
    %v1946 = vrot.slane %v1945, 2
    %v1947 = vadd.f32 %v1945, %v1946
    %v1948 = vrot.slane %v1947, 1
    %v1949 = vadd.f32 %v1947, %v1948
    %v1950 = vrot.slane %v1923, 4
    %v1951 = vadd.f32 %v1923, %v1950
    %v1952 = vrot.slane %v1951, 2
    %v1953 = vadd.f32 %v1951, %v1952
    %v1954 = vrot.slane %v1953, 1
    %v1955 = vadd.f32 %v1953, %v1954
    %v1956 = vrot.slane %v1925, 4
    %v1957 = vadd.f32 %v1925, %v1956
    %v1958 = vrot.slane %v1957, 2
    %v1959 = vadd.f32 %v1957, %v1958
    %v1960 = vrot.slane %v1959, 1
    %v1961 = vadd.f32 %v1959, %v1960
    %v1962 = vrot.slane %v1927, 4
    %v1963 = vadd.f32 %v1927, %v1962
    %v1964 = vrot.slane %v1963, 2
    %v1965 = vadd.f32 %v1963, %v1964
    %v1966 = vrot.slane %v1965, 1
    %v1967 = vadd.f32 %v1965, %v1966
    %v1968 = vrot.slane %v1929, 4
    %v1969 = vadd.f32 %v1929, %v1968
    %v1970 = vrot.slane %v1969, 2
    %v1971 = vadd.f32 %v1969, %v1970
    %v1972 = vrot.slane %v1971, 1
    %v1973 = vadd.f32 %v1971, %v1972
    %v1974 = vrot.slane %v1931, 4
    %v1975 = vadd.f32 %v1931, %v1974
    %v1976 = vrot.slane %v1975, 2
    %v1977 = vadd.f32 %v1975, %v1976
    %v1978 = vrot.slane %v1977, 1
    %v1979 = vadd.f32 %v1977, %v1978
    %v1980 = vrcp.pop %v1937
    %v1981 = vrcp.pop %v1943
    %v1982 = vrcp.pop %v1949
    %v1983 = vrcp.pop %v1955
    %v1984 = vrcp.pop %v1961
    %v1985 = vrcp.pop %v1967
    %v1986 = vrcp.pop %v1973
    %v1987 = vrcp.pop %v1979
    %v1988 = vmul.f32 %v1917, %v1980
    %v1989 = vmul.f32 %v1919, %v1981
    %v1990 = vmul.f32 %v1921, %v1982
    %v1991 = vmul.f32 %v1923, %v1983
    %v1992 = vmul.f32 %v1925, %v1984
    %v1993 = vmul.f32 %v1927, %v1985
    %v1994 = vmul.f32 %v1929, %v1986
    %v1995 = vmul.f32 %v1931, %v1987
    %v1996 = vmul.f32 %v1988, %v90
    %v1997 = vmul.f32 %v1989, %v91
    %v1998 = vmul.f32 %v1990, %v92
    %v1999 = vmul.f32 %v1991, %v93
    %v2000 = vmul.f32 %v1992, %v94
    %v2001 = vmul.f32 %v1993, %v95
    %v2002 = vmul.f32 %v1994, %v96
    %v2003 = vmul.f32 %v1995, %v97
    %v2004 = vld [vmem:[%s5] sm:$0xff]
    %v2005 = vld [vmem:[%s6] sm:$0xff]
    %2007 = vset.pattern.permute.xlu0 0
    %2008 = vperm.xlu0 %2007, %v2005
    %v2009 = vpop.permute.xlu0 %2008
    %v2012 = vsel %vm618, %v2004, 0
    %2014 = vmatpush.msra.mxu0 0.0
    %2015 = vmatpush.msra.mxu0 0.0
    %2016 = vmatpush.msra.mxu0 0.0
    %2017 = vmatpush.msra.mxu0 0.0
    %2018 = vmatpush.msra.mxu0 0.0
    %2019 = vmatpush.msra.mxu0 0.0
    %2020 = vmatpush.msra.mxu0 0.0
    %2021 = vmatpush.msra.mxu0 0.0
    %2022 = vmatpush.msra.mxu0 0.0
    %2023 = vmatpush.msra.mxu0 0.0
    %2024 = vmatpush.msra.mxu0 0.0
    %2025 = vmatpush.msra.mxu0 0.0
    %2026 = vmatpush.msra.mxu0 0.0
    %2027 = vmatpush.msra.mxu0 0.0
    %2028 = vmatpush.msra.mxu0 0.0
    %2029 = vmatpush.msra.mxu0 %v1996
    %2030 = vmatmul.f32.gmra.mxu0 %v2012
    %v2031 = vpop.f32.mrf.mxu0
    %v2032 = vadd.f32 %v2009, %v2031
    %2033 = vdwg.mxu0
    %2034 = vmatpush.msra.mxu0 0.0
    %2035 = vmatpush.msra.mxu0 0.0
    %2036 = vmatpush.msra.mxu0 0.0
    %2037 = vmatpush.msra.mxu0 0.0
    %2038 = vmatpush.msra.mxu0 0.0
    %2039 = vmatpush.msra.mxu0 0.0
    %2040 = vmatpush.msra.mxu0 0.0
    %2041 = vmatpush.msra.mxu0 0.0
    %2042 = vmatpush.msra.mxu0 0.0
    %2043 = vmatpush.msra.mxu0 0.0
    %2044 = vmatpush.msra.mxu0 0.0
    %2045 = vmatpush.msra.mxu0 0.0
    %2046 = vmatpush.msra.mxu0 0.0
    %2047 = vmatpush.msra.mxu0 0.0
    %2048 = vmatpush.msra.mxu0 0.0
    %2049 = vmatpush.msra.mxu0 %v1997
    %2050 = vmatmul.f32.gmra.mxu0 %v2012
    %v2051 = vpop.f32.mrf.mxu0
    %v2052 = vadd.f32 %v2009, %v2051
    %2053 = vdwg.mxu0
    %2054 = vmatpush.msra.mxu0 0.0
    %2055 = vmatpush.msra.mxu0 0.0
    %2056 = vmatpush.msra.mxu0 0.0
    %2057 = vmatpush.msra.mxu0 0.0
    %2058 = vmatpush.msra.mxu0 0.0
    %2059 = vmatpush.msra.mxu0 0.0
    %2060 = vmatpush.msra.mxu0 0.0
    %2061 = vmatpush.msra.mxu0 0.0
    %2062 = vmatpush.msra.mxu0 0.0
    %2063 = vmatpush.msra.mxu0 0.0
    %2064 = vmatpush.msra.mxu0 0.0
    %2065 = vmatpush.msra.mxu0 0.0
    %2066 = vmatpush.msra.mxu0 0.0
    %2067 = vmatpush.msra.mxu0 0.0
    %2068 = vmatpush.msra.mxu0 0.0
    %2069 = vmatpush.msra.mxu0 %v1998
    %2070 = vmatmul.f32.gmra.mxu0 %v2012
    %v2071 = vpop.f32.mrf.mxu0
    %v2072 = vadd.f32 %v2009, %v2071
    %2073 = vdwg.mxu0
    %2074 = vmatpush.msra.mxu0 0.0
    %2075 = vmatpush.msra.mxu0 0.0
    %2076 = vmatpush.msra.mxu0 0.0
    %2077 = vmatpush.msra.mxu0 0.0
    %2078 = vmatpush.msra.mxu0 0.0
    %2079 = vmatpush.msra.mxu0 0.0
    %2080 = vmatpush.msra.mxu0 0.0
    %2081 = vmatpush.msra.mxu0 0.0
    %2082 = vmatpush.msra.mxu0 0.0
    %2083 = vmatpush.msra.mxu0 0.0
    %2084 = vmatpush.msra.mxu0 0.0
    %2085 = vmatpush.msra.mxu0 0.0
    %2086 = vmatpush.msra.mxu0 0.0
    %2087 = vmatpush.msra.mxu0 0.0
    %2088 = vmatpush.msra.mxu0 0.0
    %2089 = vmatpush.msra.mxu0 %v1999
    %2090 = vmatmul.f32.gmra.mxu0 %v2012
    %v2091 = vpop.f32.mrf.mxu0
    %v2092 = vadd.f32 %v2009, %v2091
    %2093 = vdwg.mxu0
    %2094 = vmatpush.msra.mxu0 0.0
    %2095 = vmatpush.msra.mxu0 0.0
    %2096 = vmatpush.msra.mxu0 0.0
    %2097 = vmatpush.msra.mxu0 0.0
    %2098 = vmatpush.msra.mxu0 0.0
    %2099 = vmatpush.msra.mxu0 0.0
    %2100 = vmatpush.msra.mxu0 0.0
    %2101 = vmatpush.msra.mxu0 0.0
    %2102 = vmatpush.msra.mxu0 0.0
    %2103 = vmatpush.msra.mxu0 0.0
    %2104 = vmatpush.msra.mxu0 0.0
    %2105 = vmatpush.msra.mxu0 0.0
    %2106 = vmatpush.msra.mxu0 0.0
    %2107 = vmatpush.msra.mxu0 0.0
    %2108 = vmatpush.msra.mxu0 0.0
    %2109 = vmatpush.msra.mxu0 %v2000
    %2110 = vmatmul.f32.gmra.mxu0 %v2012
    %v2111 = vpop.f32.mrf.mxu0
    %v2112 = vadd.f32 %v2009, %v2111
    %2113 = vdwg.mxu0
    %2114 = vmatpush.msra.mxu0 0.0
    %2115 = vmatpush.msra.mxu0 0.0
    %2116 = vmatpush.msra.mxu0 0.0
    %2117 = vmatpush.msra.mxu0 0.0
    %2118 = vmatpush.msra.mxu0 0.0
    %2119 = vmatpush.msra.mxu0 0.0
    %2120 = vmatpush.msra.mxu0 0.0
    %2121 = vmatpush.msra.mxu0 0.0
    %2122 = vmatpush.msra.mxu0 0.0
    %2123 = vmatpush.msra.mxu0 0.0
    %2124 = vmatpush.msra.mxu0 0.0
    %2125 = vmatpush.msra.mxu0 0.0
    %2126 = vmatpush.msra.mxu0 0.0
    %2127 = vmatpush.msra.mxu0 0.0
    %2128 = vmatpush.msra.mxu0 0.0
    %2129 = vmatpush.msra.mxu0 %v2001
    %2130 = vmatmul.f32.gmra.mxu0 %v2012
    %v2131 = vpop.f32.mrf.mxu0
    %v2132 = vadd.f32 %v2009, %v2131
    %2133 = vdwg.mxu0
    %2134 = vmatpush.msra.mxu0 0.0
    %2135 = vmatpush.msra.mxu0 0.0
    %2136 = vmatpush.msra.mxu0 0.0
    %2137 = vmatpush.msra.mxu0 0.0
    %2138 = vmatpush.msra.mxu0 0.0
    %2139 = vmatpush.msra.mxu0 0.0
    %2140 = vmatpush.msra.mxu0 0.0
    %2141 = vmatpush.msra.mxu0 0.0
    %2142 = vmatpush.msra.mxu0 0.0
    %2143 = vmatpush.msra.mxu0 0.0
    %2144 = vmatpush.msra.mxu0 0.0
    %2145 = vmatpush.msra.mxu0 0.0
    %2146 = vmatpush.msra.mxu0 0.0
    %2147 = vmatpush.msra.mxu0 0.0
    %2148 = vmatpush.msra.mxu0 0.0
    %2149 = vmatpush.msra.mxu0 %v2002
    %2150 = vmatmul.f32.gmra.mxu0 %v2012
    %v2151 = vpop.f32.mrf.mxu0
    %v2152 = vadd.f32 %v2009, %v2151
    %2153 = vdwg.mxu0
    %2154 = vmatpush.msra.mxu0 0.0
    %2155 = vmatpush.msra.mxu0 0.0
    %2156 = vmatpush.msra.mxu0 0.0
    %2157 = vmatpush.msra.mxu0 0.0
    %2158 = vmatpush.msra.mxu0 0.0
    %2159 = vmatpush.msra.mxu0 0.0
    %2160 = vmatpush.msra.mxu0 0.0
    %2161 = vmatpush.msra.mxu0 0.0
    %2162 = vmatpush.msra.mxu0 0.0
    %2163 = vmatpush.msra.mxu0 0.0
    %2164 = vmatpush.msra.mxu0 0.0
    %2165 = vmatpush.msra.mxu0 0.0
    %2166 = vmatpush.msra.mxu0 0.0
    %2167 = vmatpush.msra.mxu0 0.0
    %2168 = vmatpush.msra.mxu0 0.0
    %2169 = vmatpush.msra.mxu0 %v2003
    %2170 = vmatmul.f32.gmra.mxu0 %v2012
    %v2171 = vpop.f32.mrf.mxu0
    %v2172 = vadd.f32 %v2009, %v2171
    %2173 = vdwg.mxu0
    %2174 = vrot.lane.b32.xlu0 %v2032, 1
    %v2175 = vpop.permute.xlu0 %2174
    %2176 = vrot.lane.b32.xlu0 %v2052, 1
    %v2177 = vpop.permute.xlu0 %2176
    %2178 = vrot.lane.b32.xlu0 %v2072, 1
    %v2179 = vpop.permute.xlu0 %2178
    %2180 = vrot.lane.b32.xlu0 %v2092, 1
    %v2181 = vpop.permute.xlu0 %2180
    %2182 = vrot.lane.b32.xlu0 %v2112, 1
    %v2183 = vpop.permute.xlu0 %2182
    %2184 = vrot.lane.b32.xlu0 %v2132, 1
    %v2185 = vpop.permute.xlu0 %2184
    %2186 = vrot.lane.b32.xlu0 %v2152, 1
    %v2187 = vpop.permute.xlu0 %2186
    %2188 = vrot.lane.b32.xlu0 %v2172, 1
    %v2189 = vpop.permute.xlu0 %2188
    %v2190 = vsel %vm382, %v2187, %v2189
    %v2191 = vsel %vm382, %v2185, %v2187
    %v2192 = vsel %vm382, %v2183, %v2185
    %v2193 = vsel %vm382, %v2181, %v2183
    %v2194 = vsel %vm382, %v2179, %v2181
    %v2195 = vsel %vm382, %v2177, %v2179
    %v2196 = vsel %vm382, %v2175, %v2177
    %v2197 = vsel %vm382, %v2189, %v2175
    %v2198 = vsel %vm106, %v2197, 0.0
    %v2199 = vsel %vm107, %v2196, 0.0
    %v2200 = vsel %vm108, %v2195, 0.0
    %v2201 = vsel %vm109, %v2194, 0.0
    %v2202 = vsel %vm110, %v2193, 0.0
    %v2203 = vsel %vm111, %v2192, 0.0
    %v2204 = vsel %vm112, %v2191, 0.0
    %v2205 = vsel %vm113, %v2190, 0.0
    %2206 = vrot.lane.b32.xlu0 %v2032, 127
    %v2207 = vpop.permute.xlu0 %2206
    %2208 = vrot.lane.b32.xlu0 %v2052, 127
    %v2209 = vpop.permute.xlu0 %2208
    %2210 = vrot.lane.b32.xlu0 %v2072, 127
    %v2211 = vpop.permute.xlu0 %2210
    %2212 = vrot.lane.b32.xlu0 %v2092, 127
    %v2213 = vpop.permute.xlu0 %2212
    %2214 = vrot.lane.b32.xlu0 %v2112, 127
    %v2215 = vpop.permute.xlu0 %2214
    %2216 = vrot.lane.b32.xlu0 %v2132, 127
    %v2217 = vpop.permute.xlu0 %2216
    %2218 = vrot.lane.b32.xlu0 %v2152, 127
    %v2219 = vpop.permute.xlu0 %2218
    %2220 = vrot.lane.b32.xlu0 %v2172, 127
    %v2221 = vpop.permute.xlu0 %2220
    %v2222 = vsel %vm415, %v2219, %v2221
    %v2223 = vsel %vm415, %v2217, %v2219
    %v2224 = vsel %vm415, %v2215, %v2217
    %v2225 = vsel %vm415, %v2213, %v2215
    %v2226 = vsel %vm415, %v2211, %v2213
    %v2227 = vsel %vm415, %v2209, %v2211
    %v2228 = vsel %vm415, %v2207, %v2209
    %v2229 = vsel %vm415, %v2221, %v2207
    %v2230 = vsel %vm114, %v2228, 0.0
    %v2231 = vsel %vm115, %v2227, 0.0
    %v2232 = vsel %vm116, %v2226, 0.0
    %v2233 = vsel %vm117, %v2225, 0.0
    %v2234 = vsel %vm118, %v2224, 0.0
    %v2235 = vsel %vm119, %v2223, 0.0
    %v2236 = vsel %vm120, %v2222, 0.0
    %v2237 = vsel %vm121, %v2229, 0.0
    %s2238 = scalar_lea.vmem %s7, 24
    %v2239 = vld [vmem:[%s2238] sm:$0xff]
    %s2240 = scalar_lea.vmem %s8, 24
    %v2241 = vld [vmem:[%s2240] sm:$0xff]
    %2243 = vset.pattern.permute.xlu0 0
    %2244 = vperm.xlu0 %2243, %v2241
    %v2245 = vpop.permute.xlu0 %2244
    %v2248 = vsel %vm439, %v2239, 0
    %2250 = vmatpush.msra.mxu0 0.0
    %2251 = vmatpush.msra.mxu0 0.0
    %2252 = vmatpush.msra.mxu0 0.0
    %2253 = vmatpush.msra.mxu0 0.0
    %2254 = vmatpush.msra.mxu0 0.0
    %2255 = vmatpush.msra.mxu0 0.0
    %2256 = vmatpush.msra.mxu0 0.0
    %2257 = vmatpush.msra.mxu0 0.0
    %2258 = vmatpush.msra.mxu0 0.0
    %2259 = vmatpush.msra.mxu0 0.0
    %2260 = vmatpush.msra.mxu0 0.0
    %2261 = vmatpush.msra.mxu0 0.0
    %2262 = vmatpush.msra.mxu0 0.0
    %2263 = vmatpush.msra.mxu0 %v2230
    %2264 = vmatpush.msra.mxu0 %v2032
    %2265 = vmatpush.msra.mxu0 %v2198
    %2266 = vmatmul.f32.gmra.mxu0 %v2248
    %v2267 = vpop.f32.mrf.mxu0
    %v2268 = vadd.f32 %v2245, %v2267
    %2269 = vdwg.mxu0
    %2270 = vmatpush.msra.mxu0 0.0
    %2271 = vmatpush.msra.mxu0 0.0
    %2272 = vmatpush.msra.mxu0 0.0
    %2273 = vmatpush.msra.mxu0 0.0
    %2274 = vmatpush.msra.mxu0 0.0
    %2275 = vmatpush.msra.mxu0 0.0
    %2276 = vmatpush.msra.mxu0 0.0
    %2277 = vmatpush.msra.mxu0 0.0
    %2278 = vmatpush.msra.mxu0 0.0
    %2279 = vmatpush.msra.mxu0 0.0
    %2280 = vmatpush.msra.mxu0 0.0
    %2281 = vmatpush.msra.mxu0 0.0
    %2282 = vmatpush.msra.mxu0 0.0
    %2283 = vmatpush.msra.mxu0 %v2231
    %2284 = vmatpush.msra.mxu0 %v2052
    %2285 = vmatpush.msra.mxu0 %v2199
    %2286 = vmatmul.f32.gmra.mxu0 %v2248
    %v2287 = vpop.f32.mrf.mxu0
    %v2288 = vadd.f32 %v2245, %v2287
    %2289 = vdwg.mxu0
    %2290 = vmatpush.msra.mxu0 0.0
    %2291 = vmatpush.msra.mxu0 0.0
    %2292 = vmatpush.msra.mxu0 0.0
    %2293 = vmatpush.msra.mxu0 0.0
    %2294 = vmatpush.msra.mxu0 0.0
    %2295 = vmatpush.msra.mxu0 0.0
    %2296 = vmatpush.msra.mxu0 0.0
    %2297 = vmatpush.msra.mxu0 0.0
    %2298 = vmatpush.msra.mxu0 0.0
    %2299 = vmatpush.msra.mxu0 0.0
    %2300 = vmatpush.msra.mxu0 0.0
    %2301 = vmatpush.msra.mxu0 0.0
    %2302 = vmatpush.msra.mxu0 0.0
    %2303 = vmatpush.msra.mxu0 %v2232
    %2304 = vmatpush.msra.mxu0 %v2072
    %2305 = vmatpush.msra.mxu0 %v2200
    %2306 = vmatmul.f32.gmra.mxu0 %v2248
    %v2307 = vpop.f32.mrf.mxu0
    %v2308 = vadd.f32 %v2245, %v2307
    %2309 = vdwg.mxu0
    %2310 = vmatpush.msra.mxu0 0.0
    %2311 = vmatpush.msra.mxu0 0.0
    %2312 = vmatpush.msra.mxu0 0.0
    %2313 = vmatpush.msra.mxu0 0.0
    %2314 = vmatpush.msra.mxu0 0.0
    %2315 = vmatpush.msra.mxu0 0.0
    %2316 = vmatpush.msra.mxu0 0.0
    %2317 = vmatpush.msra.mxu0 0.0
    %2318 = vmatpush.msra.mxu0 0.0
    %2319 = vmatpush.msra.mxu0 0.0
    %2320 = vmatpush.msra.mxu0 0.0
    %2321 = vmatpush.msra.mxu0 0.0
    %2322 = vmatpush.msra.mxu0 0.0
    %2323 = vmatpush.msra.mxu0 %v2233
    %2324 = vmatpush.msra.mxu0 %v2092
    %2325 = vmatpush.msra.mxu0 %v2201
    %2326 = vmatmul.f32.gmra.mxu0 %v2248
    %v2327 = vpop.f32.mrf.mxu0
    %v2328 = vadd.f32 %v2245, %v2327
    %2329 = vdwg.mxu0
    %2330 = vmatpush.msra.mxu0 0.0
    %2331 = vmatpush.msra.mxu0 0.0
    %2332 = vmatpush.msra.mxu0 0.0
    %2333 = vmatpush.msra.mxu0 0.0
    %2334 = vmatpush.msra.mxu0 0.0
    %2335 = vmatpush.msra.mxu0 0.0
    %2336 = vmatpush.msra.mxu0 0.0
    %2337 = vmatpush.msra.mxu0 0.0
    %2338 = vmatpush.msra.mxu0 0.0
    %2339 = vmatpush.msra.mxu0 0.0
    %2340 = vmatpush.msra.mxu0 0.0
    %2341 = vmatpush.msra.mxu0 0.0
    %2342 = vmatpush.msra.mxu0 0.0
    %2343 = vmatpush.msra.mxu0 %v2234
    %2344 = vmatpush.msra.mxu0 %v2112
    %2345 = vmatpush.msra.mxu0 %v2202
    %2346 = vmatmul.f32.gmra.mxu0 %v2248
    %v2347 = vpop.f32.mrf.mxu0
    %v2348 = vadd.f32 %v2245, %v2347
    %2349 = vdwg.mxu0
    %2350 = vmatpush.msra.mxu0 0.0
    %2351 = vmatpush.msra.mxu0 0.0
    %2352 = vmatpush.msra.mxu0 0.0
    %2353 = vmatpush.msra.mxu0 0.0
    %2354 = vmatpush.msra.mxu0 0.0
    %2355 = vmatpush.msra.mxu0 0.0
    %2356 = vmatpush.msra.mxu0 0.0
    %2357 = vmatpush.msra.mxu0 0.0
    %2358 = vmatpush.msra.mxu0 0.0
    %2359 = vmatpush.msra.mxu0 0.0
    %2360 = vmatpush.msra.mxu0 0.0
    %2361 = vmatpush.msra.mxu0 0.0
    %2362 = vmatpush.msra.mxu0 0.0
    %2363 = vmatpush.msra.mxu0 %v2235
    %2364 = vmatpush.msra.mxu0 %v2132
    %2365 = vmatpush.msra.mxu0 %v2203
    %2366 = vmatmul.f32.gmra.mxu0 %v2248
    %v2367 = vpop.f32.mrf.mxu0
    %v2368 = vadd.f32 %v2245, %v2367
    %2369 = vdwg.mxu0
    %2370 = vmatpush.msra.mxu0 0.0
    %2371 = vmatpush.msra.mxu0 0.0
    %2372 = vmatpush.msra.mxu0 0.0
    %2373 = vmatpush.msra.mxu0 0.0
    %2374 = vmatpush.msra.mxu0 0.0
    %2375 = vmatpush.msra.mxu0 0.0
    %2376 = vmatpush.msra.mxu0 0.0
    %2377 = vmatpush.msra.mxu0 0.0
    %2378 = vmatpush.msra.mxu0 0.0
    %2379 = vmatpush.msra.mxu0 0.0
    %2380 = vmatpush.msra.mxu0 0.0
    %2381 = vmatpush.msra.mxu0 0.0
    %2382 = vmatpush.msra.mxu0 0.0
    %2383 = vmatpush.msra.mxu0 %v2236
    %2384 = vmatpush.msra.mxu0 %v2152
    %2385 = vmatpush.msra.mxu0 %v2204
    %2386 = vmatmul.f32.gmra.mxu0 %v2248
    %v2387 = vpop.f32.mrf.mxu0
    %v2388 = vadd.f32 %v2245, %v2387
    %2389 = vdwg.mxu0
    %2390 = vmatpush.msra.mxu0 0.0
    %2391 = vmatpush.msra.mxu0 0.0
    %2392 = vmatpush.msra.mxu0 0.0
    %2393 = vmatpush.msra.mxu0 0.0
    %2394 = vmatpush.msra.mxu0 0.0
    %2395 = vmatpush.msra.mxu0 0.0
    %2396 = vmatpush.msra.mxu0 0.0
    %2397 = vmatpush.msra.mxu0 0.0
    %2398 = vmatpush.msra.mxu0 0.0
    %2399 = vmatpush.msra.mxu0 0.0
    %2400 = vmatpush.msra.mxu0 0.0
    %2401 = vmatpush.msra.mxu0 0.0
    %2402 = vmatpush.msra.mxu0 0.0
    %2403 = vmatpush.msra.mxu0 %v2237
    %2404 = vmatpush.msra.mxu0 %v2172
    %2405 = vmatpush.msra.mxu0 %v2205
    %2406 = vmatmul.f32.gmra.mxu0 %v2248
    %v2407 = vpop.f32.mrf.mxu0
    %v2408 = vadd.f32 %v2245, %v2407
    %2409 = vdwg.mxu0
    %v2410 = vmax.f32 %v2268, 0.0
    %v2411 = vmax.f32 %v2288, 0.0
    %v2412 = vmax.f32 %v2308, 0.0
    %v2413 = vmax.f32 %v2328, 0.0
    %v2414 = vmax.f32 %v2348, 0.0
    %v2415 = vmax.f32 %v2368, 0.0
    %v2416 = vmax.f32 %v2388, 0.0
    %v2417 = vmax.f32 %v2408, 0.0
    %s2418 = scalar_lea.vmem %s9, 24
    %v2419 = vld [vmem:[%s2418] sm:$0xff]
    %s2420 = scalar_lea.vmem %s10, 24
    %v2421 = vld [vmem:[%s2420] sm:$0xff]
    %2423 = vset.pattern.permute.xlu0 0
    %2424 = vperm.xlu0 %2423, %v2421
    %v2425 = vpop.permute.xlu0 %2424
    %v2428 = vsel %vm618, %v2419, 0
    %2430 = vmatpush.msra.mxu0 0.0
    %2431 = vmatpush.msra.mxu0 0.0
    %2432 = vmatpush.msra.mxu0 0.0
    %2433 = vmatpush.msra.mxu0 0.0
    %2434 = vmatpush.msra.mxu0 0.0
    %2435 = vmatpush.msra.mxu0 0.0
    %2436 = vmatpush.msra.mxu0 0.0
    %2437 = vmatpush.msra.mxu0 0.0
    %2438 = vmatpush.msra.mxu0 0.0
    %2439 = vmatpush.msra.mxu0 0.0
    %2440 = vmatpush.msra.mxu0 0.0
    %2441 = vmatpush.msra.mxu0 0.0
    %2442 = vmatpush.msra.mxu0 0.0
    %2443 = vmatpush.msra.mxu0 0.0
    %2444 = vmatpush.msra.mxu0 0.0
    %2445 = vmatpush.msra.mxu0 %v2410
    %2446 = vmatmul.f32.gmra.mxu0 %v2428
    %v2447 = vpop.f32.mrf.mxu0
    %v2448 = vadd.f32 %v2425, %v2447
    %2449 = vdwg.mxu0
    %2450 = vmatpush.msra.mxu0 0.0
    %2451 = vmatpush.msra.mxu0 0.0
    %2452 = vmatpush.msra.mxu0 0.0
    %2453 = vmatpush.msra.mxu0 0.0
    %2454 = vmatpush.msra.mxu0 0.0
    %2455 = vmatpush.msra.mxu0 0.0
    %2456 = vmatpush.msra.mxu0 0.0
    %2457 = vmatpush.msra.mxu0 0.0
    %2458 = vmatpush.msra.mxu0 0.0
    %2459 = vmatpush.msra.mxu0 0.0
    %2460 = vmatpush.msra.mxu0 0.0
    %2461 = vmatpush.msra.mxu0 0.0
    %2462 = vmatpush.msra.mxu0 0.0
    %2463 = vmatpush.msra.mxu0 0.0
    %2464 = vmatpush.msra.mxu0 0.0
    %2465 = vmatpush.msra.mxu0 %v2411
    %2466 = vmatmul.f32.gmra.mxu0 %v2428
    %v2467 = vpop.f32.mrf.mxu0
    %v2468 = vadd.f32 %v2425, %v2467
    %2469 = vdwg.mxu0
    %2470 = vmatpush.msra.mxu0 0.0
    %2471 = vmatpush.msra.mxu0 0.0
    %2472 = vmatpush.msra.mxu0 0.0
    %2473 = vmatpush.msra.mxu0 0.0
    %2474 = vmatpush.msra.mxu0 0.0
    %2475 = vmatpush.msra.mxu0 0.0
    %2476 = vmatpush.msra.mxu0 0.0
    %2477 = vmatpush.msra.mxu0 0.0
    %2478 = vmatpush.msra.mxu0 0.0
    %2479 = vmatpush.msra.mxu0 0.0
    %2480 = vmatpush.msra.mxu0 0.0
    %2481 = vmatpush.msra.mxu0 0.0
    %2482 = vmatpush.msra.mxu0 0.0
    %2483 = vmatpush.msra.mxu0 0.0
    %2484 = vmatpush.msra.mxu0 0.0
    %2485 = vmatpush.msra.mxu0 %v2412
    %2486 = vmatmul.f32.gmra.mxu0 %v2428
    %v2487 = vpop.f32.mrf.mxu0
    %v2488 = vadd.f32 %v2425, %v2487
    %2489 = vdwg.mxu0
    %2490 = vmatpush.msra.mxu0 0.0
    %2491 = vmatpush.msra.mxu0 0.0
    %2492 = vmatpush.msra.mxu0 0.0
    %2493 = vmatpush.msra.mxu0 0.0
    %2494 = vmatpush.msra.mxu0 0.0
    %2495 = vmatpush.msra.mxu0 0.0
    %2496 = vmatpush.msra.mxu0 0.0
    %2497 = vmatpush.msra.mxu0 0.0
    %2498 = vmatpush.msra.mxu0 0.0
    %2499 = vmatpush.msra.mxu0 0.0
    %2500 = vmatpush.msra.mxu0 0.0
    %2501 = vmatpush.msra.mxu0 0.0
    %2502 = vmatpush.msra.mxu0 0.0
    %2503 = vmatpush.msra.mxu0 0.0
    %2504 = vmatpush.msra.mxu0 0.0
    %2505 = vmatpush.msra.mxu0 %v2413
    %2506 = vmatmul.f32.gmra.mxu0 %v2428
    %v2507 = vpop.f32.mrf.mxu0
    %v2508 = vadd.f32 %v2425, %v2507
    %2509 = vdwg.mxu0
    %2510 = vmatpush.msra.mxu0 0.0
    %2511 = vmatpush.msra.mxu0 0.0
    %2512 = vmatpush.msra.mxu0 0.0
    %2513 = vmatpush.msra.mxu0 0.0
    %2514 = vmatpush.msra.mxu0 0.0
    %2515 = vmatpush.msra.mxu0 0.0
    %2516 = vmatpush.msra.mxu0 0.0
    %2517 = vmatpush.msra.mxu0 0.0
    %2518 = vmatpush.msra.mxu0 0.0
    %2519 = vmatpush.msra.mxu0 0.0
    %2520 = vmatpush.msra.mxu0 0.0
    %2521 = vmatpush.msra.mxu0 0.0
    %2522 = vmatpush.msra.mxu0 0.0
    %2523 = vmatpush.msra.mxu0 0.0
    %2524 = vmatpush.msra.mxu0 0.0
    %2525 = vmatpush.msra.mxu0 %v2414
    %2526 = vmatmul.f32.gmra.mxu0 %v2428
    %v2527 = vpop.f32.mrf.mxu0
    %v2528 = vadd.f32 %v2425, %v2527
    %2529 = vdwg.mxu0
    %2530 = vmatpush.msra.mxu0 0.0
    %2531 = vmatpush.msra.mxu0 0.0
    %2532 = vmatpush.msra.mxu0 0.0
    %2533 = vmatpush.msra.mxu0 0.0
    %2534 = vmatpush.msra.mxu0 0.0
    %2535 = vmatpush.msra.mxu0 0.0
    %2536 = vmatpush.msra.mxu0 0.0
    %2537 = vmatpush.msra.mxu0 0.0
    %2538 = vmatpush.msra.mxu0 0.0
    %2539 = vmatpush.msra.mxu0 0.0
    %2540 = vmatpush.msra.mxu0 0.0
    %2541 = vmatpush.msra.mxu0 0.0
    %2542 = vmatpush.msra.mxu0 0.0
    %2543 = vmatpush.msra.mxu0 0.0
    %2544 = vmatpush.msra.mxu0 0.0
    %2545 = vmatpush.msra.mxu0 %v2415
    %2546 = vmatmul.f32.gmra.mxu0 %v2428
    %v2547 = vpop.f32.mrf.mxu0
    %v2548 = vadd.f32 %v2425, %v2547
    %2549 = vdwg.mxu0
    %2550 = vmatpush.msra.mxu0 0.0
    %2551 = vmatpush.msra.mxu0 0.0
    %2552 = vmatpush.msra.mxu0 0.0
    %2553 = vmatpush.msra.mxu0 0.0
    %2554 = vmatpush.msra.mxu0 0.0
    %2555 = vmatpush.msra.mxu0 0.0
    %2556 = vmatpush.msra.mxu0 0.0
    %2557 = vmatpush.msra.mxu0 0.0
    %2558 = vmatpush.msra.mxu0 0.0
    %2559 = vmatpush.msra.mxu0 0.0
    %2560 = vmatpush.msra.mxu0 0.0
    %2561 = vmatpush.msra.mxu0 0.0
    %2562 = vmatpush.msra.mxu0 0.0
    %2563 = vmatpush.msra.mxu0 0.0
    %2564 = vmatpush.msra.mxu0 0.0
    %2565 = vmatpush.msra.mxu0 %v2416
    %2566 = vmatmul.f32.gmra.mxu0 %v2428
    %v2567 = vpop.f32.mrf.mxu0
    %v2568 = vadd.f32 %v2425, %v2567
    %2569 = vdwg.mxu0
    %2570 = vmatpush.msra.mxu0 0.0
    %2571 = vmatpush.msra.mxu0 0.0
    %2572 = vmatpush.msra.mxu0 0.0
    %2573 = vmatpush.msra.mxu0 0.0
    %2574 = vmatpush.msra.mxu0 0.0
    %2575 = vmatpush.msra.mxu0 0.0
    %2576 = vmatpush.msra.mxu0 0.0
    %2577 = vmatpush.msra.mxu0 0.0
    %2578 = vmatpush.msra.mxu0 0.0
    %2579 = vmatpush.msra.mxu0 0.0
    %2580 = vmatpush.msra.mxu0 0.0
    %2581 = vmatpush.msra.mxu0 0.0
    %2582 = vmatpush.msra.mxu0 0.0
    %2583 = vmatpush.msra.mxu0 0.0
    %2584 = vmatpush.msra.mxu0 0.0
    %2585 = vmatpush.msra.mxu0 %v2417
    %2586 = vmatmul.f32.gmra.mxu0 %v2428
    %v2587 = vpop.f32.mrf.mxu0
    %v2588 = vadd.f32 %v2425, %v2587
    %2589 = vdwg.mxu0
    %v2590 = vadd.f32 %v2032, %v2448
    %v2591 = vadd.f32 %v2052, %v2468
    %v2592 = vadd.f32 %v2072, %v2488
    %v2593 = vadd.f32 %v2092, %v2508
    %v2594 = vadd.f32 %v2112, %v2528
    %v2595 = vadd.f32 %v2132, %v2548
    %v2596 = vadd.f32 %v2152, %v2568
    %v2597 = vadd.f32 %v2172, %v2588
    %v2598 = vmul.f32 %v2590, %v90
    %v2599 = vmul.f32 %v2591, %v91
    %v2600 = vmul.f32 %v2592, %v92
    %v2601 = vmul.f32 %v2593, %v93
    %v2602 = vmul.f32 %v2594, %v94
    %v2603 = vmul.f32 %v2595, %v95
    %v2604 = vmul.f32 %v2596, %v96
    %v2605 = vmul.f32 %v2597, %v97
    %2606 = vrot.lane.b32.xlu0 %v2598, 2
    %v2607 = vpop.permute.xlu0 %2606
    %2608 = vrot.lane.b32.xlu0 %v2599, 2
    %v2609 = vpop.permute.xlu0 %2608
    %2610 = vrot.lane.b32.xlu0 %v2600, 2
    %v2611 = vpop.permute.xlu0 %2610
    %2612 = vrot.lane.b32.xlu0 %v2601, 2
    %v2613 = vpop.permute.xlu0 %2612
    %2614 = vrot.lane.b32.xlu0 %v2602, 2
    %v2615 = vpop.permute.xlu0 %2614
    %2616 = vrot.lane.b32.xlu0 %v2603, 2
    %v2617 = vpop.permute.xlu0 %2616
    %2618 = vrot.lane.b32.xlu0 %v2604, 2
    %v2619 = vpop.permute.xlu0 %2618
    %2620 = vrot.lane.b32.xlu0 %v2605, 2
    %v2621 = vpop.permute.xlu0 %2620
    %v2622 = vsel %vm814, %v2619, %v2621
    %v2623 = vsel %vm814, %v2617, %v2619
    %v2624 = vsel %vm814, %v2615, %v2617
    %v2625 = vsel %vm814, %v2613, %v2615
    %v2626 = vsel %vm814, %v2611, %v2613
    %v2627 = vsel %vm814, %v2609, %v2611
    %v2628 = vsel %vm814, %v2607, %v2609
    %v2629 = vsel %vm814, %v2621, %v2607
    %v2630 = vsel %vm122, %v2629, 0.0
    %v2631 = vsel %vm123, %v2628, 0.0
    %v2632 = vsel %vm124, %v2627, 0.0
    %v2633 = vsel %vm125, %v2626, 0.0
    %v2634 = vsel %vm126, %v2625, 0.0
    %v2635 = vsel %vm127, %v2624, 0.0
    %v2636 = vsel %vm128, %v2623, 0.0
    %v2637 = vsel %vm129, %v2622, 0.0
    %2638 = vrot.lane.b32.xlu0 %v2598, 126
    %v2639 = vpop.permute.xlu0 %2638
    %2640 = vrot.lane.b32.xlu0 %v2599, 126
    %v2641 = vpop.permute.xlu0 %2640
    %2642 = vrot.lane.b32.xlu0 %v2600, 126
    %v2643 = vpop.permute.xlu0 %2642
    %2644 = vrot.lane.b32.xlu0 %v2601, 126
    %v2645 = vpop.permute.xlu0 %2644
    %2646 = vrot.lane.b32.xlu0 %v2602, 126
    %v2647 = vpop.permute.xlu0 %2646
    %2648 = vrot.lane.b32.xlu0 %v2603, 126
    %v2649 = vpop.permute.xlu0 %2648
    %2650 = vrot.lane.b32.xlu0 %v2604, 126
    %v2651 = vpop.permute.xlu0 %2650
    %2652 = vrot.lane.b32.xlu0 %v2605, 126
    %v2653 = vpop.permute.xlu0 %2652
    %v2654 = vsel %vm847, %v2651, %v2653
    %v2655 = vsel %vm847, %v2649, %v2651
    %v2656 = vsel %vm847, %v2647, %v2649
    %v2657 = vsel %vm847, %v2645, %v2647
    %v2658 = vsel %vm847, %v2643, %v2645
    %v2659 = vsel %vm847, %v2641, %v2643
    %v2660 = vsel %vm847, %v2639, %v2641
    %v2661 = vsel %vm847, %v2653, %v2639
    %v2662 = vsel %vm130, %v2660, 0.0
    %v2663 = vsel %vm131, %v2659, 0.0
    %v2664 = vsel %vm132, %v2658, 0.0
    %v2665 = vsel %vm133, %v2657, 0.0
    %v2666 = vsel %vm134, %v2656, 0.0
    %v2667 = vsel %vm135, %v2655, 0.0
    %v2668 = vsel %vm136, %v2654, 0.0
    %v2669 = vsel %vm137, %v2661, 0.0
    %s2670 = scalar_lea.vmem %s7, 32
    %v2671 = vld [vmem:[%s2670] sm:$0xff]
    %s2672 = scalar_lea.vmem %s8, 32
    %v2673 = vld [vmem:[%s2672] sm:$0xff]
    %2675 = vset.pattern.permute.xlu0 0
    %2676 = vperm.xlu0 %2675, %v2673
    %v2677 = vpop.permute.xlu0 %2676
    %v2680 = vsel %vm439, %v2671, 0
    %2682 = vmatpush.msra.mxu0 0.0
    %2683 = vmatpush.msra.mxu0 0.0
    %2684 = vmatpush.msra.mxu0 0.0
    %2685 = vmatpush.msra.mxu0 0.0
    %2686 = vmatpush.msra.mxu0 0.0
    %2687 = vmatpush.msra.mxu0 0.0
    %2688 = vmatpush.msra.mxu0 0.0
    %2689 = vmatpush.msra.mxu0 0.0
    %2690 = vmatpush.msra.mxu0 0.0
    %2691 = vmatpush.msra.mxu0 0.0
    %2692 = vmatpush.msra.mxu0 0.0
    %2693 = vmatpush.msra.mxu0 0.0
    %2694 = vmatpush.msra.mxu0 0.0
    %2695 = vmatpush.msra.mxu0 %v2662
    %2696 = vmatpush.msra.mxu0 %v2598
    %2697 = vmatpush.msra.mxu0 %v2630
    %2698 = vmatmul.f32.gmra.mxu0 %v2680
    %v2699 = vpop.f32.mrf.mxu0
    %v2700 = vadd.f32 %v2677, %v2699
    %2701 = vdwg.mxu0
    %2702 = vmatpush.msra.mxu0 0.0
    %2703 = vmatpush.msra.mxu0 0.0
    %2704 = vmatpush.msra.mxu0 0.0
    %2705 = vmatpush.msra.mxu0 0.0
    %2706 = vmatpush.msra.mxu0 0.0
    %2707 = vmatpush.msra.mxu0 0.0
    %2708 = vmatpush.msra.mxu0 0.0
    %2709 = vmatpush.msra.mxu0 0.0
    %2710 = vmatpush.msra.mxu0 0.0
    %2711 = vmatpush.msra.mxu0 0.0
    %2712 = vmatpush.msra.mxu0 0.0
    %2713 = vmatpush.msra.mxu0 0.0
    %2714 = vmatpush.msra.mxu0 0.0
    %2715 = vmatpush.msra.mxu0 %v2663
    %2716 = vmatpush.msra.mxu0 %v2599
    %2717 = vmatpush.msra.mxu0 %v2631
    %2718 = vmatmul.f32.gmra.mxu0 %v2680
    %v2719 = vpop.f32.mrf.mxu0
    %v2720 = vadd.f32 %v2677, %v2719
    %2721 = vdwg.mxu0
    %2722 = vmatpush.msra.mxu0 0.0
    %2723 = vmatpush.msra.mxu0 0.0
    %2724 = vmatpush.msra.mxu0 0.0
    %2725 = vmatpush.msra.mxu0 0.0
    %2726 = vmatpush.msra.mxu0 0.0
    %2727 = vmatpush.msra.mxu0 0.0
    %2728 = vmatpush.msra.mxu0 0.0
    %2729 = vmatpush.msra.mxu0 0.0
    %2730 = vmatpush.msra.mxu0 0.0
    %2731 = vmatpush.msra.mxu0 0.0
    %2732 = vmatpush.msra.mxu0 0.0
    %2733 = vmatpush.msra.mxu0 0.0
    %2734 = vmatpush.msra.mxu0 0.0
    %2735 = vmatpush.msra.mxu0 %v2664
    %2736 = vmatpush.msra.mxu0 %v2600
    %2737 = vmatpush.msra.mxu0 %v2632
    %2738 = vmatmul.f32.gmra.mxu0 %v2680
    %v2739 = vpop.f32.mrf.mxu0
    %v2740 = vadd.f32 %v2677, %v2739
    %2741 = vdwg.mxu0
    %2742 = vmatpush.msra.mxu0 0.0
    %2743 = vmatpush.msra.mxu0 0.0
    %2744 = vmatpush.msra.mxu0 0.0
    %2745 = vmatpush.msra.mxu0 0.0
    %2746 = vmatpush.msra.mxu0 0.0
    %2747 = vmatpush.msra.mxu0 0.0
    %2748 = vmatpush.msra.mxu0 0.0
    %2749 = vmatpush.msra.mxu0 0.0
    %2750 = vmatpush.msra.mxu0 0.0
    %2751 = vmatpush.msra.mxu0 0.0
    %2752 = vmatpush.msra.mxu0 0.0
    %2753 = vmatpush.msra.mxu0 0.0
    %2754 = vmatpush.msra.mxu0 0.0
    %2755 = vmatpush.msra.mxu0 %v2665
    %2756 = vmatpush.msra.mxu0 %v2601
    %2757 = vmatpush.msra.mxu0 %v2633
    %2758 = vmatmul.f32.gmra.mxu0 %v2680
    %v2759 = vpop.f32.mrf.mxu0
    %v2760 = vadd.f32 %v2677, %v2759
    %2761 = vdwg.mxu0
    %2762 = vmatpush.msra.mxu0 0.0
    %2763 = vmatpush.msra.mxu0 0.0
    %2764 = vmatpush.msra.mxu0 0.0
    %2765 = vmatpush.msra.mxu0 0.0
    %2766 = vmatpush.msra.mxu0 0.0
    %2767 = vmatpush.msra.mxu0 0.0
    %2768 = vmatpush.msra.mxu0 0.0
    %2769 = vmatpush.msra.mxu0 0.0
    %2770 = vmatpush.msra.mxu0 0.0
    %2771 = vmatpush.msra.mxu0 0.0
    %2772 = vmatpush.msra.mxu0 0.0
    %2773 = vmatpush.msra.mxu0 0.0
    %2774 = vmatpush.msra.mxu0 0.0
    %2775 = vmatpush.msra.mxu0 %v2666
    %2776 = vmatpush.msra.mxu0 %v2602
    %2777 = vmatpush.msra.mxu0 %v2634
    %2778 = vmatmul.f32.gmra.mxu0 %v2680
    %v2779 = vpop.f32.mrf.mxu0
    %v2780 = vadd.f32 %v2677, %v2779
    %2781 = vdwg.mxu0
    %2782 = vmatpush.msra.mxu0 0.0
    %2783 = vmatpush.msra.mxu0 0.0
    %2784 = vmatpush.msra.mxu0 0.0
    %2785 = vmatpush.msra.mxu0 0.0
    %2786 = vmatpush.msra.mxu0 0.0
    %2787 = vmatpush.msra.mxu0 0.0
    %2788 = vmatpush.msra.mxu0 0.0
    %2789 = vmatpush.msra.mxu0 0.0
    %2790 = vmatpush.msra.mxu0 0.0
    %2791 = vmatpush.msra.mxu0 0.0
    %2792 = vmatpush.msra.mxu0 0.0
    %2793 = vmatpush.msra.mxu0 0.0
    %2794 = vmatpush.msra.mxu0 0.0
    %2795 = vmatpush.msra.mxu0 %v2667
    %2796 = vmatpush.msra.mxu0 %v2603
    %2797 = vmatpush.msra.mxu0 %v2635
    %2798 = vmatmul.f32.gmra.mxu0 %v2680
    %v2799 = vpop.f32.mrf.mxu0
    %v2800 = vadd.f32 %v2677, %v2799
    %2801 = vdwg.mxu0
    %2802 = vmatpush.msra.mxu0 0.0
    %2803 = vmatpush.msra.mxu0 0.0
    %2804 = vmatpush.msra.mxu0 0.0
    %2805 = vmatpush.msra.mxu0 0.0
    %2806 = vmatpush.msra.mxu0 0.0
    %2807 = vmatpush.msra.mxu0 0.0
    %2808 = vmatpush.msra.mxu0 0.0
    %2809 = vmatpush.msra.mxu0 0.0
    %2810 = vmatpush.msra.mxu0 0.0
    %2811 = vmatpush.msra.mxu0 0.0
    %2812 = vmatpush.msra.mxu0 0.0
    %2813 = vmatpush.msra.mxu0 0.0
    %2814 = vmatpush.msra.mxu0 0.0
    %2815 = vmatpush.msra.mxu0 %v2668
    %2816 = vmatpush.msra.mxu0 %v2604
    %2817 = vmatpush.msra.mxu0 %v2636
    %2818 = vmatmul.f32.gmra.mxu0 %v2680
    %v2819 = vpop.f32.mrf.mxu0
    %v2820 = vadd.f32 %v2677, %v2819
    %2821 = vdwg.mxu0
    %2822 = vmatpush.msra.mxu0 0.0
    %2823 = vmatpush.msra.mxu0 0.0
    %2824 = vmatpush.msra.mxu0 0.0
    %2825 = vmatpush.msra.mxu0 0.0
    %2826 = vmatpush.msra.mxu0 0.0
    %2827 = vmatpush.msra.mxu0 0.0
    %2828 = vmatpush.msra.mxu0 0.0
    %2829 = vmatpush.msra.mxu0 0.0
    %2830 = vmatpush.msra.mxu0 0.0
    %2831 = vmatpush.msra.mxu0 0.0
    %2832 = vmatpush.msra.mxu0 0.0
    %2833 = vmatpush.msra.mxu0 0.0
    %2834 = vmatpush.msra.mxu0 0.0
    %2835 = vmatpush.msra.mxu0 %v2669
    %2836 = vmatpush.msra.mxu0 %v2605
    %2837 = vmatpush.msra.mxu0 %v2637
    %2838 = vmatmul.f32.gmra.mxu0 %v2680
    %v2839 = vpop.f32.mrf.mxu0
    %v2840 = vadd.f32 %v2677, %v2839
    %2841 = vdwg.mxu0
    %v2842 = vmax.f32 %v2700, 0.0
    %v2843 = vmax.f32 %v2720, 0.0
    %v2844 = vmax.f32 %v2740, 0.0
    %v2845 = vmax.f32 %v2760, 0.0
    %v2846 = vmax.f32 %v2780, 0.0
    %v2847 = vmax.f32 %v2800, 0.0
    %v2848 = vmax.f32 %v2820, 0.0
    %v2849 = vmax.f32 %v2840, 0.0
    %s2850 = scalar_lea.vmem %s9, 32
    %v2851 = vld [vmem:[%s2850] sm:$0xff]
    %s2852 = scalar_lea.vmem %s10, 32
    %v2853 = vld [vmem:[%s2852] sm:$0xff]
    %2855 = vset.pattern.permute.xlu0 0
    %2856 = vperm.xlu0 %2855, %v2853
    %v2857 = vpop.permute.xlu0 %2856
    %v2860 = vsel %vm618, %v2851, 0
    %2862 = vmatpush.msra.mxu0 0.0
    %2863 = vmatpush.msra.mxu0 0.0
    %2864 = vmatpush.msra.mxu0 0.0
    %2865 = vmatpush.msra.mxu0 0.0
    %2866 = vmatpush.msra.mxu0 0.0
    %2867 = vmatpush.msra.mxu0 0.0
    %2868 = vmatpush.msra.mxu0 0.0
    %2869 = vmatpush.msra.mxu0 0.0
    %2870 = vmatpush.msra.mxu0 0.0
    %2871 = vmatpush.msra.mxu0 0.0
    %2872 = vmatpush.msra.mxu0 0.0
    %2873 = vmatpush.msra.mxu0 0.0
    %2874 = vmatpush.msra.mxu0 0.0
    %2875 = vmatpush.msra.mxu0 0.0
    %2876 = vmatpush.msra.mxu0 0.0
    %2877 = vmatpush.msra.mxu0 %v2842
    %2878 = vmatmul.f32.gmra.mxu0 %v2860
    %v2879 = vpop.f32.mrf.mxu0
    %v2880 = vadd.f32 %v2857, %v2879
    %2881 = vdwg.mxu0
    %2882 = vmatpush.msra.mxu0 0.0
    %2883 = vmatpush.msra.mxu0 0.0
    %2884 = vmatpush.msra.mxu0 0.0
    %2885 = vmatpush.msra.mxu0 0.0
    %2886 = vmatpush.msra.mxu0 0.0
    %2887 = vmatpush.msra.mxu0 0.0
    %2888 = vmatpush.msra.mxu0 0.0
    %2889 = vmatpush.msra.mxu0 0.0
    %2890 = vmatpush.msra.mxu0 0.0
    %2891 = vmatpush.msra.mxu0 0.0
    %2892 = vmatpush.msra.mxu0 0.0
    %2893 = vmatpush.msra.mxu0 0.0
    %2894 = vmatpush.msra.mxu0 0.0
    %2895 = vmatpush.msra.mxu0 0.0
    %2896 = vmatpush.msra.mxu0 0.0
    %2897 = vmatpush.msra.mxu0 %v2843
    %2898 = vmatmul.f32.gmra.mxu0 %v2860
    %v2899 = vpop.f32.mrf.mxu0
    %v2900 = vadd.f32 %v2857, %v2899
    %2901 = vdwg.mxu0
    %2902 = vmatpush.msra.mxu0 0.0
    %2903 = vmatpush.msra.mxu0 0.0
    %2904 = vmatpush.msra.mxu0 0.0
    %2905 = vmatpush.msra.mxu0 0.0
    %2906 = vmatpush.msra.mxu0 0.0
    %2907 = vmatpush.msra.mxu0 0.0
    %2908 = vmatpush.msra.mxu0 0.0
    %2909 = vmatpush.msra.mxu0 0.0
    %2910 = vmatpush.msra.mxu0 0.0
    %2911 = vmatpush.msra.mxu0 0.0
    %2912 = vmatpush.msra.mxu0 0.0
    %2913 = vmatpush.msra.mxu0 0.0
    %2914 = vmatpush.msra.mxu0 0.0
    %2915 = vmatpush.msra.mxu0 0.0
    %2916 = vmatpush.msra.mxu0 0.0
    %2917 = vmatpush.msra.mxu0 %v2844
    %2918 = vmatmul.f32.gmra.mxu0 %v2860
    %v2919 = vpop.f32.mrf.mxu0
    %v2920 = vadd.f32 %v2857, %v2919
    %2921 = vdwg.mxu0
    %2922 = vmatpush.msra.mxu0 0.0
    %2923 = vmatpush.msra.mxu0 0.0
    %2924 = vmatpush.msra.mxu0 0.0
    %2925 = vmatpush.msra.mxu0 0.0
    %2926 = vmatpush.msra.mxu0 0.0
    %2927 = vmatpush.msra.mxu0 0.0
    %2928 = vmatpush.msra.mxu0 0.0
    %2929 = vmatpush.msra.mxu0 0.0
    %2930 = vmatpush.msra.mxu0 0.0
    %2931 = vmatpush.msra.mxu0 0.0
    %2932 = vmatpush.msra.mxu0 0.0
    %2933 = vmatpush.msra.mxu0 0.0
    %2934 = vmatpush.msra.mxu0 0.0
    %2935 = vmatpush.msra.mxu0 0.0
    %2936 = vmatpush.msra.mxu0 0.0
    %2937 = vmatpush.msra.mxu0 %v2845
    %2938 = vmatmul.f32.gmra.mxu0 %v2860
    %v2939 = vpop.f32.mrf.mxu0
    %v2940 = vadd.f32 %v2857, %v2939
    %2941 = vdwg.mxu0
    %2942 = vmatpush.msra.mxu0 0.0
    %2943 = vmatpush.msra.mxu0 0.0
    %2944 = vmatpush.msra.mxu0 0.0
    %2945 = vmatpush.msra.mxu0 0.0
    %2946 = vmatpush.msra.mxu0 0.0
    %2947 = vmatpush.msra.mxu0 0.0
    %2948 = vmatpush.msra.mxu0 0.0
    %2949 = vmatpush.msra.mxu0 0.0
    %2950 = vmatpush.msra.mxu0 0.0
    %2951 = vmatpush.msra.mxu0 0.0
    %2952 = vmatpush.msra.mxu0 0.0
    %2953 = vmatpush.msra.mxu0 0.0
    %2954 = vmatpush.msra.mxu0 0.0
    %2955 = vmatpush.msra.mxu0 0.0
    %2956 = vmatpush.msra.mxu0 0.0
    %2957 = vmatpush.msra.mxu0 %v2846
    %2958 = vmatmul.f32.gmra.mxu0 %v2860
    %v2959 = vpop.f32.mrf.mxu0
    %v2960 = vadd.f32 %v2857, %v2959
    %2961 = vdwg.mxu0
    %2962 = vmatpush.msra.mxu0 0.0
    %2963 = vmatpush.msra.mxu0 0.0
    %2964 = vmatpush.msra.mxu0 0.0
    %2965 = vmatpush.msra.mxu0 0.0
    %2966 = vmatpush.msra.mxu0 0.0
    %2967 = vmatpush.msra.mxu0 0.0
    %2968 = vmatpush.msra.mxu0 0.0
    %2969 = vmatpush.msra.mxu0 0.0
    %2970 = vmatpush.msra.mxu0 0.0
    %2971 = vmatpush.msra.mxu0 0.0
    %2972 = vmatpush.msra.mxu0 0.0
    %2973 = vmatpush.msra.mxu0 0.0
    %2974 = vmatpush.msra.mxu0 0.0
    %2975 = vmatpush.msra.mxu0 0.0
    %2976 = vmatpush.msra.mxu0 0.0
    %2977 = vmatpush.msra.mxu0 %v2847
    %2978 = vmatmul.f32.gmra.mxu0 %v2860
    %v2979 = vpop.f32.mrf.mxu0
    %v2980 = vadd.f32 %v2857, %v2979
    %2981 = vdwg.mxu0
    %2982 = vmatpush.msra.mxu0 0.0
    %2983 = vmatpush.msra.mxu0 0.0
    %2984 = vmatpush.msra.mxu0 0.0
    %2985 = vmatpush.msra.mxu0 0.0
    %2986 = vmatpush.msra.mxu0 0.0
    %2987 = vmatpush.msra.mxu0 0.0
    %2988 = vmatpush.msra.mxu0 0.0
    %2989 = vmatpush.msra.mxu0 0.0
    %2990 = vmatpush.msra.mxu0 0.0
    %2991 = vmatpush.msra.mxu0 0.0
    %2992 = vmatpush.msra.mxu0 0.0
    %2993 = vmatpush.msra.mxu0 0.0
    %2994 = vmatpush.msra.mxu0 0.0
    %2995 = vmatpush.msra.mxu0 0.0
    %2996 = vmatpush.msra.mxu0 0.0
    %2997 = vmatpush.msra.mxu0 %v2848
    %2998 = vmatmul.f32.gmra.mxu0 %v2860
    %v2999 = vpop.f32.mrf.mxu0
    %v3000 = vadd.f32 %v2857, %v2999
    %3001 = vdwg.mxu0
    %3002 = vmatpush.msra.mxu0 0.0
    %3003 = vmatpush.msra.mxu0 0.0
    %3004 = vmatpush.msra.mxu0 0.0
    %3005 = vmatpush.msra.mxu0 0.0
    %3006 = vmatpush.msra.mxu0 0.0
    %3007 = vmatpush.msra.mxu0 0.0
    %3008 = vmatpush.msra.mxu0 0.0
    %3009 = vmatpush.msra.mxu0 0.0
    %3010 = vmatpush.msra.mxu0 0.0
    %3011 = vmatpush.msra.mxu0 0.0
    %3012 = vmatpush.msra.mxu0 0.0
    %3013 = vmatpush.msra.mxu0 0.0
    %3014 = vmatpush.msra.mxu0 0.0
    %3015 = vmatpush.msra.mxu0 0.0
    %3016 = vmatpush.msra.mxu0 0.0
    %3017 = vmatpush.msra.mxu0 %v2849
    %3018 = vmatmul.f32.gmra.mxu0 %v2860
    %v3019 = vpop.f32.mrf.mxu0
    %v3020 = vadd.f32 %v2857, %v3019
    %3021 = vdwg.mxu0
    %v3022 = vadd.f32 %v2598, %v2880
    %v3023 = vadd.f32 %v2599, %v2900
    %v3024 = vadd.f32 %v2600, %v2920
    %v3025 = vadd.f32 %v2601, %v2940
    %v3026 = vadd.f32 %v2602, %v2960
    %v3027 = vadd.f32 %v2603, %v2980
    %v3028 = vadd.f32 %v2604, %v3000
    %v3029 = vadd.f32 %v2605, %v3020
    %v3030 = vmul.f32 %v3022, %v90
    %v3031 = vmul.f32 %v3023, %v91
    %v3032 = vmul.f32 %v3024, %v92
    %v3033 = vmul.f32 %v3025, %v93
    %v3034 = vmul.f32 %v3026, %v94
    %v3035 = vmul.f32 %v3027, %v95
    %v3036 = vmul.f32 %v3028, %v96
    %v3037 = vmul.f32 %v3029, %v97
    %3038 = vrot.lane.b32.xlu0 %v3030, 4
    %v3039 = vpop.permute.xlu0 %3038
    %3040 = vrot.lane.b32.xlu0 %v3031, 4
    %v3041 = vpop.permute.xlu0 %3040
    %3042 = vrot.lane.b32.xlu0 %v3032, 4
    %v3043 = vpop.permute.xlu0 %3042
    %3044 = vrot.lane.b32.xlu0 %v3033, 4
    %v3045 = vpop.permute.xlu0 %3044
    %3046 = vrot.lane.b32.xlu0 %v3034, 4
    %v3047 = vpop.permute.xlu0 %3046
    %3048 = vrot.lane.b32.xlu0 %v3035, 4
    %v3049 = vpop.permute.xlu0 %3048
    %3050 = vrot.lane.b32.xlu0 %v3036, 4
    %v3051 = vpop.permute.xlu0 %3050
    %3052 = vrot.lane.b32.xlu0 %v3037, 4
    %v3053 = vpop.permute.xlu0 %3052
    %v3054 = vsel %vm1248, %v3051, %v3053
    %v3055 = vsel %vm1248, %v3049, %v3051
    %v3056 = vsel %vm1248, %v3047, %v3049
    %v3057 = vsel %vm1248, %v3045, %v3047
    %v3058 = vsel %vm1248, %v3043, %v3045
    %v3059 = vsel %vm1248, %v3041, %v3043
    %v3060 = vsel %vm1248, %v3039, %v3041
    %v3061 = vsel %vm1248, %v3053, %v3039
    %v3062 = vsel %vm138, %v3061, 0.0
    %v3063 = vsel %vm139, %v3060, 0.0
    %v3064 = vsel %vm140, %v3059, 0.0
    %v3065 = vsel %vm141, %v3058, 0.0
    %v3066 = vsel %vm142, %v3057, 0.0
    %v3067 = vsel %vm143, %v3056, 0.0
    %v3068 = vsel %vm144, %v3055, 0.0
    %v3069 = vsel %vm145, %v3054, 0.0
    %3070 = vrot.lane.b32.xlu0 %v3030, 124
    %v3071 = vpop.permute.xlu0 %3070
    %3072 = vrot.lane.b32.xlu0 %v3031, 124
    %v3073 = vpop.permute.xlu0 %3072
    %3074 = vrot.lane.b32.xlu0 %v3032, 124
    %v3075 = vpop.permute.xlu0 %3074
    %3076 = vrot.lane.b32.xlu0 %v3033, 124
    %v3077 = vpop.permute.xlu0 %3076
    %3078 = vrot.lane.b32.xlu0 %v3034, 124
    %v3079 = vpop.permute.xlu0 %3078
    %3080 = vrot.lane.b32.xlu0 %v3035, 124
    %v3081 = vpop.permute.xlu0 %3080
    %3082 = vrot.lane.b32.xlu0 %v3036, 124
    %v3083 = vpop.permute.xlu0 %3082
    %3084 = vrot.lane.b32.xlu0 %v3037, 124
    %v3085 = vpop.permute.xlu0 %3084
    %v3086 = vsel %vm1281, %v3083, %v3085
    %v3087 = vsel %vm1281, %v3081, %v3083
    %v3088 = vsel %vm1281, %v3079, %v3081
    %v3089 = vsel %vm1281, %v3077, %v3079
    %v3090 = vsel %vm1281, %v3075, %v3077
    %v3091 = vsel %vm1281, %v3073, %v3075
    %v3092 = vsel %vm1281, %v3071, %v3073
    %v3093 = vsel %vm1281, %v3085, %v3071
    %v3094 = vsel %vm146, %v3092, 0.0
    %v3095 = vsel %vm147, %v3091, 0.0
    %v3096 = vsel %vm148, %v3090, 0.0
    %v3097 = vsel %vm149, %v3089, 0.0
    %v3098 = vsel %vm150, %v3088, 0.0
    %v3099 = vsel %vm151, %v3087, 0.0
    %v3100 = vsel %vm152, %v3086, 0.0
    %v3101 = vsel %vm153, %v3093, 0.0
    %s3102 = scalar_lea.vmem %s7, 40
    %v3103 = vld [vmem:[%s3102] sm:$0xff]
    %s3104 = scalar_lea.vmem %s8, 40
    %v3105 = vld [vmem:[%s3104] sm:$0xff]
    %3107 = vset.pattern.permute.xlu0 0
    %3108 = vperm.xlu0 %3107, %v3105
    %v3109 = vpop.permute.xlu0 %3108
    %v3112 = vsel %vm439, %v3103, 0
    %3114 = vmatpush.msra.mxu0 0.0
    %3115 = vmatpush.msra.mxu0 0.0
    %3116 = vmatpush.msra.mxu0 0.0
    %3117 = vmatpush.msra.mxu0 0.0
    %3118 = vmatpush.msra.mxu0 0.0
    %3119 = vmatpush.msra.mxu0 0.0
    %3120 = vmatpush.msra.mxu0 0.0
    %3121 = vmatpush.msra.mxu0 0.0
    %3122 = vmatpush.msra.mxu0 0.0
    %3123 = vmatpush.msra.mxu0 0.0
    %3124 = vmatpush.msra.mxu0 0.0
    %3125 = vmatpush.msra.mxu0 0.0
    %3126 = vmatpush.msra.mxu0 0.0
    %3127 = vmatpush.msra.mxu0 %v3094
    %3128 = vmatpush.msra.mxu0 %v3030
    %3129 = vmatpush.msra.mxu0 %v3062
    %3130 = vmatmul.f32.gmra.mxu0 %v3112
    %v3131 = vpop.f32.mrf.mxu0
    %v3132 = vadd.f32 %v3109, %v3131
    %3133 = vdwg.mxu0
    %3134 = vmatpush.msra.mxu0 0.0
    %3135 = vmatpush.msra.mxu0 0.0
    %3136 = vmatpush.msra.mxu0 0.0
    %3137 = vmatpush.msra.mxu0 0.0
    %3138 = vmatpush.msra.mxu0 0.0
    %3139 = vmatpush.msra.mxu0 0.0
    %3140 = vmatpush.msra.mxu0 0.0
    %3141 = vmatpush.msra.mxu0 0.0
    %3142 = vmatpush.msra.mxu0 0.0
    %3143 = vmatpush.msra.mxu0 0.0
    %3144 = vmatpush.msra.mxu0 0.0
    %3145 = vmatpush.msra.mxu0 0.0
    %3146 = vmatpush.msra.mxu0 0.0
    %3147 = vmatpush.msra.mxu0 %v3095
    %3148 = vmatpush.msra.mxu0 %v3031
    %3149 = vmatpush.msra.mxu0 %v3063
    %3150 = vmatmul.f32.gmra.mxu0 %v3112
    %v3151 = vpop.f32.mrf.mxu0
    %v3152 = vadd.f32 %v3109, %v3151
    %3153 = vdwg.mxu0
    %3154 = vmatpush.msra.mxu0 0.0
    %3155 = vmatpush.msra.mxu0 0.0
    %3156 = vmatpush.msra.mxu0 0.0
    %3157 = vmatpush.msra.mxu0 0.0
    %3158 = vmatpush.msra.mxu0 0.0
    %3159 = vmatpush.msra.mxu0 0.0
    %3160 = vmatpush.msra.mxu0 0.0
    %3161 = vmatpush.msra.mxu0 0.0
    %3162 = vmatpush.msra.mxu0 0.0
    %3163 = vmatpush.msra.mxu0 0.0
    %3164 = vmatpush.msra.mxu0 0.0
    %3165 = vmatpush.msra.mxu0 0.0
    %3166 = vmatpush.msra.mxu0 0.0
    %3167 = vmatpush.msra.mxu0 %v3096
    %3168 = vmatpush.msra.mxu0 %v3032
    %3169 = vmatpush.msra.mxu0 %v3064
    %3170 = vmatmul.f32.gmra.mxu0 %v3112
    %v3171 = vpop.f32.mrf.mxu0
    %v3172 = vadd.f32 %v3109, %v3171
    %3173 = vdwg.mxu0
    %3174 = vmatpush.msra.mxu0 0.0
    %3175 = vmatpush.msra.mxu0 0.0
    %3176 = vmatpush.msra.mxu0 0.0
    %3177 = vmatpush.msra.mxu0 0.0
    %3178 = vmatpush.msra.mxu0 0.0
    %3179 = vmatpush.msra.mxu0 0.0
    %3180 = vmatpush.msra.mxu0 0.0
    %3181 = vmatpush.msra.mxu0 0.0
    %3182 = vmatpush.msra.mxu0 0.0
    %3183 = vmatpush.msra.mxu0 0.0
    %3184 = vmatpush.msra.mxu0 0.0
    %3185 = vmatpush.msra.mxu0 0.0
    %3186 = vmatpush.msra.mxu0 0.0
    %3187 = vmatpush.msra.mxu0 %v3097
    %3188 = vmatpush.msra.mxu0 %v3033
    %3189 = vmatpush.msra.mxu0 %v3065
    %3190 = vmatmul.f32.gmra.mxu0 %v3112
    %v3191 = vpop.f32.mrf.mxu0
    %v3192 = vadd.f32 %v3109, %v3191
    %3193 = vdwg.mxu0
    %3194 = vmatpush.msra.mxu0 0.0
    %3195 = vmatpush.msra.mxu0 0.0
    %3196 = vmatpush.msra.mxu0 0.0
    %3197 = vmatpush.msra.mxu0 0.0
    %3198 = vmatpush.msra.mxu0 0.0
    %3199 = vmatpush.msra.mxu0 0.0
    %3200 = vmatpush.msra.mxu0 0.0
    %3201 = vmatpush.msra.mxu0 0.0
    %3202 = vmatpush.msra.mxu0 0.0
    %3203 = vmatpush.msra.mxu0 0.0
    %3204 = vmatpush.msra.mxu0 0.0
    %3205 = vmatpush.msra.mxu0 0.0
    %3206 = vmatpush.msra.mxu0 0.0
    %3207 = vmatpush.msra.mxu0 %v3098
    %3208 = vmatpush.msra.mxu0 %v3034
    %3209 = vmatpush.msra.mxu0 %v3066
    %3210 = vmatmul.f32.gmra.mxu0 %v3112
    %v3211 = vpop.f32.mrf.mxu0
    %v3212 = vadd.f32 %v3109, %v3211
    %3213 = vdwg.mxu0
    %3214 = vmatpush.msra.mxu0 0.0
    %3215 = vmatpush.msra.mxu0 0.0
    %3216 = vmatpush.msra.mxu0 0.0
    %3217 = vmatpush.msra.mxu0 0.0
    %3218 = vmatpush.msra.mxu0 0.0
    %3219 = vmatpush.msra.mxu0 0.0
    %3220 = vmatpush.msra.mxu0 0.0
    %3221 = vmatpush.msra.mxu0 0.0
    %3222 = vmatpush.msra.mxu0 0.0
    %3223 = vmatpush.msra.mxu0 0.0
    %3224 = vmatpush.msra.mxu0 0.0
    %3225 = vmatpush.msra.mxu0 0.0
    %3226 = vmatpush.msra.mxu0 0.0
    %3227 = vmatpush.msra.mxu0 %v3099
    %3228 = vmatpush.msra.mxu0 %v3035
    %3229 = vmatpush.msra.mxu0 %v3067
    %3230 = vmatmul.f32.gmra.mxu0 %v3112
    %v3231 = vpop.f32.mrf.mxu0
    %v3232 = vadd.f32 %v3109, %v3231
    %3233 = vdwg.mxu0
    %3234 = vmatpush.msra.mxu0 0.0
    %3235 = vmatpush.msra.mxu0 0.0
    %3236 = vmatpush.msra.mxu0 0.0
    %3237 = vmatpush.msra.mxu0 0.0
    %3238 = vmatpush.msra.mxu0 0.0
    %3239 = vmatpush.msra.mxu0 0.0
    %3240 = vmatpush.msra.mxu0 0.0
    %3241 = vmatpush.msra.mxu0 0.0
    %3242 = vmatpush.msra.mxu0 0.0
    %3243 = vmatpush.msra.mxu0 0.0
    %3244 = vmatpush.msra.mxu0 0.0
    %3245 = vmatpush.msra.mxu0 0.0
    %3246 = vmatpush.msra.mxu0 0.0
    %3247 = vmatpush.msra.mxu0 %v3100
    %3248 = vmatpush.msra.mxu0 %v3036
    %3249 = vmatpush.msra.mxu0 %v3068
    %3250 = vmatmul.f32.gmra.mxu0 %v3112
    %v3251 = vpop.f32.mrf.mxu0
    %v3252 = vadd.f32 %v3109, %v3251
    %3253 = vdwg.mxu0
    %3254 = vmatpush.msra.mxu0 0.0
    %3255 = vmatpush.msra.mxu0 0.0
    %3256 = vmatpush.msra.mxu0 0.0
    %3257 = vmatpush.msra.mxu0 0.0
    %3258 = vmatpush.msra.mxu0 0.0
    %3259 = vmatpush.msra.mxu0 0.0
    %3260 = vmatpush.msra.mxu0 0.0
    %3261 = vmatpush.msra.mxu0 0.0
    %3262 = vmatpush.msra.mxu0 0.0
    %3263 = vmatpush.msra.mxu0 0.0
    %3264 = vmatpush.msra.mxu0 0.0
    %3265 = vmatpush.msra.mxu0 0.0
    %3266 = vmatpush.msra.mxu0 0.0
    %3267 = vmatpush.msra.mxu0 %v3101
    %3268 = vmatpush.msra.mxu0 %v3037
    %3269 = vmatpush.msra.mxu0 %v3069
    %3270 = vmatmul.f32.gmra.mxu0 %v3112
    %v3271 = vpop.f32.mrf.mxu0
    %v3272 = vadd.f32 %v3109, %v3271
    %3273 = vdwg.mxu0
    %v3274 = vmax.f32 %v3132, 0.0
    %v3275 = vmax.f32 %v3152, 0.0
    %v3276 = vmax.f32 %v3172, 0.0
    %v3277 = vmax.f32 %v3192, 0.0
    %v3278 = vmax.f32 %v3212, 0.0
    %v3279 = vmax.f32 %v3232, 0.0
    %v3280 = vmax.f32 %v3252, 0.0
    %v3281 = vmax.f32 %v3272, 0.0
    %s3282 = scalar_lea.vmem %s9, 40
    %v3283 = vld [vmem:[%s3282] sm:$0xff]
    %s3284 = scalar_lea.vmem %s10, 40
    %v3285 = vld [vmem:[%s3284] sm:$0xff]
    %3287 = vset.pattern.permute.xlu0 0
    %3288 = vperm.xlu0 %3287, %v3285
    %v3289 = vpop.permute.xlu0 %3288
    %v3292 = vsel %vm618, %v3283, 0
    %3294 = vmatpush.msra.mxu0 0.0
    %3295 = vmatpush.msra.mxu0 0.0
    %3296 = vmatpush.msra.mxu0 0.0
    %3297 = vmatpush.msra.mxu0 0.0
    %3298 = vmatpush.msra.mxu0 0.0
    %3299 = vmatpush.msra.mxu0 0.0
    %3300 = vmatpush.msra.mxu0 0.0
    %3301 = vmatpush.msra.mxu0 0.0
    %3302 = vmatpush.msra.mxu0 0.0
    %3303 = vmatpush.msra.mxu0 0.0
    %3304 = vmatpush.msra.mxu0 0.0
    %3305 = vmatpush.msra.mxu0 0.0
    %3306 = vmatpush.msra.mxu0 0.0
    %3307 = vmatpush.msra.mxu0 0.0
    %3308 = vmatpush.msra.mxu0 0.0
    %3309 = vmatpush.msra.mxu0 %v3274
    %3310 = vmatmul.f32.gmra.mxu0 %v3292
    %v3311 = vpop.f32.mrf.mxu0
    %v3312 = vadd.f32 %v3289, %v3311
    %3313 = vdwg.mxu0
    %3314 = vmatpush.msra.mxu0 0.0
    %3315 = vmatpush.msra.mxu0 0.0
    %3316 = vmatpush.msra.mxu0 0.0
    %3317 = vmatpush.msra.mxu0 0.0
    %3318 = vmatpush.msra.mxu0 0.0
    %3319 = vmatpush.msra.mxu0 0.0
    %3320 = vmatpush.msra.mxu0 0.0
    %3321 = vmatpush.msra.mxu0 0.0
    %3322 = vmatpush.msra.mxu0 0.0
    %3323 = vmatpush.msra.mxu0 0.0
    %3324 = vmatpush.msra.mxu0 0.0
    %3325 = vmatpush.msra.mxu0 0.0
    %3326 = vmatpush.msra.mxu0 0.0
    %3327 = vmatpush.msra.mxu0 0.0
    %3328 = vmatpush.msra.mxu0 0.0
    %3329 = vmatpush.msra.mxu0 %v3275
    %3330 = vmatmul.f32.gmra.mxu0 %v3292
    %v3331 = vpop.f32.mrf.mxu0
    %v3332 = vadd.f32 %v3289, %v3331
    %3333 = vdwg.mxu0
    %3334 = vmatpush.msra.mxu0 0.0
    %3335 = vmatpush.msra.mxu0 0.0
    %3336 = vmatpush.msra.mxu0 0.0
    %3337 = vmatpush.msra.mxu0 0.0
    %3338 = vmatpush.msra.mxu0 0.0
    %3339 = vmatpush.msra.mxu0 0.0
    %3340 = vmatpush.msra.mxu0 0.0
    %3341 = vmatpush.msra.mxu0 0.0
    %3342 = vmatpush.msra.mxu0 0.0
    %3343 = vmatpush.msra.mxu0 0.0
    %3344 = vmatpush.msra.mxu0 0.0
    %3345 = vmatpush.msra.mxu0 0.0
    %3346 = vmatpush.msra.mxu0 0.0
    %3347 = vmatpush.msra.mxu0 0.0
    %3348 = vmatpush.msra.mxu0 0.0
    %3349 = vmatpush.msra.mxu0 %v3276
    %3350 = vmatmul.f32.gmra.mxu0 %v3292
    %v3351 = vpop.f32.mrf.mxu0
    %v3352 = vadd.f32 %v3289, %v3351
    %3353 = vdwg.mxu0
    %3354 = vmatpush.msra.mxu0 0.0
    %3355 = vmatpush.msra.mxu0 0.0
    %3356 = vmatpush.msra.mxu0 0.0
    %3357 = vmatpush.msra.mxu0 0.0
    %3358 = vmatpush.msra.mxu0 0.0
    %3359 = vmatpush.msra.mxu0 0.0
    %3360 = vmatpush.msra.mxu0 0.0
    %3361 = vmatpush.msra.mxu0 0.0
    %3362 = vmatpush.msra.mxu0 0.0
    %3363 = vmatpush.msra.mxu0 0.0
    %3364 = vmatpush.msra.mxu0 0.0
    %3365 = vmatpush.msra.mxu0 0.0
    %3366 = vmatpush.msra.mxu0 0.0
    %3367 = vmatpush.msra.mxu0 0.0
    %3368 = vmatpush.msra.mxu0 0.0
    %3369 = vmatpush.msra.mxu0 %v3277
    %3370 = vmatmul.f32.gmra.mxu0 %v3292
    %v3371 = vpop.f32.mrf.mxu0
    %v3372 = vadd.f32 %v3289, %v3371
    %3373 = vdwg.mxu0
    %3374 = vmatpush.msra.mxu0 0.0
    %3375 = vmatpush.msra.mxu0 0.0
    %3376 = vmatpush.msra.mxu0 0.0
    %3377 = vmatpush.msra.mxu0 0.0
    %3378 = vmatpush.msra.mxu0 0.0
    %3379 = vmatpush.msra.mxu0 0.0
    %3380 = vmatpush.msra.mxu0 0.0
    %3381 = vmatpush.msra.mxu0 0.0
    %3382 = vmatpush.msra.mxu0 0.0
    %3383 = vmatpush.msra.mxu0 0.0
    %3384 = vmatpush.msra.mxu0 0.0
    %3385 = vmatpush.msra.mxu0 0.0
    %3386 = vmatpush.msra.mxu0 0.0
    %3387 = vmatpush.msra.mxu0 0.0
    %3388 = vmatpush.msra.mxu0 0.0
    %3389 = vmatpush.msra.mxu0 %v3278
    %3390 = vmatmul.f32.gmra.mxu0 %v3292
    %v3391 = vpop.f32.mrf.mxu0
    %v3392 = vadd.f32 %v3289, %v3391
    %3393 = vdwg.mxu0
    %3394 = vmatpush.msra.mxu0 0.0
    %3395 = vmatpush.msra.mxu0 0.0
    %3396 = vmatpush.msra.mxu0 0.0
    %3397 = vmatpush.msra.mxu0 0.0
    %3398 = vmatpush.msra.mxu0 0.0
    %3399 = vmatpush.msra.mxu0 0.0
    %3400 = vmatpush.msra.mxu0 0.0
    %3401 = vmatpush.msra.mxu0 0.0
    %3402 = vmatpush.msra.mxu0 0.0
    %3403 = vmatpush.msra.mxu0 0.0
    %3404 = vmatpush.msra.mxu0 0.0
    %3405 = vmatpush.msra.mxu0 0.0
    %3406 = vmatpush.msra.mxu0 0.0
    %3407 = vmatpush.msra.mxu0 0.0
    %3408 = vmatpush.msra.mxu0 0.0
    %3409 = vmatpush.msra.mxu0 %v3279
    %3410 = vmatmul.f32.gmra.mxu0 %v3292
    %v3411 = vpop.f32.mrf.mxu0
    %v3412 = vadd.f32 %v3289, %v3411
    %3413 = vdwg.mxu0
    %3414 = vmatpush.msra.mxu0 0.0
    %3415 = vmatpush.msra.mxu0 0.0
    %3416 = vmatpush.msra.mxu0 0.0
    %3417 = vmatpush.msra.mxu0 0.0
    %3418 = vmatpush.msra.mxu0 0.0
    %3419 = vmatpush.msra.mxu0 0.0
    %3420 = vmatpush.msra.mxu0 0.0
    %3421 = vmatpush.msra.mxu0 0.0
    %3422 = vmatpush.msra.mxu0 0.0
    %3423 = vmatpush.msra.mxu0 0.0
    %3424 = vmatpush.msra.mxu0 0.0
    %3425 = vmatpush.msra.mxu0 0.0
    %3426 = vmatpush.msra.mxu0 0.0
    %3427 = vmatpush.msra.mxu0 0.0
    %3428 = vmatpush.msra.mxu0 0.0
    %3429 = vmatpush.msra.mxu0 %v3280
    %3430 = vmatmul.f32.gmra.mxu0 %v3292
    %v3431 = vpop.f32.mrf.mxu0
    %v3432 = vadd.f32 %v3289, %v3431
    %3433 = vdwg.mxu0
    %3434 = vmatpush.msra.mxu0 0.0
    %3435 = vmatpush.msra.mxu0 0.0
    %3436 = vmatpush.msra.mxu0 0.0
    %3437 = vmatpush.msra.mxu0 0.0
    %3438 = vmatpush.msra.mxu0 0.0
    %3439 = vmatpush.msra.mxu0 0.0
    %3440 = vmatpush.msra.mxu0 0.0
    %3441 = vmatpush.msra.mxu0 0.0
    %3442 = vmatpush.msra.mxu0 0.0
    %3443 = vmatpush.msra.mxu0 0.0
    %3444 = vmatpush.msra.mxu0 0.0
    %3445 = vmatpush.msra.mxu0 0.0
    %3446 = vmatpush.msra.mxu0 0.0
    %3447 = vmatpush.msra.mxu0 0.0
    %3448 = vmatpush.msra.mxu0 0.0
    %3449 = vmatpush.msra.mxu0 %v3281
    %3450 = vmatmul.f32.gmra.mxu0 %v3292
    %v3451 = vpop.f32.mrf.mxu0
    %v3452 = vadd.f32 %v3289, %v3451
    %3453 = vdwg.mxu0
    %v3454 = vadd.f32 %v3030, %v3312
    %v3455 = vadd.f32 %v3031, %v3332
    %v3456 = vadd.f32 %v3032, %v3352
    %v3457 = vadd.f32 %v3033, %v3372
    %v3458 = vadd.f32 %v3034, %v3392
    %v3459 = vadd.f32 %v3035, %v3412
    %v3460 = vadd.f32 %v3036, %v3432
    %v3461 = vadd.f32 %v3037, %v3452
    %v3462 = vmul.f32 %v3454, %v90
    %v3463 = vmul.f32 %v3455, %v91
    %v3464 = vmul.f32 %v3456, %v92
    %v3465 = vmul.f32 %v3457, %v93
    %v3466 = vmul.f32 %v3458, %v94
    %v3467 = vmul.f32 %v3459, %v95
    %v3468 = vmul.f32 %v3460, %v96
    %v3469 = vmul.f32 %v3461, %v97
    %s3470 = scalar_lea.vmem [#allocation5], 8
    %v3471 = vld [vmem:[%s3470] sm:$0xff]
    %s3472 = scalar_lea.vmem %s12, 8
    %v3473 = vld [vmem:[%s3472] sm:$0xff]
    %3475 = vset.pattern.permute.xlu0 0
    %3476 = vperm.xlu0 %3475, %v3473
    %v3477 = vpop.permute.xlu0 %3476
    %v3480 = vsel %vm618, %v3471, 0
    %3482 = vmatpush.msra.mxu0 0.0
    %3483 = vmatpush.msra.mxu0 0.0
    %3484 = vmatpush.msra.mxu0 0.0
    %3485 = vmatpush.msra.mxu0 0.0
    %3486 = vmatpush.msra.mxu0 0.0
    %3487 = vmatpush.msra.mxu0 0.0
    %3488 = vmatpush.msra.mxu0 0.0
    %3489 = vmatpush.msra.mxu0 0.0
    %3490 = vmatpush.msra.mxu0 0.0
    %3491 = vmatpush.msra.mxu0 0.0
    %3492 = vmatpush.msra.mxu0 0.0
    %3493 = vmatpush.msra.mxu0 0.0
    %3494 = vmatpush.msra.mxu0 0.0
    %3495 = vmatpush.msra.mxu0 0.0
    %3496 = vmatpush.msra.mxu0 0.0
    %3497 = vmatpush.msra.mxu0 %v3462
    %3498 = vmatmul.f32.gmra.mxu0 %v3480
    %v3499 = vpop.f32.mrf.mxu0
    %v3500 = vadd.f32 %v3477, %v3499
    %3501 = vdwg.mxu0
    %3502 = vmatpush.msra.mxu0 0.0
    %3503 = vmatpush.msra.mxu0 0.0
    %3504 = vmatpush.msra.mxu0 0.0
    %3505 = vmatpush.msra.mxu0 0.0
    %3506 = vmatpush.msra.mxu0 0.0
    %3507 = vmatpush.msra.mxu0 0.0
    %3508 = vmatpush.msra.mxu0 0.0
    %3509 = vmatpush.msra.mxu0 0.0
    %3510 = vmatpush.msra.mxu0 0.0
    %3511 = vmatpush.msra.mxu0 0.0
    %3512 = vmatpush.msra.mxu0 0.0
    %3513 = vmatpush.msra.mxu0 0.0
    %3514 = vmatpush.msra.mxu0 0.0
    %3515 = vmatpush.msra.mxu0 0.0
    %3516 = vmatpush.msra.mxu0 0.0
    %3517 = vmatpush.msra.mxu0 %v3463
    %3518 = vmatmul.f32.gmra.mxu0 %v3480
    %v3519 = vpop.f32.mrf.mxu0
    %v3520 = vadd.f32 %v3477, %v3519
    %3521 = vdwg.mxu0
    %3522 = vmatpush.msra.mxu0 0.0
    %3523 = vmatpush.msra.mxu0 0.0
    %3524 = vmatpush.msra.mxu0 0.0
    %3525 = vmatpush.msra.mxu0 0.0
    %3526 = vmatpush.msra.mxu0 0.0
    %3527 = vmatpush.msra.mxu0 0.0
    %3528 = vmatpush.msra.mxu0 0.0
    %3529 = vmatpush.msra.mxu0 0.0
    %3530 = vmatpush.msra.mxu0 0.0
    %3531 = vmatpush.msra.mxu0 0.0
    %3532 = vmatpush.msra.mxu0 0.0
    %3533 = vmatpush.msra.mxu0 0.0
    %3534 = vmatpush.msra.mxu0 0.0
    %3535 = vmatpush.msra.mxu0 0.0
    %3536 = vmatpush.msra.mxu0 0.0
    %3537 = vmatpush.msra.mxu0 %v3464
    %3538 = vmatmul.f32.gmra.mxu0 %v3480
    %v3539 = vpop.f32.mrf.mxu0
    %v3540 = vadd.f32 %v3477, %v3539
    %3541 = vdwg.mxu0
    %3542 = vmatpush.msra.mxu0 0.0
    %3543 = vmatpush.msra.mxu0 0.0
    %3544 = vmatpush.msra.mxu0 0.0
    %3545 = vmatpush.msra.mxu0 0.0
    %3546 = vmatpush.msra.mxu0 0.0
    %3547 = vmatpush.msra.mxu0 0.0
    %3548 = vmatpush.msra.mxu0 0.0
    %3549 = vmatpush.msra.mxu0 0.0
    %3550 = vmatpush.msra.mxu0 0.0
    %3551 = vmatpush.msra.mxu0 0.0
    %3552 = vmatpush.msra.mxu0 0.0
    %3553 = vmatpush.msra.mxu0 0.0
    %3554 = vmatpush.msra.mxu0 0.0
    %3555 = vmatpush.msra.mxu0 0.0
    %3556 = vmatpush.msra.mxu0 0.0
    %3557 = vmatpush.msra.mxu0 %v3465
    %3558 = vmatmul.f32.gmra.mxu0 %v3480
    %v3559 = vpop.f32.mrf.mxu0
    %v3560 = vadd.f32 %v3477, %v3559
    %3561 = vdwg.mxu0
    %3562 = vmatpush.msra.mxu0 0.0
    %3563 = vmatpush.msra.mxu0 0.0
    %3564 = vmatpush.msra.mxu0 0.0
    %3565 = vmatpush.msra.mxu0 0.0
    %3566 = vmatpush.msra.mxu0 0.0
    %3567 = vmatpush.msra.mxu0 0.0
    %3568 = vmatpush.msra.mxu0 0.0
    %3569 = vmatpush.msra.mxu0 0.0
    %3570 = vmatpush.msra.mxu0 0.0
    %3571 = vmatpush.msra.mxu0 0.0
    %3572 = vmatpush.msra.mxu0 0.0
    %3573 = vmatpush.msra.mxu0 0.0
    %3574 = vmatpush.msra.mxu0 0.0
    %3575 = vmatpush.msra.mxu0 0.0
    %3576 = vmatpush.msra.mxu0 0.0
    %3577 = vmatpush.msra.mxu0 %v3466
    %3578 = vmatmul.f32.gmra.mxu0 %v3480
    %v3579 = vpop.f32.mrf.mxu0
    %v3580 = vadd.f32 %v3477, %v3579
    %3581 = vdwg.mxu0
    %3582 = vmatpush.msra.mxu0 0.0
    %3583 = vmatpush.msra.mxu0 0.0
    %3584 = vmatpush.msra.mxu0 0.0
    %3585 = vmatpush.msra.mxu0 0.0
    %3586 = vmatpush.msra.mxu0 0.0
    %3587 = vmatpush.msra.mxu0 0.0
    %3588 = vmatpush.msra.mxu0 0.0
    %3589 = vmatpush.msra.mxu0 0.0
    %3590 = vmatpush.msra.mxu0 0.0
    %3591 = vmatpush.msra.mxu0 0.0
    %3592 = vmatpush.msra.mxu0 0.0
    %3593 = vmatpush.msra.mxu0 0.0
    %3594 = vmatpush.msra.mxu0 0.0
    %3595 = vmatpush.msra.mxu0 0.0
    %3596 = vmatpush.msra.mxu0 0.0
    %3597 = vmatpush.msra.mxu0 %v3467
    %3598 = vmatmul.f32.gmra.mxu0 %v3480
    %v3599 = vpop.f32.mrf.mxu0
    %v3600 = vadd.f32 %v3477, %v3599
    %3601 = vdwg.mxu0
    %3602 = vmatpush.msra.mxu0 0.0
    %3603 = vmatpush.msra.mxu0 0.0
    %3604 = vmatpush.msra.mxu0 0.0
    %3605 = vmatpush.msra.mxu0 0.0
    %3606 = vmatpush.msra.mxu0 0.0
    %3607 = vmatpush.msra.mxu0 0.0
    %3608 = vmatpush.msra.mxu0 0.0
    %3609 = vmatpush.msra.mxu0 0.0
    %3610 = vmatpush.msra.mxu0 0.0
    %3611 = vmatpush.msra.mxu0 0.0
    %3612 = vmatpush.msra.mxu0 0.0
    %3613 = vmatpush.msra.mxu0 0.0
    %3614 = vmatpush.msra.mxu0 0.0
    %3615 = vmatpush.msra.mxu0 0.0
    %3616 = vmatpush.msra.mxu0 0.0
    %3617 = vmatpush.msra.mxu0 %v3468
    %3618 = vmatmul.f32.gmra.mxu0 %v3480
    %v3619 = vpop.f32.mrf.mxu0
    %v3620 = vadd.f32 %v3477, %v3619
    %3621 = vdwg.mxu0
    %3622 = vmatpush.msra.mxu0 0.0
    %3623 = vmatpush.msra.mxu0 0.0
    %3624 = vmatpush.msra.mxu0 0.0
    %3625 = vmatpush.msra.mxu0 0.0
    %3626 = vmatpush.msra.mxu0 0.0
    %3627 = vmatpush.msra.mxu0 0.0
    %3628 = vmatpush.msra.mxu0 0.0
    %3629 = vmatpush.msra.mxu0 0.0
    %3630 = vmatpush.msra.mxu0 0.0
    %3631 = vmatpush.msra.mxu0 0.0
    %3632 = vmatpush.msra.mxu0 0.0
    %3633 = vmatpush.msra.mxu0 0.0
    %3634 = vmatpush.msra.mxu0 0.0
    %3635 = vmatpush.msra.mxu0 0.0
    %3636 = vmatpush.msra.mxu0 0.0
    %3637 = vmatpush.msra.mxu0 %v3469
    %3638 = vmatmul.f32.gmra.mxu0 %v3480
    %v3639 = vpop.f32.mrf.mxu0
    %v3640 = vadd.f32 %v3477, %v3639
    %3641 = vdwg.mxu0
    %v3642 = vmul.f32 %v3500, %v90
    %v3643 = vmul.f32 %v3520, %v91
    %v3644 = vmul.f32 %v3540, %v92
    %v3645 = vmul.f32 %v3560, %v93
    %v3646 = vmul.f32 %v3580, %v94
    %v3647 = vmul.f32 %v3600, %v95
    %v3648 = vmul.f32 %v3620, %v96
    %v3649 = vmul.f32 %v3640, %v97
    %s3650 = scalar_lea.vmem [#allocation7], 64
    %3651 = vst [vmem:[%s3650] sm:$0xff] %v3642
    %3652 = vst [vmem:[%s3650 + $0x8] sm:$0xff] %v3643
    %3653 = vst [vmem:[%s3650 + $0x10] sm:$0xff] %v3644
    %3654 = vst [vmem:[%s3650 + $0x18] sm:$0xff] %v3645
    %3655 = vst [vmem:[%s3650 + $0x20] sm:$0xff] %v3646
    %3656 = vst [vmem:[%s3650 + $0x28] sm:$0xff] %v3647
    %3657 = vst [vmem:[%s3650 + $0x30] sm:$0xff] %v3648
    %3658 = vst [vmem:[%s3650 + $0x38] sm:$0xff] %v3649
    %v3659 = vsel %vm156, %v3642, -1e+30
    %v3660 = vsel %vm156, %v3643, -1e+30
    %v3661 = vsel %vm156, %v3644, -1e+30
    %v3662 = vsel %vm156, %v3645, -1e+30
    %v3663 = vsel %vm156, %v3646, -1e+30
    %v3664 = vsel %vm156, %v3647, -1e+30
    %v3665 = vsel %vm156, %v3648, -1e+30
    %v3666 = vsel %vm156, %v3649, -1e+30
    %v3667 = vrot.slane %v3659, 4
    %v3668 = vmax.f32 %v3659, %v3667
    %v3669 = vrot.slane %v3668, 2
    %v3670 = vmax.f32 %v3668, %v3669
    %v3671 = vrot.slane %v3670, 1
    %v3672 = vmax.f32 %v3670, %v3671
    %v3673 = vrot.slane %v3660, 4
    %v3674 = vmax.f32 %v3660, %v3673
    %v3675 = vrot.slane %v3674, 2
    %v3676 = vmax.f32 %v3674, %v3675
    %v3677 = vrot.slane %v3676, 1
    %v3678 = vmax.f32 %v3676, %v3677
    %v3679 = vrot.slane %v3661, 4
    %v3680 = vmax.f32 %v3661, %v3679
    %v3681 = vrot.slane %v3680, 2
    %v3682 = vmax.f32 %v3680, %v3681
    %v3683 = vrot.slane %v3682, 1
    %v3684 = vmax.f32 %v3682, %v3683
    %v3685 = vrot.slane %v3662, 4
    %v3686 = vmax.f32 %v3662, %v3685
    %v3687 = vrot.slane %v3686, 2
    %v3688 = vmax.f32 %v3686, %v3687
    %v3689 = vrot.slane %v3688, 1
    %v3690 = vmax.f32 %v3688, %v3689
    %v3691 = vrot.slane %v3663, 4
    %v3692 = vmax.f32 %v3663, %v3691
    %v3693 = vrot.slane %v3692, 2
    %v3694 = vmax.f32 %v3692, %v3693
    %v3695 = vrot.slane %v3694, 1
    %v3696 = vmax.f32 %v3694, %v3695
    %v3697 = vrot.slane %v3664, 4
    %v3698 = vmax.f32 %v3664, %v3697
    %v3699 = vrot.slane %v3698, 2
    %v3700 = vmax.f32 %v3698, %v3699
    %v3701 = vrot.slane %v3700, 1
    %v3702 = vmax.f32 %v3700, %v3701
    %v3703 = vrot.slane %v3665, 4
    %v3704 = vmax.f32 %v3665, %v3703
    %v3705 = vrot.slane %v3704, 2
    %v3706 = vmax.f32 %v3704, %v3705
    %v3707 = vrot.slane %v3706, 1
    %v3708 = vmax.f32 %v3706, %v3707
    %v3709 = vrot.slane %v3666, 4
    %v3710 = vmax.f32 %v3666, %v3709
    %v3711 = vrot.slane %v3710, 2
    %v3712 = vmax.f32 %v3710, %v3711
    %v3713 = vrot.slane %v3712, 1
    %v3714 = vmax.f32 %v3712, %v3713
    %v3715 = vsub.f32 %v3659, %v3672
    %v3716 = vsub.f32 %v3660, %v3678
    %v3717 = vsub.f32 %v3661, %v3684
    %v3718 = vsub.f32 %v3662, %v3690
    %v3719 = vsub.f32 %v3663, %v3696
    %v3720 = vsub.f32 %v3664, %v3702
    %v3721 = vsub.f32 %v3665, %v3708
    %v3722 = vsub.f32 %v3666, %v3714
    %v3723 = vmul.f32 %v3715, 1.442695
    %v3724 = vpow.pop %v3723
    %v3725 = vmul.f32 %v3716, 1.442695
    %v3726 = vpow.pop %v3725
    %v3727 = vmul.f32 %v3717, 1.442695
    %v3728 = vpow.pop %v3727
    %v3729 = vmul.f32 %v3718, 1.442695
    %v3730 = vpow.pop %v3729
    %v3731 = vmul.f32 %v3719, 1.442695
    %v3732 = vpow.pop %v3731
    %v3733 = vmul.f32 %v3720, 1.442695
    %v3734 = vpow.pop %v3733
    %v3735 = vmul.f32 %v3721, 1.442695
    %v3736 = vpow.pop %v3735
    %v3737 = vmul.f32 %v3722, 1.442695
    %v3738 = vpow.pop %v3737
    %v3739 = vrot.slane %v3724, 4
    %v3740 = vadd.f32 %v3724, %v3739
    %v3741 = vrot.slane %v3740, 2
    %v3742 = vadd.f32 %v3740, %v3741
    %v3743 = vrot.slane %v3742, 1
    %v3744 = vadd.f32 %v3742, %v3743
    %v3745 = vrot.slane %v3726, 4
    %v3746 = vadd.f32 %v3726, %v3745
    %v3747 = vrot.slane %v3746, 2
    %v3748 = vadd.f32 %v3746, %v3747
    %v3749 = vrot.slane %v3748, 1
    %v3750 = vadd.f32 %v3748, %v3749
    %v3751 = vrot.slane %v3728, 4
    %v3752 = vadd.f32 %v3728, %v3751
    %v3753 = vrot.slane %v3752, 2
    %v3754 = vadd.f32 %v3752, %v3753
    %v3755 = vrot.slane %v3754, 1
    %v3756 = vadd.f32 %v3754, %v3755
    %v3757 = vrot.slane %v3730, 4
    %v3758 = vadd.f32 %v3730, %v3757
    %v3759 = vrot.slane %v3758, 2
    %v3760 = vadd.f32 %v3758, %v3759
    %v3761 = vrot.slane %v3760, 1
    %v3762 = vadd.f32 %v3760, %v3761
    %v3763 = vrot.slane %v3732, 4
    %v3764 = vadd.f32 %v3732, %v3763
    %v3765 = vrot.slane %v3764, 2
    %v3766 = vadd.f32 %v3764, %v3765
    %v3767 = vrot.slane %v3766, 1
    %v3768 = vadd.f32 %v3766, %v3767
    %v3769 = vrot.slane %v3734, 4
    %v3770 = vadd.f32 %v3734, %v3769
    %v3771 = vrot.slane %v3770, 2
    %v3772 = vadd.f32 %v3770, %v3771
    %v3773 = vrot.slane %v3772, 1
    %v3774 = vadd.f32 %v3772, %v3773
    %v3775 = vrot.slane %v3736, 4
    %v3776 = vadd.f32 %v3736, %v3775
    %v3777 = vrot.slane %v3776, 2
    %v3778 = vadd.f32 %v3776, %v3777
    %v3779 = vrot.slane %v3778, 1
    %v3780 = vadd.f32 %v3778, %v3779
    %v3781 = vrot.slane %v3738, 4
    %v3782 = vadd.f32 %v3738, %v3781
    %v3783 = vrot.slane %v3782, 2
    %v3784 = vadd.f32 %v3782, %v3783
    %v3785 = vrot.slane %v3784, 1
    %v3786 = vadd.f32 %v3784, %v3785
    %v3787 = vrcp.pop %v3744
    %v3788 = vrcp.pop %v3750
    %v3789 = vrcp.pop %v3756
    %v3790 = vrcp.pop %v3762
    %v3791 = vrcp.pop %v3768
    %v3792 = vrcp.pop %v3774
    %v3793 = vrcp.pop %v3780
    %v3794 = vrcp.pop %v3786
    %v3795 = vmul.f32 %v3724, %v3787
    %v3796 = vmul.f32 %v3726, %v3788
    %v3797 = vmul.f32 %v3728, %v3789
    %v3798 = vmul.f32 %v3730, %v3790
    %v3799 = vmul.f32 %v3732, %v3791
    %v3800 = vmul.f32 %v3734, %v3792
    %v3801 = vmul.f32 %v3736, %v3793
    %v3802 = vmul.f32 %v3738, %v3794
    %v3803 = vmul.f32 %v3795, %v90
    %v3804 = vmul.f32 %v3796, %v91
    %v3805 = vmul.f32 %v3797, %v92
    %v3806 = vmul.f32 %v3798, %v93
    %v3807 = vmul.f32 %v3799, %v94
    %v3808 = vmul.f32 %v3800, %v95
    %v3809 = vmul.f32 %v3801, %v96
    %v3810 = vmul.f32 %v3802, %v97
    %s3811 = scalar_lea.vmem %s5, 8
    %v3812 = vld [vmem:[%s3811] sm:$0xff]
    %s3813 = scalar_lea.vmem %s6, 8
    %v3814 = vld [vmem:[%s3813] sm:$0xff]
    %3816 = vset.pattern.permute.xlu0 0
    %3817 = vperm.xlu0 %3816, %v3814
    %v3818 = vpop.permute.xlu0 %3817
    %v3821 = vsel %vm618, %v3812, 0
    %3823 = vmatpush.msra.mxu0 0.0
    %3824 = vmatpush.msra.mxu0 0.0
    %3825 = vmatpush.msra.mxu0 0.0
    %3826 = vmatpush.msra.mxu0 0.0
    %3827 = vmatpush.msra.mxu0 0.0
    %3828 = vmatpush.msra.mxu0 0.0
    %3829 = vmatpush.msra.mxu0 0.0
    %3830 = vmatpush.msra.mxu0 0.0
    %3831 = vmatpush.msra.mxu0 0.0
    %3832 = vmatpush.msra.mxu0 0.0
    %3833 = vmatpush.msra.mxu0 0.0
    %3834 = vmatpush.msra.mxu0 0.0
    %3835 = vmatpush.msra.mxu0 0.0
    %3836 = vmatpush.msra.mxu0 0.0
    %3837 = vmatpush.msra.mxu0 0.0
    %3838 = vmatpush.msra.mxu0 %v3803
    %3839 = vmatmul.f32.gmra.mxu0 %v3821
    %v3840 = vpop.f32.mrf.mxu0
    %v3841 = vadd.f32 %v3818, %v3840
    %3842 = vdwg.mxu0
    %3843 = vmatpush.msra.mxu0 0.0
    %3844 = vmatpush.msra.mxu0 0.0
    %3845 = vmatpush.msra.mxu0 0.0
    %3846 = vmatpush.msra.mxu0 0.0
    %3847 = vmatpush.msra.mxu0 0.0
    %3848 = vmatpush.msra.mxu0 0.0
    %3849 = vmatpush.msra.mxu0 0.0
    %3850 = vmatpush.msra.mxu0 0.0
    %3851 = vmatpush.msra.mxu0 0.0
    %3852 = vmatpush.msra.mxu0 0.0
    %3853 = vmatpush.msra.mxu0 0.0
    %3854 = vmatpush.msra.mxu0 0.0
    %3855 = vmatpush.msra.mxu0 0.0
    %3856 = vmatpush.msra.mxu0 0.0
    %3857 = vmatpush.msra.mxu0 0.0
    %3858 = vmatpush.msra.mxu0 %v3804
    %3859 = vmatmul.f32.gmra.mxu0 %v3821
    %v3860 = vpop.f32.mrf.mxu0
    %v3861 = vadd.f32 %v3818, %v3860
    %3862 = vdwg.mxu0
    %3863 = vmatpush.msra.mxu0 0.0
    %3864 = vmatpush.msra.mxu0 0.0
    %3865 = vmatpush.msra.mxu0 0.0
    %3866 = vmatpush.msra.mxu0 0.0
    %3867 = vmatpush.msra.mxu0 0.0
    %3868 = vmatpush.msra.mxu0 0.0
    %3869 = vmatpush.msra.mxu0 0.0
    %3870 = vmatpush.msra.mxu0 0.0
    %3871 = vmatpush.msra.mxu0 0.0
    %3872 = vmatpush.msra.mxu0 0.0
    %3873 = vmatpush.msra.mxu0 0.0
    %3874 = vmatpush.msra.mxu0 0.0
    %3875 = vmatpush.msra.mxu0 0.0
    %3876 = vmatpush.msra.mxu0 0.0
    %3877 = vmatpush.msra.mxu0 0.0
    %3878 = vmatpush.msra.mxu0 %v3805
    %3879 = vmatmul.f32.gmra.mxu0 %v3821
    %v3880 = vpop.f32.mrf.mxu0
    %v3881 = vadd.f32 %v3818, %v3880
    %3882 = vdwg.mxu0
    %3883 = vmatpush.msra.mxu0 0.0
    %3884 = vmatpush.msra.mxu0 0.0
    %3885 = vmatpush.msra.mxu0 0.0
    %3886 = vmatpush.msra.mxu0 0.0
    %3887 = vmatpush.msra.mxu0 0.0
    %3888 = vmatpush.msra.mxu0 0.0
    %3889 = vmatpush.msra.mxu0 0.0
    %3890 = vmatpush.msra.mxu0 0.0
    %3891 = vmatpush.msra.mxu0 0.0
    %3892 = vmatpush.msra.mxu0 0.0
    %3893 = vmatpush.msra.mxu0 0.0
    %3894 = vmatpush.msra.mxu0 0.0
    %3895 = vmatpush.msra.mxu0 0.0
    %3896 = vmatpush.msra.mxu0 0.0
    %3897 = vmatpush.msra.mxu0 0.0
    %3898 = vmatpush.msra.mxu0 %v3806
    %3899 = vmatmul.f32.gmra.mxu0 %v3821
    %v3900 = vpop.f32.mrf.mxu0
    %v3901 = vadd.f32 %v3818, %v3900
    %3902 = vdwg.mxu0
    %3903 = vmatpush.msra.mxu0 0.0
    %3904 = vmatpush.msra.mxu0 0.0
    %3905 = vmatpush.msra.mxu0 0.0
    %3906 = vmatpush.msra.mxu0 0.0
    %3907 = vmatpush.msra.mxu0 0.0
    %3908 = vmatpush.msra.mxu0 0.0
    %3909 = vmatpush.msra.mxu0 0.0
    %3910 = vmatpush.msra.mxu0 0.0
    %3911 = vmatpush.msra.mxu0 0.0
    %3912 = vmatpush.msra.mxu0 0.0
    %3913 = vmatpush.msra.mxu0 0.0
    %3914 = vmatpush.msra.mxu0 0.0
    %3915 = vmatpush.msra.mxu0 0.0
    %3916 = vmatpush.msra.mxu0 0.0
    %3917 = vmatpush.msra.mxu0 0.0
    %3918 = vmatpush.msra.mxu0 %v3807
    %3919 = vmatmul.f32.gmra.mxu0 %v3821
    %v3920 = vpop.f32.mrf.mxu0
    %v3921 = vadd.f32 %v3818, %v3920
    %3922 = vdwg.mxu0
    %3923 = vmatpush.msra.mxu0 0.0
    %3924 = vmatpush.msra.mxu0 0.0
    %3925 = vmatpush.msra.mxu0 0.0
    %3926 = vmatpush.msra.mxu0 0.0
    %3927 = vmatpush.msra.mxu0 0.0
    %3928 = vmatpush.msra.mxu0 0.0
    %3929 = vmatpush.msra.mxu0 0.0
    %3930 = vmatpush.msra.mxu0 0.0
    %3931 = vmatpush.msra.mxu0 0.0
    %3932 = vmatpush.msra.mxu0 0.0
    %3933 = vmatpush.msra.mxu0 0.0
    %3934 = vmatpush.msra.mxu0 0.0
    %3935 = vmatpush.msra.mxu0 0.0
    %3936 = vmatpush.msra.mxu0 0.0
    %3937 = vmatpush.msra.mxu0 0.0
    %3938 = vmatpush.msra.mxu0 %v3808
    %3939 = vmatmul.f32.gmra.mxu0 %v3821
    %v3940 = vpop.f32.mrf.mxu0
    %v3941 = vadd.f32 %v3818, %v3940
    %3942 = vdwg.mxu0
    %3943 = vmatpush.msra.mxu0 0.0
    %3944 = vmatpush.msra.mxu0 0.0
    %3945 = vmatpush.msra.mxu0 0.0
    %3946 = vmatpush.msra.mxu0 0.0
    %3947 = vmatpush.msra.mxu0 0.0
    %3948 = vmatpush.msra.mxu0 0.0
    %3949 = vmatpush.msra.mxu0 0.0
    %3950 = vmatpush.msra.mxu0 0.0
    %3951 = vmatpush.msra.mxu0 0.0
    %3952 = vmatpush.msra.mxu0 0.0
    %3953 = vmatpush.msra.mxu0 0.0
    %3954 = vmatpush.msra.mxu0 0.0
    %3955 = vmatpush.msra.mxu0 0.0
    %3956 = vmatpush.msra.mxu0 0.0
    %3957 = vmatpush.msra.mxu0 0.0
    %3958 = vmatpush.msra.mxu0 %v3809
    %3959 = vmatmul.f32.gmra.mxu0 %v3821
    %v3960 = vpop.f32.mrf.mxu0
    %v3961 = vadd.f32 %v3818, %v3960
    %3962 = vdwg.mxu0
    %3963 = vmatpush.msra.mxu0 0.0
    %3964 = vmatpush.msra.mxu0 0.0
    %3965 = vmatpush.msra.mxu0 0.0
    %3966 = vmatpush.msra.mxu0 0.0
    %3967 = vmatpush.msra.mxu0 0.0
    %3968 = vmatpush.msra.mxu0 0.0
    %3969 = vmatpush.msra.mxu0 0.0
    %3970 = vmatpush.msra.mxu0 0.0
    %3971 = vmatpush.msra.mxu0 0.0
    %3972 = vmatpush.msra.mxu0 0.0
    %3973 = vmatpush.msra.mxu0 0.0
    %3974 = vmatpush.msra.mxu0 0.0
    %3975 = vmatpush.msra.mxu0 0.0
    %3976 = vmatpush.msra.mxu0 0.0
    %3977 = vmatpush.msra.mxu0 0.0
    %3978 = vmatpush.msra.mxu0 %v3810
    %3979 = vmatmul.f32.gmra.mxu0 %v3821
    %v3980 = vpop.f32.mrf.mxu0
    %v3981 = vadd.f32 %v3818, %v3980
    %3982 = vdwg.mxu0
    %3983 = vrot.lane.b32.xlu0 %v3841, 1
    %v3984 = vpop.permute.xlu0 %3983
    %3985 = vrot.lane.b32.xlu0 %v3861, 1
    %v3986 = vpop.permute.xlu0 %3985
    %3987 = vrot.lane.b32.xlu0 %v3881, 1
    %v3988 = vpop.permute.xlu0 %3987
    %3989 = vrot.lane.b32.xlu0 %v3901, 1
    %v3990 = vpop.permute.xlu0 %3989
    %3991 = vrot.lane.b32.xlu0 %v3921, 1
    %v3992 = vpop.permute.xlu0 %3991
    %3993 = vrot.lane.b32.xlu0 %v3941, 1
    %v3994 = vpop.permute.xlu0 %3993
    %3995 = vrot.lane.b32.xlu0 %v3961, 1
    %v3996 = vpop.permute.xlu0 %3995
    %3997 = vrot.lane.b32.xlu0 %v3981, 1
    %v3998 = vpop.permute.xlu0 %3997
    %v3999 = vsel %vm382, %v3996, %v3998
    %v4000 = vsel %vm382, %v3994, %v3996
    %v4001 = vsel %vm382, %v3992, %v3994
    %v4002 = vsel %vm382, %v3990, %v3992
    %v4003 = vsel %vm382, %v3988, %v3990
    %v4004 = vsel %vm382, %v3986, %v3988
    %v4005 = vsel %vm382, %v3984, %v3986
    %v4006 = vsel %vm382, %v3998, %v3984
    %v4007 = vsel %vm106, %v4006, 0.0
    %v4008 = vsel %vm107, %v4005, 0.0
    %v4009 = vsel %vm108, %v4004, 0.0
    %v4010 = vsel %vm109, %v4003, 0.0
    %v4011 = vsel %vm110, %v4002, 0.0
    %v4012 = vsel %vm111, %v4001, 0.0
    %v4013 = vsel %vm112, %v4000, 0.0
    %v4014 = vsel %vm113, %v3999, 0.0
    %4015 = vrot.lane.b32.xlu0 %v3841, 127
    %v4016 = vpop.permute.xlu0 %4015
    %4017 = vrot.lane.b32.xlu0 %v3861, 127
    %v4018 = vpop.permute.xlu0 %4017
    %4019 = vrot.lane.b32.xlu0 %v3881, 127
    %v4020 = vpop.permute.xlu0 %4019
    %4021 = vrot.lane.b32.xlu0 %v3901, 127
    %v4022 = vpop.permute.xlu0 %4021
    %4023 = vrot.lane.b32.xlu0 %v3921, 127
    %v4024 = vpop.permute.xlu0 %4023
    %4025 = vrot.lane.b32.xlu0 %v3941, 127
    %v4026 = vpop.permute.xlu0 %4025
    %4027 = vrot.lane.b32.xlu0 %v3961, 127
    %v4028 = vpop.permute.xlu0 %4027
    %4029 = vrot.lane.b32.xlu0 %v3981, 127
    %v4030 = vpop.permute.xlu0 %4029
    %v4031 = vsel %vm415, %v4028, %v4030
    %v4032 = vsel %vm415, %v4026, %v4028
    %v4033 = vsel %vm415, %v4024, %v4026
    %v4034 = vsel %vm415, %v4022, %v4024
    %v4035 = vsel %vm415, %v4020, %v4022
    %v4036 = vsel %vm415, %v4018, %v4020
    %v4037 = vsel %vm415, %v4016, %v4018
    %v4038 = vsel %vm415, %v4030, %v4016
    %v4039 = vsel %vm114, %v4037, 0.0
    %v4040 = vsel %vm115, %v4036, 0.0
    %v4041 = vsel %vm116, %v4035, 0.0
    %v4042 = vsel %vm117, %v4034, 0.0
    %v4043 = vsel %vm118, %v4033, 0.0
    %v4044 = vsel %vm119, %v4032, 0.0
    %v4045 = vsel %vm120, %v4031, 0.0
    %v4046 = vsel %vm121, %v4038, 0.0
    %s4047 = scalar_lea.vmem %s7, 48
    %v4048 = vld [vmem:[%s4047] sm:$0xff]
    %s4049 = scalar_lea.vmem %s8, 48
    %v4050 = vld [vmem:[%s4049] sm:$0xff]
    %4052 = vset.pattern.permute.xlu0 0
    %4053 = vperm.xlu0 %4052, %v4050
    %v4054 = vpop.permute.xlu0 %4053
    %v4057 = vsel %vm439, %v4048, 0
    %4059 = vmatpush.msra.mxu0 0.0
    %4060 = vmatpush.msra.mxu0 0.0
    %4061 = vmatpush.msra.mxu0 0.0
    %4062 = vmatpush.msra.mxu0 0.0
    %4063 = vmatpush.msra.mxu0 0.0
    %4064 = vmatpush.msra.mxu0 0.0
    %4065 = vmatpush.msra.mxu0 0.0
    %4066 = vmatpush.msra.mxu0 0.0
    %4067 = vmatpush.msra.mxu0 0.0
    %4068 = vmatpush.msra.mxu0 0.0
    %4069 = vmatpush.msra.mxu0 0.0
    %4070 = vmatpush.msra.mxu0 0.0
    %4071 = vmatpush.msra.mxu0 0.0
    %4072 = vmatpush.msra.mxu0 %v4039
    %4073 = vmatpush.msra.mxu0 %v3841
    %4074 = vmatpush.msra.mxu0 %v4007
    %4075 = vmatmul.f32.gmra.mxu0 %v4057
    %v4076 = vpop.f32.mrf.mxu0
    %v4077 = vadd.f32 %v4054, %v4076
    %4078 = vdwg.mxu0
    %4079 = vmatpush.msra.mxu0 0.0
    %4080 = vmatpush.msra.mxu0 0.0
    %4081 = vmatpush.msra.mxu0 0.0
    %4082 = vmatpush.msra.mxu0 0.0
    %4083 = vmatpush.msra.mxu0 0.0
    %4084 = vmatpush.msra.mxu0 0.0
    %4085 = vmatpush.msra.mxu0 0.0
    %4086 = vmatpush.msra.mxu0 0.0
    %4087 = vmatpush.msra.mxu0 0.0
    %4088 = vmatpush.msra.mxu0 0.0
    %4089 = vmatpush.msra.mxu0 0.0
    %4090 = vmatpush.msra.mxu0 0.0
    %4091 = vmatpush.msra.mxu0 0.0
    %4092 = vmatpush.msra.mxu0 %v4040
    %4093 = vmatpush.msra.mxu0 %v3861
    %4094 = vmatpush.msra.mxu0 %v4008
    %4095 = vmatmul.f32.gmra.mxu0 %v4057
    %v4096 = vpop.f32.mrf.mxu0
    %v4097 = vadd.f32 %v4054, %v4096
    %4098 = vdwg.mxu0
    %4099 = vmatpush.msra.mxu0 0.0
    %4100 = vmatpush.msra.mxu0 0.0
    %4101 = vmatpush.msra.mxu0 0.0
    %4102 = vmatpush.msra.mxu0 0.0
    %4103 = vmatpush.msra.mxu0 0.0
    %4104 = vmatpush.msra.mxu0 0.0
    %4105 = vmatpush.msra.mxu0 0.0
    %4106 = vmatpush.msra.mxu0 0.0
    %4107 = vmatpush.msra.mxu0 0.0
    %4108 = vmatpush.msra.mxu0 0.0
    %4109 = vmatpush.msra.mxu0 0.0
    %4110 = vmatpush.msra.mxu0 0.0
    %4111 = vmatpush.msra.mxu0 0.0
    %4112 = vmatpush.msra.mxu0 %v4041
    %4113 = vmatpush.msra.mxu0 %v3881
    %4114 = vmatpush.msra.mxu0 %v4009
    %4115 = vmatmul.f32.gmra.mxu0 %v4057
    %v4116 = vpop.f32.mrf.mxu0
    %v4117 = vadd.f32 %v4054, %v4116
    %4118 = vdwg.mxu0
    %4119 = vmatpush.msra.mxu0 0.0
    %4120 = vmatpush.msra.mxu0 0.0
    %4121 = vmatpush.msra.mxu0 0.0
    %4122 = vmatpush.msra.mxu0 0.0
    %4123 = vmatpush.msra.mxu0 0.0
    %4124 = vmatpush.msra.mxu0 0.0
    %4125 = vmatpush.msra.mxu0 0.0
    %4126 = vmatpush.msra.mxu0 0.0
    %4127 = vmatpush.msra.mxu0 0.0
    %4128 = vmatpush.msra.mxu0 0.0
    %4129 = vmatpush.msra.mxu0 0.0
    %4130 = vmatpush.msra.mxu0 0.0
    %4131 = vmatpush.msra.mxu0 0.0
    %4132 = vmatpush.msra.mxu0 %v4042
    %4133 = vmatpush.msra.mxu0 %v3901
    %4134 = vmatpush.msra.mxu0 %v4010
    %4135 = vmatmul.f32.gmra.mxu0 %v4057
    %v4136 = vpop.f32.mrf.mxu0
    %v4137 = vadd.f32 %v4054, %v4136
    %4138 = vdwg.mxu0
    %4139 = vmatpush.msra.mxu0 0.0
    %4140 = vmatpush.msra.mxu0 0.0
    %4141 = vmatpush.msra.mxu0 0.0
    %4142 = vmatpush.msra.mxu0 0.0
    %4143 = vmatpush.msra.mxu0 0.0
    %4144 = vmatpush.msra.mxu0 0.0
    %4145 = vmatpush.msra.mxu0 0.0
    %4146 = vmatpush.msra.mxu0 0.0
    %4147 = vmatpush.msra.mxu0 0.0
    %4148 = vmatpush.msra.mxu0 0.0
    %4149 = vmatpush.msra.mxu0 0.0
    %4150 = vmatpush.msra.mxu0 0.0
    %4151 = vmatpush.msra.mxu0 0.0
    %4152 = vmatpush.msra.mxu0 %v4043
    %4153 = vmatpush.msra.mxu0 %v3921
    %4154 = vmatpush.msra.mxu0 %v4011
    %4155 = vmatmul.f32.gmra.mxu0 %v4057
    %v4156 = vpop.f32.mrf.mxu0
    %v4157 = vadd.f32 %v4054, %v4156
    %4158 = vdwg.mxu0
    %4159 = vmatpush.msra.mxu0 0.0
    %4160 = vmatpush.msra.mxu0 0.0
    %4161 = vmatpush.msra.mxu0 0.0
    %4162 = vmatpush.msra.mxu0 0.0
    %4163 = vmatpush.msra.mxu0 0.0
    %4164 = vmatpush.msra.mxu0 0.0
    %4165 = vmatpush.msra.mxu0 0.0
    %4166 = vmatpush.msra.mxu0 0.0
    %4167 = vmatpush.msra.mxu0 0.0
    %4168 = vmatpush.msra.mxu0 0.0
    %4169 = vmatpush.msra.mxu0 0.0
    %4170 = vmatpush.msra.mxu0 0.0
    %4171 = vmatpush.msra.mxu0 0.0
    %4172 = vmatpush.msra.mxu0 %v4044
    %4173 = vmatpush.msra.mxu0 %v3941
    %4174 = vmatpush.msra.mxu0 %v4012
    %4175 = vmatmul.f32.gmra.mxu0 %v4057
    %v4176 = vpop.f32.mrf.mxu0
    %v4177 = vadd.f32 %v4054, %v4176
    %4178 = vdwg.mxu0
    %4179 = vmatpush.msra.mxu0 0.0
    %4180 = vmatpush.msra.mxu0 0.0
    %4181 = vmatpush.msra.mxu0 0.0
    %4182 = vmatpush.msra.mxu0 0.0
    %4183 = vmatpush.msra.mxu0 0.0
    %4184 = vmatpush.msra.mxu0 0.0
    %4185 = vmatpush.msra.mxu0 0.0
    %4186 = vmatpush.msra.mxu0 0.0
    %4187 = vmatpush.msra.mxu0 0.0
    %4188 = vmatpush.msra.mxu0 0.0
    %4189 = vmatpush.msra.mxu0 0.0
    %4190 = vmatpush.msra.mxu0 0.0
    %4191 = vmatpush.msra.mxu0 0.0
    %4192 = vmatpush.msra.mxu0 %v4045
    %4193 = vmatpush.msra.mxu0 %v3961
    %4194 = vmatpush.msra.mxu0 %v4013
    %4195 = vmatmul.f32.gmra.mxu0 %v4057
    %v4196 = vpop.f32.mrf.mxu0
    %v4197 = vadd.f32 %v4054, %v4196
    %4198 = vdwg.mxu0
    %4199 = vmatpush.msra.mxu0 0.0
    %4200 = vmatpush.msra.mxu0 0.0
    %4201 = vmatpush.msra.mxu0 0.0
    %4202 = vmatpush.msra.mxu0 0.0
    %4203 = vmatpush.msra.mxu0 0.0
    %4204 = vmatpush.msra.mxu0 0.0
    %4205 = vmatpush.msra.mxu0 0.0
    %4206 = vmatpush.msra.mxu0 0.0
    %4207 = vmatpush.msra.mxu0 0.0
    %4208 = vmatpush.msra.mxu0 0.0
    %4209 = vmatpush.msra.mxu0 0.0
    %4210 = vmatpush.msra.mxu0 0.0
    %4211 = vmatpush.msra.mxu0 0.0
    %4212 = vmatpush.msra.mxu0 %v4046
    %4213 = vmatpush.msra.mxu0 %v3981
    %4214 = vmatpush.msra.mxu0 %v4014
    %4215 = vmatmul.f32.gmra.mxu0 %v4057
    %v4216 = vpop.f32.mrf.mxu0
    %v4217 = vadd.f32 %v4054, %v4216
    %4218 = vdwg.mxu0
    %v4219 = vmax.f32 %v4077, 0.0
    %v4220 = vmax.f32 %v4097, 0.0
    %v4221 = vmax.f32 %v4117, 0.0
    %v4222 = vmax.f32 %v4137, 0.0
    %v4223 = vmax.f32 %v4157, 0.0
    %v4224 = vmax.f32 %v4177, 0.0
    %v4225 = vmax.f32 %v4197, 0.0
    %v4226 = vmax.f32 %v4217, 0.0
    %s4227 = scalar_lea.vmem %s9, 48
    %v4228 = vld [vmem:[%s4227] sm:$0xff]
    %s4229 = scalar_lea.vmem %s10, 48
    %v4230 = vld [vmem:[%s4229] sm:$0xff]
    %4232 = vset.pattern.permute.xlu0 0
    %4233 = vperm.xlu0 %4232, %v4230
    %v4234 = vpop.permute.xlu0 %4233
    %v4237 = vsel %vm618, %v4228, 0
    %4239 = vmatpush.msra.mxu0 0.0
    %4240 = vmatpush.msra.mxu0 0.0
    %4241 = vmatpush.msra.mxu0 0.0
    %4242 = vmatpush.msra.mxu0 0.0
    %4243 = vmatpush.msra.mxu0 0.0
    %4244 = vmatpush.msra.mxu0 0.0
    %4245 = vmatpush.msra.mxu0 0.0
    %4246 = vmatpush.msra.mxu0 0.0
    %4247 = vmatpush.msra.mxu0 0.0
    %4248 = vmatpush.msra.mxu0 0.0
    %4249 = vmatpush.msra.mxu0 0.0
    %4250 = vmatpush.msra.mxu0 0.0
    %4251 = vmatpush.msra.mxu0 0.0
    %4252 = vmatpush.msra.mxu0 0.0
    %4253 = vmatpush.msra.mxu0 0.0
    %4254 = vmatpush.msra.mxu0 %v4219
    %4255 = vmatmul.f32.gmra.mxu0 %v4237
    %v4256 = vpop.f32.mrf.mxu0
    %v4257 = vadd.f32 %v4234, %v4256
    %4258 = vdwg.mxu0
    %4259 = vmatpush.msra.mxu0 0.0
    %4260 = vmatpush.msra.mxu0 0.0
    %4261 = vmatpush.msra.mxu0 0.0
    %4262 = vmatpush.msra.mxu0 0.0
    %4263 = vmatpush.msra.mxu0 0.0
    %4264 = vmatpush.msra.mxu0 0.0
    %4265 = vmatpush.msra.mxu0 0.0
    %4266 = vmatpush.msra.mxu0 0.0
    %4267 = vmatpush.msra.mxu0 0.0
    %4268 = vmatpush.msra.mxu0 0.0
    %4269 = vmatpush.msra.mxu0 0.0
    %4270 = vmatpush.msra.mxu0 0.0
    %4271 = vmatpush.msra.mxu0 0.0
    %4272 = vmatpush.msra.mxu0 0.0
    %4273 = vmatpush.msra.mxu0 0.0
    %4274 = vmatpush.msra.mxu0 %v4220
    %4275 = vmatmul.f32.gmra.mxu0 %v4237
    %v4276 = vpop.f32.mrf.mxu0
    %v4277 = vadd.f32 %v4234, %v4276
    %4278 = vdwg.mxu0
    %4279 = vmatpush.msra.mxu0 0.0
    %4280 = vmatpush.msra.mxu0 0.0
    %4281 = vmatpush.msra.mxu0 0.0
    %4282 = vmatpush.msra.mxu0 0.0
    %4283 = vmatpush.msra.mxu0 0.0
    %4284 = vmatpush.msra.mxu0 0.0
    %4285 = vmatpush.msra.mxu0 0.0
    %4286 = vmatpush.msra.mxu0 0.0
    %4287 = vmatpush.msra.mxu0 0.0
    %4288 = vmatpush.msra.mxu0 0.0
    %4289 = vmatpush.msra.mxu0 0.0
    %4290 = vmatpush.msra.mxu0 0.0
    %4291 = vmatpush.msra.mxu0 0.0
    %4292 = vmatpush.msra.mxu0 0.0
    %4293 = vmatpush.msra.mxu0 0.0
    %4294 = vmatpush.msra.mxu0 %v4221
    %4295 = vmatmul.f32.gmra.mxu0 %v4237
    %v4296 = vpop.f32.mrf.mxu0
    %v4297 = vadd.f32 %v4234, %v4296
    %4298 = vdwg.mxu0
    %4299 = vmatpush.msra.mxu0 0.0
    %4300 = vmatpush.msra.mxu0 0.0
    %4301 = vmatpush.msra.mxu0 0.0
    %4302 = vmatpush.msra.mxu0 0.0
    %4303 = vmatpush.msra.mxu0 0.0
    %4304 = vmatpush.msra.mxu0 0.0
    %4305 = vmatpush.msra.mxu0 0.0
    %4306 = vmatpush.msra.mxu0 0.0
    %4307 = vmatpush.msra.mxu0 0.0
    %4308 = vmatpush.msra.mxu0 0.0
    %4309 = vmatpush.msra.mxu0 0.0
    %4310 = vmatpush.msra.mxu0 0.0
    %4311 = vmatpush.msra.mxu0 0.0
    %4312 = vmatpush.msra.mxu0 0.0
    %4313 = vmatpush.msra.mxu0 0.0
    %4314 = vmatpush.msra.mxu0 %v4222
    %4315 = vmatmul.f32.gmra.mxu0 %v4237
    %v4316 = vpop.f32.mrf.mxu0
    %v4317 = vadd.f32 %v4234, %v4316
    %4318 = vdwg.mxu0
    %4319 = vmatpush.msra.mxu0 0.0
    %4320 = vmatpush.msra.mxu0 0.0
    %4321 = vmatpush.msra.mxu0 0.0
    %4322 = vmatpush.msra.mxu0 0.0
    %4323 = vmatpush.msra.mxu0 0.0
    %4324 = vmatpush.msra.mxu0 0.0
    %4325 = vmatpush.msra.mxu0 0.0
    %4326 = vmatpush.msra.mxu0 0.0
    %4327 = vmatpush.msra.mxu0 0.0
    %4328 = vmatpush.msra.mxu0 0.0
    %4329 = vmatpush.msra.mxu0 0.0
    %4330 = vmatpush.msra.mxu0 0.0
    %4331 = vmatpush.msra.mxu0 0.0
    %4332 = vmatpush.msra.mxu0 0.0
    %4333 = vmatpush.msra.mxu0 0.0
    %4334 = vmatpush.msra.mxu0 %v4223
    %4335 = vmatmul.f32.gmra.mxu0 %v4237
    %v4336 = vpop.f32.mrf.mxu0
    %v4337 = vadd.f32 %v4234, %v4336
    %4338 = vdwg.mxu0
    %4339 = vmatpush.msra.mxu0 0.0
    %4340 = vmatpush.msra.mxu0 0.0
    %4341 = vmatpush.msra.mxu0 0.0
    %4342 = vmatpush.msra.mxu0 0.0
    %4343 = vmatpush.msra.mxu0 0.0
    %4344 = vmatpush.msra.mxu0 0.0
    %4345 = vmatpush.msra.mxu0 0.0
    %4346 = vmatpush.msra.mxu0 0.0
    %4347 = vmatpush.msra.mxu0 0.0
    %4348 = vmatpush.msra.mxu0 0.0
    %4349 = vmatpush.msra.mxu0 0.0
    %4350 = vmatpush.msra.mxu0 0.0
    %4351 = vmatpush.msra.mxu0 0.0
    %4352 = vmatpush.msra.mxu0 0.0
    %4353 = vmatpush.msra.mxu0 0.0
    %4354 = vmatpush.msra.mxu0 %v4224
    %4355 = vmatmul.f32.gmra.mxu0 %v4237
    %v4356 = vpop.f32.mrf.mxu0
    %v4357 = vadd.f32 %v4234, %v4356
    %4358 = vdwg.mxu0
    %4359 = vmatpush.msra.mxu0 0.0
    %4360 = vmatpush.msra.mxu0 0.0
    %4361 = vmatpush.msra.mxu0 0.0
    %4362 = vmatpush.msra.mxu0 0.0
    %4363 = vmatpush.msra.mxu0 0.0
    %4364 = vmatpush.msra.mxu0 0.0
    %4365 = vmatpush.msra.mxu0 0.0
    %4366 = vmatpush.msra.mxu0 0.0
    %4367 = vmatpush.msra.mxu0 0.0
    %4368 = vmatpush.msra.mxu0 0.0
    %4369 = vmatpush.msra.mxu0 0.0
    %4370 = vmatpush.msra.mxu0 0.0
    %4371 = vmatpush.msra.mxu0 0.0
    %4372 = vmatpush.msra.mxu0 0.0
    %4373 = vmatpush.msra.mxu0 0.0
    %4374 = vmatpush.msra.mxu0 %v4225
    %4375 = vmatmul.f32.gmra.mxu0 %v4237
    %v4376 = vpop.f32.mrf.mxu0
    %v4377 = vadd.f32 %v4234, %v4376
    %4378 = vdwg.mxu0
    %4379 = vmatpush.msra.mxu0 0.0
    %4380 = vmatpush.msra.mxu0 0.0
    %4381 = vmatpush.msra.mxu0 0.0
    %4382 = vmatpush.msra.mxu0 0.0
    %4383 = vmatpush.msra.mxu0 0.0
    %4384 = vmatpush.msra.mxu0 0.0
    %4385 = vmatpush.msra.mxu0 0.0
    %4386 = vmatpush.msra.mxu0 0.0
    %4387 = vmatpush.msra.mxu0 0.0
    %4388 = vmatpush.msra.mxu0 0.0
    %4389 = vmatpush.msra.mxu0 0.0
    %4390 = vmatpush.msra.mxu0 0.0
    %4391 = vmatpush.msra.mxu0 0.0
    %4392 = vmatpush.msra.mxu0 0.0
    %4393 = vmatpush.msra.mxu0 0.0
    %4394 = vmatpush.msra.mxu0 %v4226
    %4395 = vmatmul.f32.gmra.mxu0 %v4237
    %v4396 = vpop.f32.mrf.mxu0
    %v4397 = vadd.f32 %v4234, %v4396
    %4398 = vdwg.mxu0
    %v4399 = vadd.f32 %v3841, %v4257
    %v4400 = vadd.f32 %v3861, %v4277
    %v4401 = vadd.f32 %v3881, %v4297
    %v4402 = vadd.f32 %v3901, %v4317
    %v4403 = vadd.f32 %v3921, %v4337
    %v4404 = vadd.f32 %v3941, %v4357
    %v4405 = vadd.f32 %v3961, %v4377
    %v4406 = vadd.f32 %v3981, %v4397
    %v4407 = vmul.f32 %v4399, %v90
    %v4408 = vmul.f32 %v4400, %v91
    %v4409 = vmul.f32 %v4401, %v92
    %v4410 = vmul.f32 %v4402, %v93
    %v4411 = vmul.f32 %v4403, %v94
    %v4412 = vmul.f32 %v4404, %v95
    %v4413 = vmul.f32 %v4405, %v96
    %v4414 = vmul.f32 %v4406, %v97
    %4415 = vrot.lane.b32.xlu0 %v4407, 2
    %v4416 = vpop.permute.xlu0 %4415
    %4417 = vrot.lane.b32.xlu0 %v4408, 2
    %v4418 = vpop.permute.xlu0 %4417
    %4419 = vrot.lane.b32.xlu0 %v4409, 2
    %v4420 = vpop.permute.xlu0 %4419
    %4421 = vrot.lane.b32.xlu0 %v4410, 2
    %v4422 = vpop.permute.xlu0 %4421
    %4423 = vrot.lane.b32.xlu0 %v4411, 2
    %v4424 = vpop.permute.xlu0 %4423
    %4425 = vrot.lane.b32.xlu0 %v4412, 2
    %v4426 = vpop.permute.xlu0 %4425
    %4427 = vrot.lane.b32.xlu0 %v4413, 2
    %v4428 = vpop.permute.xlu0 %4427
    %4429 = vrot.lane.b32.xlu0 %v4414, 2
    %v4430 = vpop.permute.xlu0 %4429
    %v4431 = vsel %vm814, %v4428, %v4430
    %v4432 = vsel %vm814, %v4426, %v4428
    %v4433 = vsel %vm814, %v4424, %v4426
    %v4434 = vsel %vm814, %v4422, %v4424
    %v4435 = vsel %vm814, %v4420, %v4422
    %v4436 = vsel %vm814, %v4418, %v4420
    %v4437 = vsel %vm814, %v4416, %v4418
    %v4438 = vsel %vm814, %v4430, %v4416
    %v4439 = vsel %vm122, %v4438, 0.0
    %v4440 = vsel %vm123, %v4437, 0.0
    %v4441 = vsel %vm124, %v4436, 0.0
    %v4442 = vsel %vm125, %v4435, 0.0
    %v4443 = vsel %vm126, %v4434, 0.0
    %v4444 = vsel %vm127, %v4433, 0.0
    %v4445 = vsel %vm128, %v4432, 0.0
    %v4446 = vsel %vm129, %v4431, 0.0
    %4447 = vrot.lane.b32.xlu0 %v4407, 126
    %v4448 = vpop.permute.xlu0 %4447
    %4449 = vrot.lane.b32.xlu0 %v4408, 126
    %v4450 = vpop.permute.xlu0 %4449
    %4451 = vrot.lane.b32.xlu0 %v4409, 126
    %v4452 = vpop.permute.xlu0 %4451
    %4453 = vrot.lane.b32.xlu0 %v4410, 126
    %v4454 = vpop.permute.xlu0 %4453
    %4455 = vrot.lane.b32.xlu0 %v4411, 126
    %v4456 = vpop.permute.xlu0 %4455
    %4457 = vrot.lane.b32.xlu0 %v4412, 126
    %v4458 = vpop.permute.xlu0 %4457
    %4459 = vrot.lane.b32.xlu0 %v4413, 126
    %v4460 = vpop.permute.xlu0 %4459
    %4461 = vrot.lane.b32.xlu0 %v4414, 126
    %v4462 = vpop.permute.xlu0 %4461
    %v4463 = vsel %vm847, %v4460, %v4462
    %v4464 = vsel %vm847, %v4458, %v4460
    %v4465 = vsel %vm847, %v4456, %v4458
    %v4466 = vsel %vm847, %v4454, %v4456
    %v4467 = vsel %vm847, %v4452, %v4454
    %v4468 = vsel %vm847, %v4450, %v4452
    %v4469 = vsel %vm847, %v4448, %v4450
    %v4470 = vsel %vm847, %v4462, %v4448
    %v4471 = vsel %vm130, %v4469, 0.0
    %v4472 = vsel %vm131, %v4468, 0.0
    %v4473 = vsel %vm132, %v4467, 0.0
    %v4474 = vsel %vm133, %v4466, 0.0
    %v4475 = vsel %vm134, %v4465, 0.0
    %v4476 = vsel %vm135, %v4464, 0.0
    %v4477 = vsel %vm136, %v4463, 0.0
    %v4478 = vsel %vm137, %v4470, 0.0
    %s4479 = scalar_lea.vmem %s7, 56
    %v4480 = vld [vmem:[%s4479] sm:$0xff]
    %s4481 = scalar_lea.vmem %s8, 56
    %v4482 = vld [vmem:[%s4481] sm:$0xff]
    %4484 = vset.pattern.permute.xlu0 0
    %4485 = vperm.xlu0 %4484, %v4482
    %v4486 = vpop.permute.xlu0 %4485
    %v4489 = vsel %vm439, %v4480, 0
    %4491 = vmatpush.msra.mxu0 0.0
    %4492 = vmatpush.msra.mxu0 0.0
    %4493 = vmatpush.msra.mxu0 0.0
    %4494 = vmatpush.msra.mxu0 0.0
    %4495 = vmatpush.msra.mxu0 0.0
    %4496 = vmatpush.msra.mxu0 0.0
    %4497 = vmatpush.msra.mxu0 0.0
    %4498 = vmatpush.msra.mxu0 0.0
    %4499 = vmatpush.msra.mxu0 0.0
    %4500 = vmatpush.msra.mxu0 0.0
    %4501 = vmatpush.msra.mxu0 0.0
    %4502 = vmatpush.msra.mxu0 0.0
    %4503 = vmatpush.msra.mxu0 0.0
    %4504 = vmatpush.msra.mxu0 %v4471
    %4505 = vmatpush.msra.mxu0 %v4407
    %4506 = vmatpush.msra.mxu0 %v4439
    %4507 = vmatmul.f32.gmra.mxu0 %v4489
    %v4508 = vpop.f32.mrf.mxu0
    %v4509 = vadd.f32 %v4486, %v4508
    %4510 = vdwg.mxu0
    %4511 = vmatpush.msra.mxu0 0.0
    %4512 = vmatpush.msra.mxu0 0.0
    %4513 = vmatpush.msra.mxu0 0.0
    %4514 = vmatpush.msra.mxu0 0.0
    %4515 = vmatpush.msra.mxu0 0.0
    %4516 = vmatpush.msra.mxu0 0.0
    %4517 = vmatpush.msra.mxu0 0.0
    %4518 = vmatpush.msra.mxu0 0.0
    %4519 = vmatpush.msra.mxu0 0.0
    %4520 = vmatpush.msra.mxu0 0.0
    %4521 = vmatpush.msra.mxu0 0.0
    %4522 = vmatpush.msra.mxu0 0.0
    %4523 = vmatpush.msra.mxu0 0.0
    %4524 = vmatpush.msra.mxu0 %v4472
    %4525 = vmatpush.msra.mxu0 %v4408
    %4526 = vmatpush.msra.mxu0 %v4440
    %4527 = vmatmul.f32.gmra.mxu0 %v4489
    %v4528 = vpop.f32.mrf.mxu0
    %v4529 = vadd.f32 %v4486, %v4528
    %4530 = vdwg.mxu0
    %4531 = vmatpush.msra.mxu0 0.0
    %4532 = vmatpush.msra.mxu0 0.0
    %4533 = vmatpush.msra.mxu0 0.0
    %4534 = vmatpush.msra.mxu0 0.0
    %4535 = vmatpush.msra.mxu0 0.0
    %4536 = vmatpush.msra.mxu0 0.0
    %4537 = vmatpush.msra.mxu0 0.0
    %4538 = vmatpush.msra.mxu0 0.0
    %4539 = vmatpush.msra.mxu0 0.0
    %4540 = vmatpush.msra.mxu0 0.0
    %4541 = vmatpush.msra.mxu0 0.0
    %4542 = vmatpush.msra.mxu0 0.0
    %4543 = vmatpush.msra.mxu0 0.0
    %4544 = vmatpush.msra.mxu0 %v4473
    %4545 = vmatpush.msra.mxu0 %v4409
    %4546 = vmatpush.msra.mxu0 %v4441
    %4547 = vmatmul.f32.gmra.mxu0 %v4489
    %v4548 = vpop.f32.mrf.mxu0
    %v4549 = vadd.f32 %v4486, %v4548
    %4550 = vdwg.mxu0
    %4551 = vmatpush.msra.mxu0 0.0
    %4552 = vmatpush.msra.mxu0 0.0
    %4553 = vmatpush.msra.mxu0 0.0
    %4554 = vmatpush.msra.mxu0 0.0
    %4555 = vmatpush.msra.mxu0 0.0
    %4556 = vmatpush.msra.mxu0 0.0
    %4557 = vmatpush.msra.mxu0 0.0
    %4558 = vmatpush.msra.mxu0 0.0
    %4559 = vmatpush.msra.mxu0 0.0
    %4560 = vmatpush.msra.mxu0 0.0
    %4561 = vmatpush.msra.mxu0 0.0
    %4562 = vmatpush.msra.mxu0 0.0
    %4563 = vmatpush.msra.mxu0 0.0
    %4564 = vmatpush.msra.mxu0 %v4474
    %4565 = vmatpush.msra.mxu0 %v4410
    %4566 = vmatpush.msra.mxu0 %v4442
    %4567 = vmatmul.f32.gmra.mxu0 %v4489
    %v4568 = vpop.f32.mrf.mxu0
    %v4569 = vadd.f32 %v4486, %v4568
    %4570 = vdwg.mxu0
    %4571 = vmatpush.msra.mxu0 0.0
    %4572 = vmatpush.msra.mxu0 0.0
    %4573 = vmatpush.msra.mxu0 0.0
    %4574 = vmatpush.msra.mxu0 0.0
    %4575 = vmatpush.msra.mxu0 0.0
    %4576 = vmatpush.msra.mxu0 0.0
    %4577 = vmatpush.msra.mxu0 0.0
    %4578 = vmatpush.msra.mxu0 0.0
    %4579 = vmatpush.msra.mxu0 0.0
    %4580 = vmatpush.msra.mxu0 0.0
    %4581 = vmatpush.msra.mxu0 0.0
    %4582 = vmatpush.msra.mxu0 0.0
    %4583 = vmatpush.msra.mxu0 0.0
    %4584 = vmatpush.msra.mxu0 %v4475
    %4585 = vmatpush.msra.mxu0 %v4411
    %4586 = vmatpush.msra.mxu0 %v4443
    %4587 = vmatmul.f32.gmra.mxu0 %v4489
    %v4588 = vpop.f32.mrf.mxu0
    %v4589 = vadd.f32 %v4486, %v4588
    %4590 = vdwg.mxu0
    %4591 = vmatpush.msra.mxu0 0.0
    %4592 = vmatpush.msra.mxu0 0.0
    %4593 = vmatpush.msra.mxu0 0.0
    %4594 = vmatpush.msra.mxu0 0.0
    %4595 = vmatpush.msra.mxu0 0.0
    %4596 = vmatpush.msra.mxu0 0.0
    %4597 = vmatpush.msra.mxu0 0.0
    %4598 = vmatpush.msra.mxu0 0.0
    %4599 = vmatpush.msra.mxu0 0.0
    %4600 = vmatpush.msra.mxu0 0.0
    %4601 = vmatpush.msra.mxu0 0.0
    %4602 = vmatpush.msra.mxu0 0.0
    %4603 = vmatpush.msra.mxu0 0.0
    %4604 = vmatpush.msra.mxu0 %v4476
    %4605 = vmatpush.msra.mxu0 %v4412
    %4606 = vmatpush.msra.mxu0 %v4444
    %4607 = vmatmul.f32.gmra.mxu0 %v4489
    %v4608 = vpop.f32.mrf.mxu0
    %v4609 = vadd.f32 %v4486, %v4608
    %4610 = vdwg.mxu0
    %4611 = vmatpush.msra.mxu0 0.0
    %4612 = vmatpush.msra.mxu0 0.0
    %4613 = vmatpush.msra.mxu0 0.0
    %4614 = vmatpush.msra.mxu0 0.0
    %4615 = vmatpush.msra.mxu0 0.0
    %4616 = vmatpush.msra.mxu0 0.0
    %4617 = vmatpush.msra.mxu0 0.0
    %4618 = vmatpush.msra.mxu0 0.0
    %4619 = vmatpush.msra.mxu0 0.0
    %4620 = vmatpush.msra.mxu0 0.0
    %4621 = vmatpush.msra.mxu0 0.0
    %4622 = vmatpush.msra.mxu0 0.0
    %4623 = vmatpush.msra.mxu0 0.0
    %4624 = vmatpush.msra.mxu0 %v4477
    %4625 = vmatpush.msra.mxu0 %v4413
    %4626 = vmatpush.msra.mxu0 %v4445
    %4627 = vmatmul.f32.gmra.mxu0 %v4489
    %v4628 = vpop.f32.mrf.mxu0
    %v4629 = vadd.f32 %v4486, %v4628
    %4630 = vdwg.mxu0
    %4631 = vmatpush.msra.mxu0 0.0
    %4632 = vmatpush.msra.mxu0 0.0
    %4633 = vmatpush.msra.mxu0 0.0
    %4634 = vmatpush.msra.mxu0 0.0
    %4635 = vmatpush.msra.mxu0 0.0
    %4636 = vmatpush.msra.mxu0 0.0
    %4637 = vmatpush.msra.mxu0 0.0
    %4638 = vmatpush.msra.mxu0 0.0
    %4639 = vmatpush.msra.mxu0 0.0
    %4640 = vmatpush.msra.mxu0 0.0
    %4641 = vmatpush.msra.mxu0 0.0
    %4642 = vmatpush.msra.mxu0 0.0
    %4643 = vmatpush.msra.mxu0 0.0
    %4644 = vmatpush.msra.mxu0 %v4478
    %4645 = vmatpush.msra.mxu0 %v4414
    %4646 = vmatpush.msra.mxu0 %v4446
    %4647 = vmatmul.f32.gmra.mxu0 %v4489
    %v4648 = vpop.f32.mrf.mxu0
    %v4649 = vadd.f32 %v4486, %v4648
    %4650 = vdwg.mxu0
    %v4651 = vmax.f32 %v4509, 0.0
    %v4652 = vmax.f32 %v4529, 0.0
    %v4653 = vmax.f32 %v4549, 0.0
    %v4654 = vmax.f32 %v4569, 0.0
    %v4655 = vmax.f32 %v4589, 0.0
    %v4656 = vmax.f32 %v4609, 0.0
    %v4657 = vmax.f32 %v4629, 0.0
    %v4658 = vmax.f32 %v4649, 0.0
    %s4659 = scalar_lea.vmem %s9, 56
    %v4660 = vld [vmem:[%s4659] sm:$0xff]
    %s4661 = scalar_lea.vmem %s10, 56
    %v4662 = vld [vmem:[%s4661] sm:$0xff]
    %4664 = vset.pattern.permute.xlu0 0
    %4665 = vperm.xlu0 %4664, %v4662
    %v4666 = vpop.permute.xlu0 %4665
    %v4669 = vsel %vm618, %v4660, 0
    %4671 = vmatpush.msra.mxu0 0.0
    %4672 = vmatpush.msra.mxu0 0.0
    %4673 = vmatpush.msra.mxu0 0.0
    %4674 = vmatpush.msra.mxu0 0.0
    %4675 = vmatpush.msra.mxu0 0.0
    %4676 = vmatpush.msra.mxu0 0.0
    %4677 = vmatpush.msra.mxu0 0.0
    %4678 = vmatpush.msra.mxu0 0.0
    %4679 = vmatpush.msra.mxu0 0.0
    %4680 = vmatpush.msra.mxu0 0.0
    %4681 = vmatpush.msra.mxu0 0.0
    %4682 = vmatpush.msra.mxu0 0.0
    %4683 = vmatpush.msra.mxu0 0.0
    %4684 = vmatpush.msra.mxu0 0.0
    %4685 = vmatpush.msra.mxu0 0.0
    %4686 = vmatpush.msra.mxu0 %v4651
    %4687 = vmatmul.f32.gmra.mxu0 %v4669
    %v4688 = vpop.f32.mrf.mxu0
    %v4689 = vadd.f32 %v4666, %v4688
    %4690 = vdwg.mxu0
    %4691 = vmatpush.msra.mxu0 0.0
    %4692 = vmatpush.msra.mxu0 0.0
    %4693 = vmatpush.msra.mxu0 0.0
    %4694 = vmatpush.msra.mxu0 0.0
    %4695 = vmatpush.msra.mxu0 0.0
    %4696 = vmatpush.msra.mxu0 0.0
    %4697 = vmatpush.msra.mxu0 0.0
    %4698 = vmatpush.msra.mxu0 0.0
    %4699 = vmatpush.msra.mxu0 0.0
    %4700 = vmatpush.msra.mxu0 0.0
    %4701 = vmatpush.msra.mxu0 0.0
    %4702 = vmatpush.msra.mxu0 0.0
    %4703 = vmatpush.msra.mxu0 0.0
    %4704 = vmatpush.msra.mxu0 0.0
    %4705 = vmatpush.msra.mxu0 0.0
    %4706 = vmatpush.msra.mxu0 %v4652
    %4707 = vmatmul.f32.gmra.mxu0 %v4669
    %v4708 = vpop.f32.mrf.mxu0
    %v4709 = vadd.f32 %v4666, %v4708
    %4710 = vdwg.mxu0
    %4711 = vmatpush.msra.mxu0 0.0
    %4712 = vmatpush.msra.mxu0 0.0
    %4713 = vmatpush.msra.mxu0 0.0
    %4714 = vmatpush.msra.mxu0 0.0
    %4715 = vmatpush.msra.mxu0 0.0
    %4716 = vmatpush.msra.mxu0 0.0
    %4717 = vmatpush.msra.mxu0 0.0
    %4718 = vmatpush.msra.mxu0 0.0
    %4719 = vmatpush.msra.mxu0 0.0
    %4720 = vmatpush.msra.mxu0 0.0
    %4721 = vmatpush.msra.mxu0 0.0
    %4722 = vmatpush.msra.mxu0 0.0
    %4723 = vmatpush.msra.mxu0 0.0
    %4724 = vmatpush.msra.mxu0 0.0
    %4725 = vmatpush.msra.mxu0 0.0
    %4726 = vmatpush.msra.mxu0 %v4653
    %4727 = vmatmul.f32.gmra.mxu0 %v4669
    %v4728 = vpop.f32.mrf.mxu0
    %v4729 = vadd.f32 %v4666, %v4728
    %4730 = vdwg.mxu0
    %4731 = vmatpush.msra.mxu0 0.0
    %4732 = vmatpush.msra.mxu0 0.0
    %4733 = vmatpush.msra.mxu0 0.0
    %4734 = vmatpush.msra.mxu0 0.0
    %4735 = vmatpush.msra.mxu0 0.0
    %4736 = vmatpush.msra.mxu0 0.0
    %4737 = vmatpush.msra.mxu0 0.0
    %4738 = vmatpush.msra.mxu0 0.0
    %4739 = vmatpush.msra.mxu0 0.0
    %4740 = vmatpush.msra.mxu0 0.0
    %4741 = vmatpush.msra.mxu0 0.0
    %4742 = vmatpush.msra.mxu0 0.0
    %4743 = vmatpush.msra.mxu0 0.0
    %4744 = vmatpush.msra.mxu0 0.0
    %4745 = vmatpush.msra.mxu0 0.0
    %4746 = vmatpush.msra.mxu0 %v4654
    %4747 = vmatmul.f32.gmra.mxu0 %v4669
    %v4748 = vpop.f32.mrf.mxu0
    %v4749 = vadd.f32 %v4666, %v4748
    %4750 = vdwg.mxu0
    %4751 = vmatpush.msra.mxu0 0.0
    %4752 = vmatpush.msra.mxu0 0.0
    %4753 = vmatpush.msra.mxu0 0.0
    %4754 = vmatpush.msra.mxu0 0.0
    %4755 = vmatpush.msra.mxu0 0.0
    %4756 = vmatpush.msra.mxu0 0.0
    %4757 = vmatpush.msra.mxu0 0.0
    %4758 = vmatpush.msra.mxu0 0.0
    %4759 = vmatpush.msra.mxu0 0.0
    %4760 = vmatpush.msra.mxu0 0.0
    %4761 = vmatpush.msra.mxu0 0.0
    %4762 = vmatpush.msra.mxu0 0.0
    %4763 = vmatpush.msra.mxu0 0.0
    %4764 = vmatpush.msra.mxu0 0.0
    %4765 = vmatpush.msra.mxu0 0.0
    %4766 = vmatpush.msra.mxu0 %v4655
    %4767 = vmatmul.f32.gmra.mxu0 %v4669
    %v4768 = vpop.f32.mrf.mxu0
    %v4769 = vadd.f32 %v4666, %v4768
    %4770 = vdwg.mxu0
    %4771 = vmatpush.msra.mxu0 0.0
    %4772 = vmatpush.msra.mxu0 0.0
    %4773 = vmatpush.msra.mxu0 0.0
    %4774 = vmatpush.msra.mxu0 0.0
    %4775 = vmatpush.msra.mxu0 0.0
    %4776 = vmatpush.msra.mxu0 0.0
    %4777 = vmatpush.msra.mxu0 0.0
    %4778 = vmatpush.msra.mxu0 0.0
    %4779 = vmatpush.msra.mxu0 0.0
    %4780 = vmatpush.msra.mxu0 0.0
    %4781 = vmatpush.msra.mxu0 0.0
    %4782 = vmatpush.msra.mxu0 0.0
    %4783 = vmatpush.msra.mxu0 0.0
    %4784 = vmatpush.msra.mxu0 0.0
    %4785 = vmatpush.msra.mxu0 0.0
    %4786 = vmatpush.msra.mxu0 %v4656
    %4787 = vmatmul.f32.gmra.mxu0 %v4669
    %v4788 = vpop.f32.mrf.mxu0
    %v4789 = vadd.f32 %v4666, %v4788
    %4790 = vdwg.mxu0
    %4791 = vmatpush.msra.mxu0 0.0
    %4792 = vmatpush.msra.mxu0 0.0
    %4793 = vmatpush.msra.mxu0 0.0
    %4794 = vmatpush.msra.mxu0 0.0
    %4795 = vmatpush.msra.mxu0 0.0
    %4796 = vmatpush.msra.mxu0 0.0
    %4797 = vmatpush.msra.mxu0 0.0
    %4798 = vmatpush.msra.mxu0 0.0
    %4799 = vmatpush.msra.mxu0 0.0
    %4800 = vmatpush.msra.mxu0 0.0
    %4801 = vmatpush.msra.mxu0 0.0
    %4802 = vmatpush.msra.mxu0 0.0
    %4803 = vmatpush.msra.mxu0 0.0
    %4804 = vmatpush.msra.mxu0 0.0
    %4805 = vmatpush.msra.mxu0 0.0
    %4806 = vmatpush.msra.mxu0 %v4657
    %4807 = vmatmul.f32.gmra.mxu0 %v4669
    %v4808 = vpop.f32.mrf.mxu0
    %v4809 = vadd.f32 %v4666, %v4808
    %4810 = vdwg.mxu0
    %4811 = vmatpush.msra.mxu0 0.0
    %4812 = vmatpush.msra.mxu0 0.0
    %4813 = vmatpush.msra.mxu0 0.0
    %4814 = vmatpush.msra.mxu0 0.0
    %4815 = vmatpush.msra.mxu0 0.0
    %4816 = vmatpush.msra.mxu0 0.0
    %4817 = vmatpush.msra.mxu0 0.0
    %4818 = vmatpush.msra.mxu0 0.0
    %4819 = vmatpush.msra.mxu0 0.0
    %4820 = vmatpush.msra.mxu0 0.0
    %4821 = vmatpush.msra.mxu0 0.0
    %4822 = vmatpush.msra.mxu0 0.0
    %4823 = vmatpush.msra.mxu0 0.0
    %4824 = vmatpush.msra.mxu0 0.0
    %4825 = vmatpush.msra.mxu0 0.0
    %4826 = vmatpush.msra.mxu0 %v4658
    %4827 = vmatmul.f32.gmra.mxu0 %v4669
    %v4828 = vpop.f32.mrf.mxu0
    %v4829 = vadd.f32 %v4666, %v4828
    %4830 = vdwg.mxu0
    %v4831 = vadd.f32 %v4407, %v4689
    %v4832 = vadd.f32 %v4408, %v4709
    %v4833 = vadd.f32 %v4409, %v4729
    %v4834 = vadd.f32 %v4410, %v4749
    %v4835 = vadd.f32 %v4411, %v4769
    %v4836 = vadd.f32 %v4412, %v4789
    %v4837 = vadd.f32 %v4413, %v4809
    %v4838 = vadd.f32 %v4414, %v4829
    %v4839 = vmul.f32 %v4831, %v90
    %v4840 = vmul.f32 %v4832, %v91
    %v4841 = vmul.f32 %v4833, %v92
    %v4842 = vmul.f32 %v4834, %v93
    %v4843 = vmul.f32 %v4835, %v94
    %v4844 = vmul.f32 %v4836, %v95
    %v4845 = vmul.f32 %v4837, %v96
    %v4846 = vmul.f32 %v4838, %v97
    %4847 = vrot.lane.b32.xlu0 %v4839, 4
    %v4848 = vpop.permute.xlu0 %4847
    %4849 = vrot.lane.b32.xlu0 %v4840, 4
    %v4850 = vpop.permute.xlu0 %4849
    %4851 = vrot.lane.b32.xlu0 %v4841, 4
    %v4852 = vpop.permute.xlu0 %4851
    %4853 = vrot.lane.b32.xlu0 %v4842, 4
    %v4854 = vpop.permute.xlu0 %4853
    %4855 = vrot.lane.b32.xlu0 %v4843, 4
    %v4856 = vpop.permute.xlu0 %4855
    %4857 = vrot.lane.b32.xlu0 %v4844, 4
    %v4858 = vpop.permute.xlu0 %4857
    %4859 = vrot.lane.b32.xlu0 %v4845, 4
    %v4860 = vpop.permute.xlu0 %4859
    %4861 = vrot.lane.b32.xlu0 %v4846, 4
    %v4862 = vpop.permute.xlu0 %4861
    %v4863 = vsel %vm1248, %v4860, %v4862
    %v4864 = vsel %vm1248, %v4858, %v4860
    %v4865 = vsel %vm1248, %v4856, %v4858
    %v4866 = vsel %vm1248, %v4854, %v4856
    %v4867 = vsel %vm1248, %v4852, %v4854
    %v4868 = vsel %vm1248, %v4850, %v4852
    %v4869 = vsel %vm1248, %v4848, %v4850
    %v4870 = vsel %vm1248, %v4862, %v4848
    %v4871 = vsel %vm138, %v4870, 0.0
    %v4872 = vsel %vm139, %v4869, 0.0
    %v4873 = vsel %vm140, %v4868, 0.0
    %v4874 = vsel %vm141, %v4867, 0.0
    %v4875 = vsel %vm142, %v4866, 0.0
    %v4876 = vsel %vm143, %v4865, 0.0
    %v4877 = vsel %vm144, %v4864, 0.0
    %v4878 = vsel %vm145, %v4863, 0.0
    %4879 = vrot.lane.b32.xlu0 %v4839, 124
    %v4880 = vpop.permute.xlu0 %4879
    %4881 = vrot.lane.b32.xlu0 %v4840, 124
    %v4882 = vpop.permute.xlu0 %4881
    %4883 = vrot.lane.b32.xlu0 %v4841, 124
    %v4884 = vpop.permute.xlu0 %4883
    %4885 = vrot.lane.b32.xlu0 %v4842, 124
    %v4886 = vpop.permute.xlu0 %4885
    %4887 = vrot.lane.b32.xlu0 %v4843, 124
    %v4888 = vpop.permute.xlu0 %4887
    %4889 = vrot.lane.b32.xlu0 %v4844, 124
    %v4890 = vpop.permute.xlu0 %4889
    %4891 = vrot.lane.b32.xlu0 %v4845, 124
    %v4892 = vpop.permute.xlu0 %4891
    %4893 = vrot.lane.b32.xlu0 %v4846, 124
    %v4894 = vpop.permute.xlu0 %4893
    %v4895 = vsel %vm1281, %v4892, %v4894
    %v4896 = vsel %vm1281, %v4890, %v4892
    %v4897 = vsel %vm1281, %v4888, %v4890
    %v4898 = vsel %vm1281, %v4886, %v4888
    %v4899 = vsel %vm1281, %v4884, %v4886
    %v4900 = vsel %vm1281, %v4882, %v4884
    %v4901 = vsel %vm1281, %v4880, %v4882
    %v4902 = vsel %vm1281, %v4894, %v4880
    %v4903 = vsel %vm146, %v4901, 0.0
    %v4904 = vsel %vm147, %v4900, 0.0
    %v4905 = vsel %vm148, %v4899, 0.0
    %v4906 = vsel %vm149, %v4898, 0.0
    %v4907 = vsel %vm150, %v4897, 0.0
    %v4908 = vsel %vm151, %v4896, 0.0
    %v4909 = vsel %vm152, %v4895, 0.0
    %v4910 = vsel %vm153, %v4902, 0.0
    %s4911 = scalar_lea.vmem %s7, 64
    %v4912 = vld [vmem:[%s4911] sm:$0xff]
    %s4913 = scalar_lea.vmem %s8, 64
    %v4914 = vld [vmem:[%s4913] sm:$0xff]
    %4916 = vset.pattern.permute.xlu0 0
    %4917 = vperm.xlu0 %4916, %v4914
    %v4918 = vpop.permute.xlu0 %4917
    %v4921 = vsel %vm439, %v4912, 0
    %4923 = vmatpush.msra.mxu0 0.0
    %4924 = vmatpush.msra.mxu0 0.0
    %4925 = vmatpush.msra.mxu0 0.0
    %4926 = vmatpush.msra.mxu0 0.0
    %4927 = vmatpush.msra.mxu0 0.0
    %4928 = vmatpush.msra.mxu0 0.0
    %4929 = vmatpush.msra.mxu0 0.0
    %4930 = vmatpush.msra.mxu0 0.0
    %4931 = vmatpush.msra.mxu0 0.0
    %4932 = vmatpush.msra.mxu0 0.0
    %4933 = vmatpush.msra.mxu0 0.0
    %4934 = vmatpush.msra.mxu0 0.0
    %4935 = vmatpush.msra.mxu0 0.0
    %4936 = vmatpush.msra.mxu0 %v4903
    %4937 = vmatpush.msra.mxu0 %v4839
    %4938 = vmatpush.msra.mxu0 %v4871
    %4939 = vmatmul.f32.gmra.mxu0 %v4921
    %v4940 = vpop.f32.mrf.mxu0
    %v4941 = vadd.f32 %v4918, %v4940
    %4942 = vdwg.mxu0
    %4943 = vmatpush.msra.mxu0 0.0
    %4944 = vmatpush.msra.mxu0 0.0
    %4945 = vmatpush.msra.mxu0 0.0
    %4946 = vmatpush.msra.mxu0 0.0
    %4947 = vmatpush.msra.mxu0 0.0
    %4948 = vmatpush.msra.mxu0 0.0
    %4949 = vmatpush.msra.mxu0 0.0
    %4950 = vmatpush.msra.mxu0 0.0
    %4951 = vmatpush.msra.mxu0 0.0
    %4952 = vmatpush.msra.mxu0 0.0
    %4953 = vmatpush.msra.mxu0 0.0
    %4954 = vmatpush.msra.mxu0 0.0
    %4955 = vmatpush.msra.mxu0 0.0
    %4956 = vmatpush.msra.mxu0 %v4904
    %4957 = vmatpush.msra.mxu0 %v4840
    %4958 = vmatpush.msra.mxu0 %v4872
    %4959 = vmatmul.f32.gmra.mxu0 %v4921
    %v4960 = vpop.f32.mrf.mxu0
    %v4961 = vadd.f32 %v4918, %v4960
    %4962 = vdwg.mxu0
    %4963 = vmatpush.msra.mxu0 0.0
    %4964 = vmatpush.msra.mxu0 0.0
    %4965 = vmatpush.msra.mxu0 0.0
    %4966 = vmatpush.msra.mxu0 0.0
    %4967 = vmatpush.msra.mxu0 0.0
    %4968 = vmatpush.msra.mxu0 0.0
    %4969 = vmatpush.msra.mxu0 0.0
    %4970 = vmatpush.msra.mxu0 0.0
    %4971 = vmatpush.msra.mxu0 0.0
    %4972 = vmatpush.msra.mxu0 0.0
    %4973 = vmatpush.msra.mxu0 0.0
    %4974 = vmatpush.msra.mxu0 0.0
    %4975 = vmatpush.msra.mxu0 0.0
    %4976 = vmatpush.msra.mxu0 %v4905
    %4977 = vmatpush.msra.mxu0 %v4841
    %4978 = vmatpush.msra.mxu0 %v4873
    %4979 = vmatmul.f32.gmra.mxu0 %v4921
    %v4980 = vpop.f32.mrf.mxu0
    %v4981 = vadd.f32 %v4918, %v4980
    %4982 = vdwg.mxu0
    %4983 = vmatpush.msra.mxu0 0.0
    %4984 = vmatpush.msra.mxu0 0.0
    %4985 = vmatpush.msra.mxu0 0.0
    %4986 = vmatpush.msra.mxu0 0.0
    %4987 = vmatpush.msra.mxu0 0.0
    %4988 = vmatpush.msra.mxu0 0.0
    %4989 = vmatpush.msra.mxu0 0.0
    %4990 = vmatpush.msra.mxu0 0.0
    %4991 = vmatpush.msra.mxu0 0.0
    %4992 = vmatpush.msra.mxu0 0.0
    %4993 = vmatpush.msra.mxu0 0.0
    %4994 = vmatpush.msra.mxu0 0.0
    %4995 = vmatpush.msra.mxu0 0.0
    %4996 = vmatpush.msra.mxu0 %v4906
    %4997 = vmatpush.msra.mxu0 %v4842
    %4998 = vmatpush.msra.mxu0 %v4874
    %4999 = vmatmul.f32.gmra.mxu0 %v4921
    %v5000 = vpop.f32.mrf.mxu0
    %v5001 = vadd.f32 %v4918, %v5000
    %5002 = vdwg.mxu0
    %5003 = vmatpush.msra.mxu0 0.0
    %5004 = vmatpush.msra.mxu0 0.0
    %5005 = vmatpush.msra.mxu0 0.0
    %5006 = vmatpush.msra.mxu0 0.0
    %5007 = vmatpush.msra.mxu0 0.0
    %5008 = vmatpush.msra.mxu0 0.0
    %5009 = vmatpush.msra.mxu0 0.0
    %5010 = vmatpush.msra.mxu0 0.0
    %5011 = vmatpush.msra.mxu0 0.0
    %5012 = vmatpush.msra.mxu0 0.0
    %5013 = vmatpush.msra.mxu0 0.0
    %5014 = vmatpush.msra.mxu0 0.0
    %5015 = vmatpush.msra.mxu0 0.0
    %5016 = vmatpush.msra.mxu0 %v4907
    %5017 = vmatpush.msra.mxu0 %v4843
    %5018 = vmatpush.msra.mxu0 %v4875
    %5019 = vmatmul.f32.gmra.mxu0 %v4921
    %v5020 = vpop.f32.mrf.mxu0
    %v5021 = vadd.f32 %v4918, %v5020
    %5022 = vdwg.mxu0
    %5023 = vmatpush.msra.mxu0 0.0
    %5024 = vmatpush.msra.mxu0 0.0
    %5025 = vmatpush.msra.mxu0 0.0
    %5026 = vmatpush.msra.mxu0 0.0
    %5027 = vmatpush.msra.mxu0 0.0
    %5028 = vmatpush.msra.mxu0 0.0
    %5029 = vmatpush.msra.mxu0 0.0
    %5030 = vmatpush.msra.mxu0 0.0
    %5031 = vmatpush.msra.mxu0 0.0
    %5032 = vmatpush.msra.mxu0 0.0
    %5033 = vmatpush.msra.mxu0 0.0
    %5034 = vmatpush.msra.mxu0 0.0
    %5035 = vmatpush.msra.mxu0 0.0
    %5036 = vmatpush.msra.mxu0 %v4908
    %5037 = vmatpush.msra.mxu0 %v4844
    %5038 = vmatpush.msra.mxu0 %v4876
    %5039 = vmatmul.f32.gmra.mxu0 %v4921
    %v5040 = vpop.f32.mrf.mxu0
    %v5041 = vadd.f32 %v4918, %v5040
    %5042 = vdwg.mxu0
    %5043 = vmatpush.msra.mxu0 0.0
    %5044 = vmatpush.msra.mxu0 0.0
    %5045 = vmatpush.msra.mxu0 0.0
    %5046 = vmatpush.msra.mxu0 0.0
    %5047 = vmatpush.msra.mxu0 0.0
    %5048 = vmatpush.msra.mxu0 0.0
    %5049 = vmatpush.msra.mxu0 0.0
    %5050 = vmatpush.msra.mxu0 0.0
    %5051 = vmatpush.msra.mxu0 0.0
    %5052 = vmatpush.msra.mxu0 0.0
    %5053 = vmatpush.msra.mxu0 0.0
    %5054 = vmatpush.msra.mxu0 0.0
    %5055 = vmatpush.msra.mxu0 0.0
    %5056 = vmatpush.msra.mxu0 %v4909
    %5057 = vmatpush.msra.mxu0 %v4845
    %5058 = vmatpush.msra.mxu0 %v4877
    %5059 = vmatmul.f32.gmra.mxu0 %v4921
    %v5060 = vpop.f32.mrf.mxu0
    %v5061 = vadd.f32 %v4918, %v5060
    %5062 = vdwg.mxu0
    %5063 = vmatpush.msra.mxu0 0.0
    %5064 = vmatpush.msra.mxu0 0.0
    %5065 = vmatpush.msra.mxu0 0.0
    %5066 = vmatpush.msra.mxu0 0.0
    %5067 = vmatpush.msra.mxu0 0.0
    %5068 = vmatpush.msra.mxu0 0.0
    %5069 = vmatpush.msra.mxu0 0.0
    %5070 = vmatpush.msra.mxu0 0.0
    %5071 = vmatpush.msra.mxu0 0.0
    %5072 = vmatpush.msra.mxu0 0.0
    %5073 = vmatpush.msra.mxu0 0.0
    %5074 = vmatpush.msra.mxu0 0.0
    %5075 = vmatpush.msra.mxu0 0.0
    %5076 = vmatpush.msra.mxu0 %v4910
    %5077 = vmatpush.msra.mxu0 %v4846
    %5078 = vmatpush.msra.mxu0 %v4878
    %5079 = vmatmul.f32.gmra.mxu0 %v4921
    %v5080 = vpop.f32.mrf.mxu0
    %v5081 = vadd.f32 %v4918, %v5080
    %5082 = vdwg.mxu0
    %v5083 = vmax.f32 %v4941, 0.0
    %v5084 = vmax.f32 %v4961, 0.0
    %v5085 = vmax.f32 %v4981, 0.0
    %v5086 = vmax.f32 %v5001, 0.0
    %v5087 = vmax.f32 %v5021, 0.0
    %v5088 = vmax.f32 %v5041, 0.0
    %v5089 = vmax.f32 %v5061, 0.0
    %v5090 = vmax.f32 %v5081, 0.0
    %s5091 = scalar_lea.vmem %s9, 64
    %v5092 = vld [vmem:[%s5091] sm:$0xff]
    %s5093 = scalar_lea.vmem %s10, 64
    %v5094 = vld [vmem:[%s5093] sm:$0xff]
    %5096 = vset.pattern.permute.xlu0 0
    %5097 = vperm.xlu0 %5096, %v5094
    %v5098 = vpop.permute.xlu0 %5097
    %v5101 = vsel %vm618, %v5092, 0
    %5103 = vmatpush.msra.mxu0 0.0
    %5104 = vmatpush.msra.mxu0 0.0
    %5105 = vmatpush.msra.mxu0 0.0
    %5106 = vmatpush.msra.mxu0 0.0
    %5107 = vmatpush.msra.mxu0 0.0
    %5108 = vmatpush.msra.mxu0 0.0
    %5109 = vmatpush.msra.mxu0 0.0
    %5110 = vmatpush.msra.mxu0 0.0
    %5111 = vmatpush.msra.mxu0 0.0
    %5112 = vmatpush.msra.mxu0 0.0
    %5113 = vmatpush.msra.mxu0 0.0
    %5114 = vmatpush.msra.mxu0 0.0
    %5115 = vmatpush.msra.mxu0 0.0
    %5116 = vmatpush.msra.mxu0 0.0
    %5117 = vmatpush.msra.mxu0 0.0
    %5118 = vmatpush.msra.mxu0 %v5083
    %5119 = vmatmul.f32.gmra.mxu0 %v5101
    %v5120 = vpop.f32.mrf.mxu0
    %v5121 = vadd.f32 %v5098, %v5120
    %5122 = vdwg.mxu0
    %5123 = vmatpush.msra.mxu0 0.0
    %5124 = vmatpush.msra.mxu0 0.0
    %5125 = vmatpush.msra.mxu0 0.0
    %5126 = vmatpush.msra.mxu0 0.0
    %5127 = vmatpush.msra.mxu0 0.0
    %5128 = vmatpush.msra.mxu0 0.0
    %5129 = vmatpush.msra.mxu0 0.0
    %5130 = vmatpush.msra.mxu0 0.0
    %5131 = vmatpush.msra.mxu0 0.0
    %5132 = vmatpush.msra.mxu0 0.0
    %5133 = vmatpush.msra.mxu0 0.0
    %5134 = vmatpush.msra.mxu0 0.0
    %5135 = vmatpush.msra.mxu0 0.0
    %5136 = vmatpush.msra.mxu0 0.0
    %5137 = vmatpush.msra.mxu0 0.0
    %5138 = vmatpush.msra.mxu0 %v5084
    %5139 = vmatmul.f32.gmra.mxu0 %v5101
    %v5140 = vpop.f32.mrf.mxu0
    %v5141 = vadd.f32 %v5098, %v5140
    %5142 = vdwg.mxu0
    %5143 = vmatpush.msra.mxu0 0.0
    %5144 = vmatpush.msra.mxu0 0.0
    %5145 = vmatpush.msra.mxu0 0.0
    %5146 = vmatpush.msra.mxu0 0.0
    %5147 = vmatpush.msra.mxu0 0.0
    %5148 = vmatpush.msra.mxu0 0.0
    %5149 = vmatpush.msra.mxu0 0.0
    %5150 = vmatpush.msra.mxu0 0.0
    %5151 = vmatpush.msra.mxu0 0.0
    %5152 = vmatpush.msra.mxu0 0.0
    %5153 = vmatpush.msra.mxu0 0.0
    %5154 = vmatpush.msra.mxu0 0.0
    %5155 = vmatpush.msra.mxu0 0.0
    %5156 = vmatpush.msra.mxu0 0.0
    %5157 = vmatpush.msra.mxu0 0.0
    %5158 = vmatpush.msra.mxu0 %v5085
    %5159 = vmatmul.f32.gmra.mxu0 %v5101
    %v5160 = vpop.f32.mrf.mxu0
    %v5161 = vadd.f32 %v5098, %v5160
    %5162 = vdwg.mxu0
    %5163 = vmatpush.msra.mxu0 0.0
    %5164 = vmatpush.msra.mxu0 0.0
    %5165 = vmatpush.msra.mxu0 0.0
    %5166 = vmatpush.msra.mxu0 0.0
    %5167 = vmatpush.msra.mxu0 0.0
    %5168 = vmatpush.msra.mxu0 0.0
    %5169 = vmatpush.msra.mxu0 0.0
    %5170 = vmatpush.msra.mxu0 0.0
    %5171 = vmatpush.msra.mxu0 0.0
    %5172 = vmatpush.msra.mxu0 0.0
    %5173 = vmatpush.msra.mxu0 0.0
    %5174 = vmatpush.msra.mxu0 0.0
    %5175 = vmatpush.msra.mxu0 0.0
    %5176 = vmatpush.msra.mxu0 0.0
    %5177 = vmatpush.msra.mxu0 0.0
    %5178 = vmatpush.msra.mxu0 %v5086
    %5179 = vmatmul.f32.gmra.mxu0 %v5101
    %v5180 = vpop.f32.mrf.mxu0
    %v5181 = vadd.f32 %v5098, %v5180
    %5182 = vdwg.mxu0
    %5183 = vmatpush.msra.mxu0 0.0
    %5184 = vmatpush.msra.mxu0 0.0
    %5185 = vmatpush.msra.mxu0 0.0
    %5186 = vmatpush.msra.mxu0 0.0
    %5187 = vmatpush.msra.mxu0 0.0
    %5188 = vmatpush.msra.mxu0 0.0
    %5189 = vmatpush.msra.mxu0 0.0
    %5190 = vmatpush.msra.mxu0 0.0
    %5191 = vmatpush.msra.mxu0 0.0
    %5192 = vmatpush.msra.mxu0 0.0
    %5193 = vmatpush.msra.mxu0 0.0
    %5194 = vmatpush.msra.mxu0 0.0
    %5195 = vmatpush.msra.mxu0 0.0
    %5196 = vmatpush.msra.mxu0 0.0
    %5197 = vmatpush.msra.mxu0 0.0
    %5198 = vmatpush.msra.mxu0 %v5087
    %5199 = vmatmul.f32.gmra.mxu0 %v5101
    %v5200 = vpop.f32.mrf.mxu0
    %v5201 = vadd.f32 %v5098, %v5200
    %5202 = vdwg.mxu0
    %5203 = vmatpush.msra.mxu0 0.0
    %5204 = vmatpush.msra.mxu0 0.0
    %5205 = vmatpush.msra.mxu0 0.0
    %5206 = vmatpush.msra.mxu0 0.0
    %5207 = vmatpush.msra.mxu0 0.0
    %5208 = vmatpush.msra.mxu0 0.0
    %5209 = vmatpush.msra.mxu0 0.0
    %5210 = vmatpush.msra.mxu0 0.0
    %5211 = vmatpush.msra.mxu0 0.0
    %5212 = vmatpush.msra.mxu0 0.0
    %5213 = vmatpush.msra.mxu0 0.0
    %5214 = vmatpush.msra.mxu0 0.0
    %5215 = vmatpush.msra.mxu0 0.0
    %5216 = vmatpush.msra.mxu0 0.0
    %5217 = vmatpush.msra.mxu0 0.0
    %5218 = vmatpush.msra.mxu0 %v5088
    %5219 = vmatmul.f32.gmra.mxu0 %v5101
    %v5220 = vpop.f32.mrf.mxu0
    %v5221 = vadd.f32 %v5098, %v5220
    %5222 = vdwg.mxu0
    %5223 = vmatpush.msra.mxu0 0.0
    %5224 = vmatpush.msra.mxu0 0.0
    %5225 = vmatpush.msra.mxu0 0.0
    %5226 = vmatpush.msra.mxu0 0.0
    %5227 = vmatpush.msra.mxu0 0.0
    %5228 = vmatpush.msra.mxu0 0.0
    %5229 = vmatpush.msra.mxu0 0.0
    %5230 = vmatpush.msra.mxu0 0.0
    %5231 = vmatpush.msra.mxu0 0.0
    %5232 = vmatpush.msra.mxu0 0.0
    %5233 = vmatpush.msra.mxu0 0.0
    %5234 = vmatpush.msra.mxu0 0.0
    %5235 = vmatpush.msra.mxu0 0.0
    %5236 = vmatpush.msra.mxu0 0.0
    %5237 = vmatpush.msra.mxu0 0.0
    %5238 = vmatpush.msra.mxu0 %v5089
    %5239 = vmatmul.f32.gmra.mxu0 %v5101
    %v5240 = vpop.f32.mrf.mxu0
    %v5241 = vadd.f32 %v5098, %v5240
    %5242 = vdwg.mxu0
    %5243 = vmatpush.msra.mxu0 0.0
    %5244 = vmatpush.msra.mxu0 0.0
    %5245 = vmatpush.msra.mxu0 0.0
    %5246 = vmatpush.msra.mxu0 0.0
    %5247 = vmatpush.msra.mxu0 0.0
    %5248 = vmatpush.msra.mxu0 0.0
    %5249 = vmatpush.msra.mxu0 0.0
    %5250 = vmatpush.msra.mxu0 0.0
    %5251 = vmatpush.msra.mxu0 0.0
    %5252 = vmatpush.msra.mxu0 0.0
    %5253 = vmatpush.msra.mxu0 0.0
    %5254 = vmatpush.msra.mxu0 0.0
    %5255 = vmatpush.msra.mxu0 0.0
    %5256 = vmatpush.msra.mxu0 0.0
    %5257 = vmatpush.msra.mxu0 0.0
    %5258 = vmatpush.msra.mxu0 %v5090
    %5259 = vmatmul.f32.gmra.mxu0 %v5101
    %v5260 = vpop.f32.mrf.mxu0
    %v5261 = vadd.f32 %v5098, %v5260
    %5262 = vdwg.mxu0
    %v5263 = vadd.f32 %v4839, %v5121
    %v5264 = vadd.f32 %v4840, %v5141
    %v5265 = vadd.f32 %v4841, %v5161
    %v5266 = vadd.f32 %v4842, %v5181
    %v5267 = vadd.f32 %v4843, %v5201
    %v5268 = vadd.f32 %v4844, %v5221
    %v5269 = vadd.f32 %v4845, %v5241
    %v5270 = vadd.f32 %v4846, %v5261
    %v5271 = vmul.f32 %v5263, %v90
    %v5272 = vmul.f32 %v5264, %v91
    %v5273 = vmul.f32 %v5265, %v92
    %v5274 = vmul.f32 %v5266, %v93
    %v5275 = vmul.f32 %v5267, %v94
    %v5276 = vmul.f32 %v5268, %v95
    %v5277 = vmul.f32 %v5269, %v96
    %v5278 = vmul.f32 %v5270, %v97
    %s5279 = scalar_lea.vmem [#allocation5], 16
    %v5280 = vld [vmem:[%s5279] sm:$0xff]
    %s5281 = scalar_lea.vmem %s12, 16
    %v5282 = vld [vmem:[%s5281] sm:$0xff]
    %5284 = vset.pattern.permute.xlu0 0
    %5285 = vperm.xlu0 %5284, %v5282
    %v5286 = vpop.permute.xlu0 %5285
    %v5289 = vsel %vm618, %v5280, 0
    %5291 = vmatpush.msra.mxu0 0.0
    %5292 = vmatpush.msra.mxu0 0.0
    %5293 = vmatpush.msra.mxu0 0.0
    %5294 = vmatpush.msra.mxu0 0.0
    %5295 = vmatpush.msra.mxu0 0.0
    %5296 = vmatpush.msra.mxu0 0.0
    %5297 = vmatpush.msra.mxu0 0.0
    %5298 = vmatpush.msra.mxu0 0.0
    %5299 = vmatpush.msra.mxu0 0.0
    %5300 = vmatpush.msra.mxu0 0.0
    %5301 = vmatpush.msra.mxu0 0.0
    %5302 = vmatpush.msra.mxu0 0.0
    %5303 = vmatpush.msra.mxu0 0.0
    %5304 = vmatpush.msra.mxu0 0.0
    %5305 = vmatpush.msra.mxu0 0.0
    %5306 = vmatpush.msra.mxu0 %v5271
    %5307 = vmatmul.f32.gmra.mxu0 %v5289
    %v5308 = vpop.f32.mrf.mxu0
    %v5309 = vadd.f32 %v5286, %v5308
    %5310 = vdwg.mxu0
    %5311 = vmatpush.msra.mxu0 0.0
    %5312 = vmatpush.msra.mxu0 0.0
    %5313 = vmatpush.msra.mxu0 0.0
    %5314 = vmatpush.msra.mxu0 0.0
    %5315 = vmatpush.msra.mxu0 0.0
    %5316 = vmatpush.msra.mxu0 0.0
    %5317 = vmatpush.msra.mxu0 0.0
    %5318 = vmatpush.msra.mxu0 0.0
    %5319 = vmatpush.msra.mxu0 0.0
    %5320 = vmatpush.msra.mxu0 0.0
    %5321 = vmatpush.msra.mxu0 0.0
    %5322 = vmatpush.msra.mxu0 0.0
    %5323 = vmatpush.msra.mxu0 0.0
    %5324 = vmatpush.msra.mxu0 0.0
    %5325 = vmatpush.msra.mxu0 0.0
    %5326 = vmatpush.msra.mxu0 %v5272
    %5327 = vmatmul.f32.gmra.mxu0 %v5289
    %v5328 = vpop.f32.mrf.mxu0
    %v5329 = vadd.f32 %v5286, %v5328
    %5330 = vdwg.mxu0
    %5331 = vmatpush.msra.mxu0 0.0
    %5332 = vmatpush.msra.mxu0 0.0
    %5333 = vmatpush.msra.mxu0 0.0
    %5334 = vmatpush.msra.mxu0 0.0
    %5335 = vmatpush.msra.mxu0 0.0
    %5336 = vmatpush.msra.mxu0 0.0
    %5337 = vmatpush.msra.mxu0 0.0
    %5338 = vmatpush.msra.mxu0 0.0
    %5339 = vmatpush.msra.mxu0 0.0
    %5340 = vmatpush.msra.mxu0 0.0
    %5341 = vmatpush.msra.mxu0 0.0
    %5342 = vmatpush.msra.mxu0 0.0
    %5343 = vmatpush.msra.mxu0 0.0
    %5344 = vmatpush.msra.mxu0 0.0
    %5345 = vmatpush.msra.mxu0 0.0
    %5346 = vmatpush.msra.mxu0 %v5273
    %5347 = vmatmul.f32.gmra.mxu0 %v5289
    %v5348 = vpop.f32.mrf.mxu0
    %v5349 = vadd.f32 %v5286, %v5348
    %5350 = vdwg.mxu0
    %5351 = vmatpush.msra.mxu0 0.0
    %5352 = vmatpush.msra.mxu0 0.0
    %5353 = vmatpush.msra.mxu0 0.0
    %5354 = vmatpush.msra.mxu0 0.0
    %5355 = vmatpush.msra.mxu0 0.0
    %5356 = vmatpush.msra.mxu0 0.0
    %5357 = vmatpush.msra.mxu0 0.0
    %5358 = vmatpush.msra.mxu0 0.0
    %5359 = vmatpush.msra.mxu0 0.0
    %5360 = vmatpush.msra.mxu0 0.0
    %5361 = vmatpush.msra.mxu0 0.0
    %5362 = vmatpush.msra.mxu0 0.0
    %5363 = vmatpush.msra.mxu0 0.0
    %5364 = vmatpush.msra.mxu0 0.0
    %5365 = vmatpush.msra.mxu0 0.0
    %5366 = vmatpush.msra.mxu0 %v5274
    %5367 = vmatmul.f32.gmra.mxu0 %v5289
    %v5368 = vpop.f32.mrf.mxu0
    %v5369 = vadd.f32 %v5286, %v5368
    %5370 = vdwg.mxu0
    %5371 = vmatpush.msra.mxu0 0.0
    %5372 = vmatpush.msra.mxu0 0.0
    %5373 = vmatpush.msra.mxu0 0.0
    %5374 = vmatpush.msra.mxu0 0.0
    %5375 = vmatpush.msra.mxu0 0.0
    %5376 = vmatpush.msra.mxu0 0.0
    %5377 = vmatpush.msra.mxu0 0.0
    %5378 = vmatpush.msra.mxu0 0.0
    %5379 = vmatpush.msra.mxu0 0.0
    %5380 = vmatpush.msra.mxu0 0.0
    %5381 = vmatpush.msra.mxu0 0.0
    %5382 = vmatpush.msra.mxu0 0.0
    %5383 = vmatpush.msra.mxu0 0.0
    %5384 = vmatpush.msra.mxu0 0.0
    %5385 = vmatpush.msra.mxu0 0.0
    %5386 = vmatpush.msra.mxu0 %v5275
    %5387 = vmatmul.f32.gmra.mxu0 %v5289
    %v5388 = vpop.f32.mrf.mxu0
    %v5389 = vadd.f32 %v5286, %v5388
    %5390 = vdwg.mxu0
    %5391 = vmatpush.msra.mxu0 0.0
    %5392 = vmatpush.msra.mxu0 0.0
    %5393 = vmatpush.msra.mxu0 0.0
    %5394 = vmatpush.msra.mxu0 0.0
    %5395 = vmatpush.msra.mxu0 0.0
    %5396 = vmatpush.msra.mxu0 0.0
    %5397 = vmatpush.msra.mxu0 0.0
    %5398 = vmatpush.msra.mxu0 0.0
    %5399 = vmatpush.msra.mxu0 0.0
    %5400 = vmatpush.msra.mxu0 0.0
    %5401 = vmatpush.msra.mxu0 0.0
    %5402 = vmatpush.msra.mxu0 0.0
    %5403 = vmatpush.msra.mxu0 0.0
    %5404 = vmatpush.msra.mxu0 0.0
    %5405 = vmatpush.msra.mxu0 0.0
    %5406 = vmatpush.msra.mxu0 %v5276
    %5407 = vmatmul.f32.gmra.mxu0 %v5289
    %v5408 = vpop.f32.mrf.mxu0
    %v5409 = vadd.f32 %v5286, %v5408
    %5410 = vdwg.mxu0
    %5411 = vmatpush.msra.mxu0 0.0
    %5412 = vmatpush.msra.mxu0 0.0
    %5413 = vmatpush.msra.mxu0 0.0
    %5414 = vmatpush.msra.mxu0 0.0
    %5415 = vmatpush.msra.mxu0 0.0
    %5416 = vmatpush.msra.mxu0 0.0
    %5417 = vmatpush.msra.mxu0 0.0
    %5418 = vmatpush.msra.mxu0 0.0
    %5419 = vmatpush.msra.mxu0 0.0
    %5420 = vmatpush.msra.mxu0 0.0
    %5421 = vmatpush.msra.mxu0 0.0
    %5422 = vmatpush.msra.mxu0 0.0
    %5423 = vmatpush.msra.mxu0 0.0
    %5424 = vmatpush.msra.mxu0 0.0
    %5425 = vmatpush.msra.mxu0 0.0
    %5426 = vmatpush.msra.mxu0 %v5277
    %5427 = vmatmul.f32.gmra.mxu0 %v5289
    %v5428 = vpop.f32.mrf.mxu0
    %v5429 = vadd.f32 %v5286, %v5428
    %5430 = vdwg.mxu0
    %5431 = vmatpush.msra.mxu0 0.0
    %5432 = vmatpush.msra.mxu0 0.0
    %5433 = vmatpush.msra.mxu0 0.0
    %5434 = vmatpush.msra.mxu0 0.0
    %5435 = vmatpush.msra.mxu0 0.0
    %5436 = vmatpush.msra.mxu0 0.0
    %5437 = vmatpush.msra.mxu0 0.0
    %5438 = vmatpush.msra.mxu0 0.0
    %5439 = vmatpush.msra.mxu0 0.0
    %5440 = vmatpush.msra.mxu0 0.0
    %5441 = vmatpush.msra.mxu0 0.0
    %5442 = vmatpush.msra.mxu0 0.0
    %5443 = vmatpush.msra.mxu0 0.0
    %5444 = vmatpush.msra.mxu0 0.0
    %5445 = vmatpush.msra.mxu0 0.0
    %5446 = vmatpush.msra.mxu0 %v5278
    %5447 = vmatmul.f32.gmra.mxu0 %v5289
    %v5448 = vpop.f32.mrf.mxu0
    %v5449 = vadd.f32 %v5286, %v5448
    %5450 = vdwg.mxu0
    %v5451 = vmul.f32 %v5309, %v90
    %v5452 = vmul.f32 %v5329, %v91
    %v5453 = vmul.f32 %v5349, %v92
    %v5454 = vmul.f32 %v5369, %v93
    %v5455 = vmul.f32 %v5389, %v94
    %v5456 = vmul.f32 %v5409, %v95
    %v5457 = vmul.f32 %v5429, %v96
    %v5458 = vmul.f32 %v5449, %v97
    %s5459 = scalar_lea.vmem [#allocation7], 128
    %5460 = vst [vmem:[%s5459] sm:$0xff] %v5451
    %5461 = vst [vmem:[%s5459 + $0x8] sm:$0xff] %v5452
    %5462 = vst [vmem:[%s5459 + $0x10] sm:$0xff] %v5453
    %5463 = vst [vmem:[%s5459 + $0x18] sm:$0xff] %v5454
    %5464 = vst [vmem:[%s5459 + $0x20] sm:$0xff] %v5455
    %5465 = vst [vmem:[%s5459 + $0x28] sm:$0xff] %v5456
    %5466 = vst [vmem:[%s5459 + $0x30] sm:$0xff] %v5457
    %5467 = vst [vmem:[%s5459 + $0x38] sm:$0xff] %v5458
    // Predicated region
    $region62: #{tpu_custom_call.1} parent=1 // pred_check
      _
    $region63: #{tpu_custom_call.1} parent=1 // pred_check_branch
      %5469 = sbr.rel (0) target = $region65
    $region64: #{tpu_custom_call.1} parent=1 // pred_region
      %5471 = vsyncadd [#allocation4], 0
      %s5472 = sshll.u32 [#allocation7], 4
      %s5473 = int_to_ptr.vmem [resolvable:$true] %s5472
      %s5474 = sshll.u32 %s13, 4
      %s5475 = int_to_ptr.hbm [resolvable:$true] %s5474
      %5480 = dma.vmem_to_hbm [thread:$0]  %s5473, 3072, %s5475, [#allocation4], 1024, 1024, 64
    $region65: #{tpu_custom_call.1} parent=1 // pred_fallthru
      _
    // Predicated region
    $region66: #{tpu_custom_call.1} parent=1 // pred_check
      _
    $region67: #{tpu_custom_call.1} parent=1 // pred_check_branch
      %5482 = sbr.rel (0) target = $region69
    $region68: #{tpu_custom_call.1} parent=1 // pred_region
      %5484 = dma.done [#allocation4], 3072
    $region69: #{tpu_custom_call.1} parent=1 // pred_fallthru
      _
    %5485 = vsyncpa [#allocation3], 1
    %5486 = vsyncpa [#allocation6], 1
    %5487 = vsyncpa [#allocation4], 1

</llo_original>
